<compile_context>
chip_gen: v7x
topology: tpu7x:2x2x1
jax: 0.10.0
libtpu: 0.0.40
codegen_flags: <defaults>
</compile_context>

<pallas_src>
import functools

import jax
import jax.numpy as jnp
from jax.experimental import pallas as pl
from jax.experimental.pallas import tpu as pltpu

LEAKY_SLOPE = 0.01  # nn.LeakyReLU default
BN_EPS = 1e-5       # nn.BatchNorm2d default

_TAPS = [(dy, dx) for dy in range(3) for dx in range(3)]


def _round_up(x, m):
    return ((x + m - 1) // m) * m


def _fused_res_conv_kernel(x_ref, w1_ref, w2_ref, aff_ref, o_ref,
                           xpad_ref, x1pad_ref, p1_ref,
                           *, H, W, Cin, C, Cout, K1):
    """One batch element: conv1+BN+LeakyReLU -> conv2+BN+LeakyReLU + residual.

    x_ref:     (1, H, W, Cin)      unpadded NHWC input tile (f32)
    w1_ref:    (K1, C)             conv1 weights as im2col matrix (bf16)
    w2_ref:    (9, C, C)           conv2 weights, tap-major (bf16)
    aff_ref:   (4, C)              rows: scale1, shift1, scale2, shift2 (f32)
    o_ref:     (1, H, W, Cout)     unpadded output (f32)
    xpad_ref:  (H+2, Wp, Cin)      VMEM scratch: spatially padded input (f32)
    x1pad_ref: (H+2, Wp, C)        VMEM scratch: spatially padded x1 (f32)
    p1_ref:    (H*W, K1)           VMEM scratch: conv1 im2col slab (bf16)
    """
    f32 = jnp.float32
    bf16 = jnp.bfloat16
    Wp = xpad_ref.shape[1]  # W + 2 rounded up to a multiple of 8

    # ---- spatial zero padding of the input (padding=1): halo-only zeroing ----
    xpad_ref[0:1, :, :] = jnp.zeros((1, Wp, Cin), f32)
    xpad_ref[H + 1:H + 2, :, :] = jnp.zeros((1, Wp, Cin), f32)
    xpad_ref[1:H + 1, 0:1, :] = jnp.zeros((H, 1, Cin), f32)
    xpad_ref[1:H + 1, W + 1:W + 2, :] = jnp.zeros((H, 1, Cin), f32)
    xpad_ref[1:H + 1, 1:W + 1, :] = x_ref[0]

    # ---- conv1: build (H*W, 9*Cin) im2col slab, ONE bf16 MXU matmul ----
    for t, (dy, dx) in enumerate(_TAPS):
        win = xpad_ref[dy:dy + H, dx:dx + W, :].reshape(H * W, Cin)
        p1_ref[:, t * Cin:(t + 1) * Cin] = win.astype(bf16)
    if K1 > 9 * Cin:
        # Zero the K padding so w1's zero rows never meet uninitialized VMEM.
        p1_ref[:, 9 * Cin:] = jnp.zeros((H * W, K1 - 9 * Cin), bf16)

    acc1 = jnp.dot(p1_ref[...], w1_ref[...], preferred_element_type=f32)
    y1 = acc1 * aff_ref[0, :] + aff_ref[1, :]        # folded conv-bias + BN1 (eval)
    y1 = jnp.where(y1 > 0, y1, LEAKY_SLOPE * y1)     # x1; Dropout = identity in eval

    # ---- spatially padded x1 for conv2: halo-only zeroing ----
    x1pad_ref[0:1, :, :] = jnp.zeros((1, Wp, C), f32)
    x1pad_ref[H + 1:H + 2, :, :] = jnp.zeros((1, Wp, C), f32)
    x1pad_ref[1:H + 1, 0:1, :] = jnp.zeros((H, 1, C), f32)
    x1pad_ref[1:H + 1, W + 1:W + 2, :] = jnp.zeros((H, 1, C), f32)
    x1pad_ref[1:H + 1, 1:W + 1, :] = y1.reshape(H, W, C)

    # ---- conv2: 9 bf16 MXU matmuls, value-level accumulation (no scratch RMW) ----
    acc2 = None
    for t, (dy, dx) in enumerate(_TAPS):
        patch = x1pad_ref[dy:dy + H, dx:dx + W, :].reshape(H * W, C).astype(bf16)
        contrib = jnp.dot(patch, w2_ref[t], preferred_element_type=f32)
        acc2 = contrib if acc2 is None else acc2 + contrib

    y2 = acc2 * aff_ref[2, :] + aff_ref[3, :]        # folded conv-bias + BN2 (eval)
    y2 = jnp.where(y2 > 0, y2, LEAKY_SLOPE * y2)
    y2 = y2 + y1                                     # residual, in f32

    o_ref[...] = y2[:, :Cout].reshape(1, H, W, Cout).astype(o_ref.dtype)


def _fold_bn(bias, gamma, beta, running_mean, running_var):
    """Fold conv bias + eval-mode BatchNorm into per-channel (scale, shift)."""
    scale = gamma / jnp.sqrt(running_var + BN_EPS)
    shift = (bias - running_mean) * scale + beta
    return scale, shift


def start_conv_forward(x_nchw, params):
    """Forward pass of start_conv / res_conv. Input is NCHW (PyTorch layout)."""
    # TODO(synk): callers that can supply/consume NHWC directly would remove
    # both relayout transposes (entry/exit) entirely.
    x = jnp.transpose(x_nchw, (0, 2, 3, 1)).astype(jnp.float32)   # -> NHWC
    N, H, W, Cin = x.shape
    Cout = params["w1"].shape[-1]
    C = _round_up(Cout, 128)          # MXU/lane-width channel padding (internal only)
    K1 = _round_up(9 * Cin, 16)       # conv1 im2col contraction depth (bf16-friendly)
    Wp = _round_up(W + 2, 8)          # sublane-friendly padded scratch width
    pad_c = C - Cout

    s1, t1 = _fold_bn(params["b1"], params["g1"], params["beta1"],
                      params["rm1"], params["rv1"])
    s2, t2 = _fold_bn(params["b2"], params["g2"], params["beta2"],
                      params["rm2"], params["rv2"])

    # conv1 weights -> (K1, C); K ordering (dy, dx, cin) matches in-kernel im2col.
    w1 = jnp.pad(params["w1"].astype(jnp.float32),
                 ((0, 0), (0, 0), (0, 0), (0, pad_c))).reshape(9 * Cin, C)
    w1 = jnp.pad(w1, ((0, K1 - 9 * Cin), (0, 0))).astype(jnp.bfloat16)
    # conv2 weights -> (9, C, C); pad input channels BEFORE flattening taps.
    w2 = jnp.pad(params["w2"].astype(jnp.float32),
                 ((0, 0), (0, 0), (0, pad_c), (0, pad_c))).reshape(9, C, C)
    w2 = w2.astype(jnp.bfloat16)
    aff = jnp.stack([
        jnp.pad(s1, (0, pad_c), constant_values=1.0),
        jnp.pad(t1, (0, pad_c)),
        jnp.pad(s2, (0, pad_c), constant_values=1.0),
        jnp.pad(t2, (0, pad_c)),
    ], axis=0).astype(jnp.float32)    # (4, C)

    kernel = functools.partial(_fused_res_conv_kernel,
                               H=H, W=W, Cin=Cin, C=C, Cout=Cout, K1=K1)

    # Scoped-VMEM budget: double-buffered blocks + scratch + f32 value temps, 2x headroom.
    est_bytes = (
        2 * (H * W * Cin * 4 + K1 * C * 2 + 9 * C * C * 2 + 4 * C * 4
             + H * W * Cout * 4)
        + (H + 2) * Wp * (Cin + C) * 4
        + H * W * K1 * 2
        + 4 * H * W * C * 4)
    vmem_limit = int(min(max(2 * est_bytes, 16 * 2 ** 20), 100 * 2 ** 20))

    out = pl.pallas_call(
        kernel,
        out_shape=jax.ShapeDtypeStruct((N, H, W, Cout), jnp.float32),
        grid_spec=pltpu.PrefetchScalarGridSpec(
            num_scalar_prefetch=0,
            grid=(N,),
            in_specs=[
                pl.BlockSpec((1, H, W, Cin), lambda n: (n, 0, 0, 0)),
                pl.BlockSpec((K1, C), lambda n: (0, 0)),
                pl.BlockSpec((9, C, C), lambda n: (0, 0, 0)),
                pl.BlockSpec((4, C), lambda n: (0, 0)),
            ],
            out_specs=pl.BlockSpec((1, H, W, Cout), lambda n: (n, 0, 0, 0)),
            scratch_shapes=[
                pltpu.VMEM((H + 2, Wp, Cin), jnp.float32),
                pltpu.VMEM((H + 2, Wp, C), jnp.float32),
                pltpu.VMEM((H * W, K1), jnp.bfloat16),
            ],
        ),
        compiler_params=pltpu.CompilerParams(
            dimension_semantics=("parallel",),
            vmem_limit_bytes=vmem_limit),
    )(x, w1, w2, aff)

    return jnp.transpose(out, (0, 3, 1, 2))    # NHWC -> NCHW (PyTorch layout)


def _reference_forward(x_nchw, params):
    """Pure-JAX f32 reference (lax conv) for a correctness sanity check."""
    def block(x, w, bias, gamma, beta, rm, rv):
        w_oihw = jnp.transpose(w, (3, 2, 0, 1))
        y = jax.lax.conv_general_dilated(
            x, w_oihw, window_strides=(1, 1), padding=((1, 1), (1, 1)),
            dimension_numbers=("NCHW", "OIHW", "NCHW"))
        y = y + bias[None, :, None, None]
        y = (y - rm[None, :, None, None]) / jnp.sqrt(rv + BN_EPS)[None, :, None, None]
        y = y * gamma[None, :, None, None] + beta[None, :, None, None]
        return jnp.where(y > 0, y, LEAKY_SLOPE * y)

    x1 = block(x_nchw, params["w1"], params["b1"], params["g1"],
               params["beta1"], params["rm1"], params["rv1"])
    x2 = block(x1, params["w2"], params["b2"], params["g2"],
               params["beta2"], params["rm2"], params["rv2"]) + x1
    return x2


def make_params(key, cin, cout):
    ks = jax.random.split(key, 10)
    return {
        "w1": jax.random.normal(ks[0], (3, 3, cin, cout), jnp.float32) * 0.1,
        "b1": jax.random.normal(ks[1], (cout,), jnp.float32) * 0.1,
        "g1": 1.0 + 0.1 * jax.random.normal(ks[2], (cout,), jnp.float32),
        "beta1": 0.1 * jax.random.normal(ks[3], (cout,), jnp.float32),
        "rm1": 0.1 * jax.random.normal(ks[4], (cout,), jnp.float32),
        "rv1": 1.0 + 0.1 * jnp.abs(jax.random.normal(ks[5], (cout,), jnp.float32)),
        "w2": jax.random.normal(ks[6], (3, 3, cout, cout), jnp.float32) * 0.1,
        "b2": jax.random.normal(ks[7], (cout,), jnp.float32) * 0.1,
        "g2": 1.0 + 0.1 * jax.random.normal(ks[8], (cout,), jnp.float32),
        "beta2": 0.1 * jax.random.normal(ks[9], (cout,), jnp.float32),
        "rm2": jnp.zeros((cout,), jnp.float32),
        "rv2": jnp.ones((cout,), jnp.float32),
    }


if __name__ == "__main__":
    key = jax.random.PRNGKey(0)
    kx, kp = jax.random.split(key)

    N, Cin, H, W = 2, 4, 16, 16
    Cout = 8

    x = jax.random.normal(kx, (N, Cin, H, W), jnp.float32)  # NCHW, like PyTorch
    params = make_params(kp, Cin, Cout)

    out = jax.block_until_ready(start_conv_forward(x, params))
    ref = jax.block_until_ready(_reference_forward(x, params))

    assert out.shape == (N, Cout, H, W), out.shape
    # bf16 MXU operands vs f32 reference => looser tolerance than pure-f32.
    err = jnp.abs(out - ref)
    assert float(jnp.max(err)) < 1.5e-1, float(jnp.max(err))
    assert float(jnp.mean(err)) < 2e-2, float(jnp.mean(err))

    # TODO(synk): dropout / BN batch-statistics training-mode behavior is not
    # implemented; eval-mode semantics are used (dropout = identity).
    print("KERNEL_OK")
</pallas_src>

<mosaic_0001>
module attributes {stable_mosaic.version = 11 : i64} {
  func.func @_fused_res_conv_kernel(%arg0: i32, %arg1: memref<1x16x16x4xf32, #tpu.memory_space<vmem>>, %arg2: memref<48x128xbf16, #tpu.memory_space<vmem>>, %arg3: memref<9x128x128xbf16, #tpu.memory_space<vmem>>, %arg4: memref<4x128xf32, #tpu.memory_space<vmem>>, %arg5: memref<1x16x16x8xf32, #tpu.memory_space<vmem>>, %arg6: memref<18x24x4xf32, #tpu.memory_space<vmem>>, %arg7: memref<18x24x128xf32, #tpu.memory_space<vmem>>, %arg8: memref<256x48xbf16, #tpu.memory_space<vmem>>) attributes {dimension_semantics = [#tpu.dimension_semantics<parallel>], iteration_bounds = array<i64: 2>, scalar_prefetch = 0 : i64, scratch_operands = 3 : i64, tpu.core_type = #tpu.core_type<tc>, window_params = [{transform_indices = @transform_0, window_bounds = array<i64: 1, 16, 16, 4>}, {pipeline_mode = #tpu.pipeline_mode<synchronous>, transform_indices = @transform_1, window_bounds = array<i64: 48, 128>}, {pipeline_mode = #tpu.pipeline_mode<synchronous>, transform_indices = @transform_2, window_bounds = array<i64: 9, 128, 128>}, {pipeline_mode = #tpu.pipeline_mode<synchronous>, transform_indices = @transform_3, window_bounds = array<i64: 4, 128>}, {transform_indices = @transform_4, window_bounds = array<i64: 1, 16, 16, 8>}]} {
    %cst = arith.constant 0.000000e+00 : f32
    %0 = vector.broadcast %cst : f32 to vector<1x24x4xf32>
    %c0 = arith.constant 0 : index
    %c0_0 = arith.constant 0 : index
    %c0_1 = arith.constant 0 : index
    %1 = vector.load %arg6[%c0, %c0_0, %c0_1] : memref<18x24x4xf32, #tpu.memory_space<vmem>>, vector<1x24x4xf32>
    tpu.vector_store %arg6[%c0, %c0_0, %c0_1], %0 {strides = array<i32>} : memref<18x24x4xf32, #tpu.memory_space<vmem>>, vector<1x24x4xf32>,
    %cst_2 = arith.constant 0.000000e+00 : f32
    %2 = vector.broadcast %cst_2 : f32 to vector<1x24x4xf32>
    %c17 = arith.constant 17 : index
    %c0_3 = arith.constant 0 : index
    %c0_4 = arith.constant 0 : index
    %3 = vector.load %arg6[%c17, %c0_3, %c0_4] : memref<18x24x4xf32, #tpu.memory_space<vmem>>, vector<1x24x4xf32>
    tpu.vector_store %arg6[%c17, %c0_3, %c0_4], %2 {strides = array<i32>} : memref<18x24x4xf32, #tpu.memory_space<vmem>>, vector<1x24x4xf32>,
    %cst_5 = arith.constant 0.000000e+00 : f32
    %4 = vector.broadcast %cst_5 : f32 to vector<16x1x4xf32>
    %c1 = arith.constant 1 : index
    %c0_6 = arith.constant 0 : index
    %c0_7 = arith.constant 0 : index
    %5 = vector.load %arg6[%c1, %c0_6, %c0_7] : memref<18x24x4xf32, #tpu.memory_space<vmem>>, vector<16x1x4xf32>
    tpu.vector_store %arg6[%c1, %c0_6, %c0_7], %4 {strides = array<i32>} : memref<18x24x4xf32, #tpu.memory_space<vmem>>, vector<16x1x4xf32>,
    %cst_8 = arith.constant 0.000000e+00 : f32
    %6 = vector.broadcast %cst_8 : f32 to vector<16x1x4xf32>
    %c1_9 = arith.constant 1 : index
    %c17_10 = arith.constant 17 : index
    %c0_11 = arith.constant 0 : index
    %7 = vector.load %arg6[%c1_9, %c17_10, %c0_11] : memref<18x24x4xf32, #tpu.memory_space<vmem>>, vector<16x1x4xf32>
    tpu.vector_store %arg6[%c1_9, %c17_10, %c0_11], %6 {strides = array<i32>} : memref<18x24x4xf32, #tpu.memory_space<vmem>>, vector<16x1x4xf32>,
    %c0_12 = arith.constant 0 : index
    %c0_13 = arith.constant 0 : index
    %c0_14 = arith.constant 0 : index
    %c0_15 = arith.constant 0 : index
    %8 = vector.load %arg1[%c0_12, %c0_13, %c0_14, %c0_15] : memref<1x16x16x4xf32, #tpu.memory_space<vmem>>, vector<1x16x16x4xf32>
    %9 = vector.shape_cast %8 : vector<1x16x16x4xf32> to vector<16x16x4xf32>
    %c1_16 = arith.constant 1 : index
    %c1_17 = arith.constant 1 : index
    %c0_18 = arith.constant 0 : index
    %10 = vector.load %arg6[%c1_16, %c1_17, %c0_18] : memref<18x24x4xf32, #tpu.memory_space<vmem>>, vector<16x16x4xf32>
    tpu.vector_store %arg6[%c1_16, %c1_17, %c0_18], %9 {strides = array<i32>} : memref<18x24x4xf32, #tpu.memory_space<vmem>>, vector<16x16x4xf32>,
    %c0_19 = arith.constant 0 : index
    %c0_20 = arith.constant 0 : index
    %c0_21 = arith.constant 0 : index
    %11 = vector.load %arg6[%c0_19, %c0_20, %c0_21] : memref<18x24x4xf32, #tpu.memory_space<vmem>>, vector<16x16x4xf32>
    %12 = vector.shape_cast %11 : vector<16x16x4xf32> to vector<256x4xf32>
    %13 = arith.truncf %12 : vector<256x4xf32> to vector<256x4xbf16>
    %c0_22 = arith.constant 0 : index
    %c0_23 = arith.constant 0 : index
    %14 = vector.load %arg8[%c0_22, %c0_23] : memref<256x48xbf16, #tpu.memory_space<vmem>>, vector<256x4xbf16>
    tpu.vector_store %arg8[%c0_22, %c0_23], %13 {strides = array<i32>} : memref<256x48xbf16, #tpu.memory_space<vmem>>, vector<256x4xbf16>,
    %c0_24 = arith.constant 0 : index
    %c1_25 = arith.constant 1 : index
    %c0_26 = arith.constant 0 : index
    %15 = vector.load %arg6[%c0_24, %c1_25, %c0_26] : memref<18x24x4xf32, #tpu.memory_space<vmem>>, vector<16x16x4xf32>
    %16 = vector.shape_cast %15 : vector<16x16x4xf32> to vector<256x4xf32>
    %17 = arith.truncf %16 : vector<256x4xf32> to vector<256x4xbf16>
    %c0_27 = arith.constant 0 : index
    %c4 = arith.constant 4 : index
    %18 = vector.load %arg8[%c0_27, %c4] : memref<256x48xbf16, #tpu.memory_space<vmem>>, vector<256x4xbf16>
    tpu.vector_store %arg8[%c0_27, %c4], %17 {strides = array<i32>} : memref<256x48xbf16, #tpu.memory_space<vmem>>, vector<256x4xbf16>,
    %c0_28 = arith.constant 0 : index
    %c2 = arith.constant 2 : index
    %c0_29 = arith.constant 0 : index
    %19 = vector.load %arg6[%c0_28, %c2, %c0_29] : memref<18x24x4xf32, #tpu.memory_space<vmem>>, vector<16x16x4xf32>
    %20 = vector.shape_cast %19 : vector<16x16x4xf32> to vector<256x4xf32>
    %21 = arith.truncf %20 : vector<256x4xf32> to vector<256x4xbf16>
    %c0_30 = arith.constant 0 : index
    %c8 = arith.constant 8 : index
    %22 = vector.load %arg8[%c0_30, %c8] : memref<256x48xbf16, #tpu.memory_space<vmem>>, vector<256x4xbf16>
    tpu.vector_store %arg8[%c0_30, %c8], %21 {strides = array<i32>} : memref<256x48xbf16, #tpu.memory_space<vmem>>, vector<256x4xbf16>,
    %c1_31 = arith.constant 1 : index
    %c0_32 = arith.constant 0 : index
    %c0_33 = arith.constant 0 : index
    %23 = vector.load %arg6[%c1_31, %c0_32, %c0_33] : memref<18x24x4xf32, #tpu.memory_space<vmem>>, vector<16x16x4xf32>
    %24 = vector.shape_cast %23 : vector<16x16x4xf32> to vector<256x4xf32>
    %25 = arith.truncf %24 : vector<256x4xf32> to vector<256x4xbf16>
    %c0_34 = arith.constant 0 : index
    %c12 = arith.constant 12 : index
    %26 = vector.load %arg8[%c0_34, %c12] : memref<256x48xbf16, #tpu.memory_space<vmem>>, vector<256x4xbf16>
    tpu.vector_store %arg8[%c0_34, %c12], %25 {strides = array<i32>} : memref<256x48xbf16, #tpu.memory_space<vmem>>, vector<256x4xbf16>,
    %c1_35 = arith.constant 1 : index
    %c1_36 = arith.constant 1 : index
    %c0_37 = arith.constant 0 : index
    %27 = vector.load %arg6[%c1_35, %c1_36, %c0_37] : memref<18x24x4xf32, #tpu.memory_space<vmem>>, vector<16x16x4xf32>
    %28 = vector.shape_cast %27 : vector<16x16x4xf32> to vector<256x4xf32>
    %29 = arith.truncf %28 : vector<256x4xf32> to vector<256x4xbf16>
    %c0_38 = arith.constant 0 : index
    %c16 = arith.constant 16 : index
    %30 = vector.load %arg8[%c0_38, %c16] : memref<256x48xbf16, #tpu.memory_space<vmem>>, vector<256x4xbf16>
    tpu.vector_store %arg8[%c0_38, %c16], %29 {strides = array<i32>} : memref<256x48xbf16, #tpu.memory_space<vmem>>, vector<256x4xbf16>,
    %c1_39 = arith.constant 1 : index
    %c2_40 = arith.constant 2 : index
    %c0_41 = arith.constant 0 : index
    %31 = vector.load %arg6[%c1_39, %c2_40, %c0_41] : memref<18x24x4xf32, #tpu.memory_space<vmem>>, vector<16x16x4xf32>
    %32 = vector.shape_cast %31 : vector<16x16x4xf32> to vector<256x4xf32>
    %33 = arith.truncf %32 : vector<256x4xf32> to vector<256x4xbf16>
    %c0_42 = arith.constant 0 : index
    %c20 = arith.constant 20 : index
    %34 = vector.load %arg8[%c0_42, %c20] : memref<256x48xbf16, #tpu.memory_space<vmem>>, vector<256x4xbf16>
    tpu.vector_store %arg8[%c0_42, %c20], %33 {strides = array<i32>} : memref<256x48xbf16, #tpu.memory_space<vmem>>, vector<256x4xbf16>,
    %c2_43 = arith.constant 2 : index
    %c0_44 = arith.constant 0 : index
    %c0_45 = arith.constant 0 : index
    %35 = vector.load %arg6[%c2_43, %c0_44, %c0_45] : memref<18x24x4xf32, #tpu.memory_space<vmem>>, vector<16x16x4xf32>
    %36 = vector.shape_cast %35 : vector<16x16x4xf32> to vector<256x4xf32>
    %37 = arith.truncf %36 : vector<256x4xf32> to vector<256x4xbf16>
    %c0_46 = arith.constant 0 : index
    %c24 = arith.constant 24 : index
    %38 = vector.load %arg8[%c0_46, %c24] : memref<256x48xbf16, #tpu.memory_space<vmem>>, vector<256x4xbf16>
    tpu.vector_store %arg8[%c0_46, %c24], %37 {strides = array<i32>} : memref<256x48xbf16, #tpu.memory_space<vmem>>, vector<256x4xbf16>,
    %c2_47 = arith.constant 2 : index
    %c1_48 = arith.constant 1 : index
    %c0_49 = arith.constant 0 : index
    %39 = vector.load %arg6[%c2_47, %c1_48, %c0_49] : memref<18x24x4xf32, #tpu.memory_space<vmem>>, vector<16x16x4xf32>
    %40 = vector.shape_cast %39 : vector<16x16x4xf32> to vector<256x4xf32>
    %41 = arith.truncf %40 : vector<256x4xf32> to vector<256x4xbf16>
    %c0_50 = arith.constant 0 : index
    %c28 = arith.constant 28 : index
    %42 = vector.load %arg8[%c0_50, %c28] : memref<256x48xbf16, #tpu.memory_space<vmem>>, vector<256x4xbf16>
    tpu.vector_store %arg8[%c0_50, %c28], %41 {strides = array<i32>} : memref<256x48xbf16, #tpu.memory_space<vmem>>, vector<256x4xbf16>,
    %c2_51 = arith.constant 2 : index
    %c2_52 = arith.constant 2 : index
    %c0_53 = arith.constant 0 : index
    %43 = vector.load %arg6[%c2_51, %c2_52, %c0_53] : memref<18x24x4xf32, #tpu.memory_space<vmem>>, vector<16x16x4xf32>
    %44 = vector.shape_cast %43 : vector<16x16x4xf32> to vector<256x4xf32>
    %45 = arith.truncf %44 : vector<256x4xf32> to vector<256x4xbf16>
    %c0_54 = arith.constant 0 : index
    %c32 = arith.constant 32 : index
    %46 = vector.load %arg8[%c0_54, %c32] : memref<256x48xbf16, #tpu.memory_space<vmem>>, vector<256x4xbf16>
    tpu.vector_store %arg8[%c0_54, %c32], %45 {strides = array<i32>} : memref<256x48xbf16, #tpu.memory_space<vmem>>, vector<256x4xbf16>,
    %cst_55 = arith.constant 0.000000e+00 : bf16
    %47 = vector.broadcast %cst_55 : bf16 to vector<256x12xbf16>
    %c0_56 = arith.constant 0 : index
    %c36 = arith.constant 36 : index
    %48 = vector.load %arg8[%c0_56, %c36] : memref<256x48xbf16, #tpu.memory_space<vmem>>, vector<256x12xbf16>
    tpu.vector_store %arg8[%c0_56, %c36], %47 {strides = array<i32>} : memref<256x48xbf16, #tpu.memory_space<vmem>>, vector<256x12xbf16>,
    %c0_57 = arith.constant 0 : index
    %c0_58 = arith.constant 0 : index
    %49 = vector.load %arg8[%c0_57, %c0_58] : memref<256x48xbf16, #tpu.memory_space<vmem>>, vector<256x48xbf16>
    %c0_59 = arith.constant 0 : index
    %c0_60 = arith.constant 0 : index
    %50 = vector.load %arg2[%c0_59, %c0_60] : memref<48x128xbf16, #tpu.memory_space<vmem>>, vector<48x128xbf16>
    %cst_61 = arith.constant dense<0.000000e+00> : vector<256x128xf32>
    %51 = tpu.matmul %49, %50, %cst_61 {dimension_numbers = #tpu.dot_dimension_numbers<[1], [0], [0], [1], [0, 0, 1, 1], [], []>} : vector<256x48xbf16>, vector<48x128xbf16>, vector<256x128xf32> -> vector<256x128xf32>
    %c0_62 = arith.constant 0 : index
    %c0_63 = arith.constant 0 : index
    %52 = vector.load %arg4[%c0_62, %c0_63] : memref<4x128xf32, #tpu.memory_space<vmem>>, vector<1x128xf32>
    %53 = vector.shape_cast %52 : vector<1x128xf32> to vector<128xf32>
    %54 = vector.shape_cast %53 : vector<128xf32> to vector<1x128xf32>
    %55 = vector.broadcast %54 : vector<1x128xf32> to vector<256x128xf32>
    %56 = arith.mulf %51, %55 : vector<256x128xf32>
    %c1_64 = arith.constant 1 : index
    %c0_65 = arith.constant 0 : index
    %57 = vector.load %arg4[%c1_64, %c0_65] : memref<4x128xf32, #tpu.memory_space<vmem>>, vector<1x128xf32>
    %58 = vector.shape_cast %57 : vector<1x128xf32> to vector<128xf32>
    %59 = vector.shape_cast %58 : vector<128xf32> to vector<1x128xf32>
    %60 = vector.broadcast %59 : vector<1x128xf32> to vector<256x128xf32>
    %61 = arith.addf %56, %60 : vector<256x128xf32>
    %cst_66 = arith.constant 0.000000e+00 : f32
    %62 = vector.broadcast %cst_66 : f32 to vector<256x128xf32>
    %63 = arith.cmpf ogt, %61, %62 : vector<256x128xf32>
    %cst_67 = arith.constant 0.00999999977 : f32
    %64 = vector.broadcast %cst_67 : f32 to vector<256x128xf32>
    %65 = arith.mulf %64, %61 : vector<256x128xf32>
    %66 = arith.select %63, %61, %65 : vector<256x128xi1>, vector<256x128xf32>
    %cst_68 = arith.constant 0.000000e+00 : f32
    %67 = vector.broadcast %cst_68 : f32 to vector<1x24x128xf32>
    %c0_69 = arith.constant 0 : index
    %c0_70 = arith.constant 0 : index
    %c0_71 = arith.constant 0 : index
    %68 = vector.load %arg7[%c0_69, %c0_70, %c0_71] : memref<18x24x128xf32, #tpu.memory_space<vmem>>, vector<1x24x128xf32>
    tpu.vector_store %arg7[%c0_69, %c0_70, %c0_71], %67 {strides = array<i32>} : memref<18x24x128xf32, #tpu.memory_space<vmem>>, vector<1x24x128xf32>,
    %cst_72 = arith.constant 0.000000e+00 : f32
    %69 = vector.broadcast %cst_72 : f32 to vector<1x24x128xf32>
    %c17_73 = arith.constant 17 : index
    %c0_74 = arith.constant 0 : index
    %c0_75 = arith.constant 0 : index
    %70 = vector.load %arg7[%c17_73, %c0_74, %c0_75] : memref<18x24x128xf32, #tpu.memory_space<vmem>>, vector<1x24x128xf32>
    tpu.vector_store %arg7[%c17_73, %c0_74, %c0_75], %69 {strides = array<i32>} : memref<18x24x128xf32, #tpu.memory_space<vmem>>, vector<1x24x128xf32>,
    %cst_76 = arith.constant 0.000000e+00 : f32
    %71 = vector.broadcast %cst_76 : f32 to vector<16x1x128xf32>
    %c1_77 = arith.constant 1 : index
    %c0_78 = arith.constant 0 : index
    %c0_79 = arith.constant 0 : index
    %72 = vector.load %arg7[%c1_77, %c0_78, %c0_79] : memref<18x24x128xf32, #tpu.memory_space<vmem>>, vector<16x1x128xf32>
    tpu.vector_store %arg7[%c1_77, %c0_78, %c0_79], %71 {strides = array<i32>} : memref<18x24x128xf32, #tpu.memory_space<vmem>>, vector<16x1x128xf32>,
    %cst_80 = arith.constant 0.000000e+00 : f32
    %73 = vector.broadcast %cst_80 : f32 to vector<16x1x128xf32>
    %c1_81 = arith.constant 1 : index
    %c17_82 = arith.constant 17 : index
    %c0_83 = arith.constant 0 : index
    %74 = vector.load %arg7[%c1_81, %c17_82, %c0_83] : memref<18x24x128xf32, #tpu.memory_space<vmem>>, vector<16x1x128xf32>
    tpu.vector_store %arg7[%c1_81, %c17_82, %c0_83], %73 {strides = array<i32>} : memref<18x24x128xf32, #tpu.memory_space<vmem>>, vector<16x1x128xf32>,
    %75 = vector.shape_cast %66 : vector<256x128xf32> to vector<16x16x128xf32>
    %c1_84 = arith.constant 1 : index
    %c1_85 = arith.constant 1 : index
    %c0_86 = arith.constant 0 : index
    %76 = vector.load %arg7[%c1_84, %c1_85, %c0_86] : memref<18x24x128xf32, #tpu.memory_space<vmem>>, vector<16x16x128xf32>
    tpu.vector_store %arg7[%c1_84, %c1_85, %c0_86], %75 {strides = array<i32>} : memref<18x24x128xf32, #tpu.memory_space<vmem>>, vector<16x16x128xf32>,
    %c0_87 = arith.constant 0 : index
    %c0_88 = arith.constant 0 : index
    %c0_89 = arith.constant 0 : index
    %77 = vector.load %arg7[%c0_87, %c0_88, %c0_89] : memref<18x24x128xf32, #tpu.memory_space<vmem>>, vector<16x16x128xf32>
    %78 = vector.shape_cast %77 : vector<16x16x128xf32> to vector<256x128xf32>
    %79 = arith.truncf %78 : vector<256x128xf32> to vector<256x128xbf16>
    %c0_90 = arith.constant 0 : index
    %c0_91 = arith.constant 0 : index
    %c0_92 = arith.constant 0 : index
    %80 = vector.load %arg3[%c0_90, %c0_91, %c0_92] : memref<9x128x128xbf16, #tpu.memory_space<vmem>>, vector<1x128x128xbf16>
    %81 = vector.shape_cast %80 : vector<1x128x128xbf16> to vector<128x128xbf16>
    %cst_93 = arith.constant dense<0.000000e+00> : vector<256x128xf32>
    %82 = tpu.matmul %79, %81, %cst_93 {dimension_numbers = #tpu.dot_dimension_numbers<[1], [0], [0], [1], [0, 0, 1, 1], [], []>} : vector<256x128xbf16>, vector<128x128xbf16>, vector<256x128xf32> -> vector<256x128xf32>
    %c0_94 = arith.constant 0 : index
    %c1_95 = arith.constant 1 : index
    %c0_96 = arith.constant 0 : index
    %83 = vector.load %arg7[%c0_94, %c1_95, %c0_96] : memref<18x24x128xf32, #tpu.memory_space<vmem>>, vector<16x16x128xf32>
    %84 = vector.shape_cast %83 : vector<16x16x128xf32> to vector<256x128xf32>
    %85 = arith.truncf %84 : vector<256x128xf32> to vector<256x128xbf16>
    %c1_97 = arith.constant 1 : index
    %c0_98 = arith.constant 0 : index
    %c0_99 = arith.constant 0 : index
    %86 = vector.load %arg3[%c1_97, %c0_98, %c0_99] : memref<9x128x128xbf16, #tpu.memory_space<vmem>>, vector<1x128x128xbf16>
    %87 = vector.shape_cast %86 : vector<1x128x128xbf16> to vector<128x128xbf16>
    %cst_100 = arith.constant dense<0.000000e+00> : vector<256x128xf32>
    %88 = tpu.matmul %85, %87, %cst_100 {dimension_numbers = #tpu.dot_dimension_numbers<[1], [0], [0], [1], [0, 0, 1, 1], [], []>} : vector<256x128xbf16>, vector<128x128xbf16>, vector<256x128xf32> -> vector<256x128xf32>
    %89 = arith.addf %82, %88 : vector<256x128xf32>
    %c0_101 = arith.constant 0 : index
    %c2_102 = arith.constant 2 : index
    %c0_103 = arith.constant 0 : index
    %90 = vector.load %arg7[%c0_101, %c2_102, %c0_103] : memref<18x24x128xf32, #tpu.memory_space<vmem>>, vector<16x16x128xf32>
    %91 = vector.shape_cast %90 : vector<16x16x128xf32> to vector<256x128xf32>
    %92 = arith.truncf %91 : vector<256x128xf32> to vector<256x128xbf16>
    %c2_104 = arith.constant 2 : index
    %c0_105 = arith.constant 0 : index
    %c0_106 = arith.constant 0 : index
    %93 = vector.load %arg3[%c2_104, %c0_105, %c0_106] : memref<9x128x128xbf16, #tpu.memory_space<vmem>>, vector<1x128x128xbf16>
    %94 = vector.shape_cast %93 : vector<1x128x128xbf16> to vector<128x128xbf16>
    %cst_107 = arith.constant dense<0.000000e+00> : vector<256x128xf32>
    %95 = tpu.matmul %92, %94, %cst_107 {dimension_numbers = #tpu.dot_dimension_numbers<[1], [0], [0], [1], [0, 0, 1, 1], [], []>} : vector<256x128xbf16>, vector<128x128xbf16>, vector<256x128xf32> -> vector<256x128xf32>
    %96 = arith.addf %89, %95 : vector<256x128xf32>
    %c1_108 = arith.constant 1 : index
    %c0_109 = arith.constant 0 : index
    %c0_110 = arith.constant 0 : index
    %97 = vector.load %arg7[%c1_108, %c0_109, %c0_110] : memref<18x24x128xf32, #tpu.memory_space<vmem>>, vector<16x16x128xf32>
    %98 = vector.shape_cast %97 : vector<16x16x128xf32> to vector<256x128xf32>
    %99 = arith.truncf %98 : vector<256x128xf32> to vector<256x128xbf16>
    %c3 = arith.constant 3 : index
    %c0_111 = arith.constant 0 : index
    %c0_112 = arith.constant 0 : index
    %100 = vector.load %arg3[%c3, %c0_111, %c0_112] : memref<9x128x128xbf16, #tpu.memory_space<vmem>>, vector<1x128x128xbf16>
    %101 = vector.shape_cast %100 : vector<1x128x128xbf16> to vector<128x128xbf16>
    %cst_113 = arith.constant dense<0.000000e+00> : vector<256x128xf32>
    %102 = tpu.matmul %99, %101, %cst_113 {dimension_numbers = #tpu.dot_dimension_numbers<[1], [0], [0], [1], [0, 0, 1, 1], [], []>} : vector<256x128xbf16>, vector<128x128xbf16>, vector<256x128xf32> -> vector<256x128xf32>
    %103 = arith.addf %96, %102 : vector<256x128xf32>
    %c1_114 = arith.constant 1 : index
    %c1_115 = arith.constant 1 : index
    %c0_116 = arith.constant 0 : index
    %104 = vector.load %arg7[%c1_114, %c1_115, %c0_116] : memref<18x24x128xf32, #tpu.memory_space<vmem>>, vector<16x16x128xf32>
    %105 = vector.shape_cast %104 : vector<16x16x128xf32> to vector<256x128xf32>
    %106 = arith.truncf %105 : vector<256x128xf32> to vector<256x128xbf16>
    %c4_117 = arith.constant 4 : index
    %c0_118 = arith.constant 0 : index
    %c0_119 = arith.constant 0 : index
    %107 = vector.load %arg3[%c4_117, %c0_118, %c0_119] : memref<9x128x128xbf16, #tpu.memory_space<vmem>>, vector<1x128x128xbf16>
    %108 = vector.shape_cast %107 : vector<1x128x128xbf16> to vector<128x128xbf16>
    %cst_120 = arith.constant dense<0.000000e+00> : vector<256x128xf32>
    %109 = tpu.matmul %106, %108, %cst_120 {dimension_numbers = #tpu.dot_dimension_numbers<[1], [0], [0], [1], [0, 0, 1, 1], [], []>} : vector<256x128xbf16>, vector<128x128xbf16>, vector<256x128xf32> -> vector<256x128xf32>
    %110 = arith.addf %103, %109 : vector<256x128xf32>
    %c1_121 = arith.constant 1 : index
    %c2_122 = arith.constant 2 : index
    %c0_123 = arith.constant 0 : index
    %111 = vector.load %arg7[%c1_121, %c2_122, %c0_123] : memref<18x24x128xf32, #tpu.memory_space<vmem>>, vector<16x16x128xf32>
    %112 = vector.shape_cast %111 : vector<16x16x128xf32> to vector<256x128xf32>
    %113 = arith.truncf %112 : vector<256x128xf32> to vector<256x128xbf16>
    %c5 = arith.constant 5 : index
    %c0_124 = arith.constant 0 : index
    %c0_125 = arith.constant 0 : index
    %114 = vector.load %arg3[%c5, %c0_124, %c0_125] : memref<9x128x128xbf16, #tpu.memory_space<vmem>>, vector<1x128x128xbf16>
    %115 = vector.shape_cast %114 : vector<1x128x128xbf16> to vector<128x128xbf16>
    %cst_126 = arith.constant dense<0.000000e+00> : vector<256x128xf32>
    %116 = tpu.matmul %113, %115, %cst_126 {dimension_numbers = #tpu.dot_dimension_numbers<[1], [0], [0], [1], [0, 0, 1, 1], [], []>} : vector<256x128xbf16>, vector<128x128xbf16>, vector<256x128xf32> -> vector<256x128xf32>
    %117 = arith.addf %110, %116 : vector<256x128xf32>
    %c2_127 = arith.constant 2 : index
    %c0_128 = arith.constant 0 : index
    %c0_129 = arith.constant 0 : index
    %118 = vector.load %arg7[%c2_127, %c0_128, %c0_129] : memref<18x24x128xf32, #tpu.memory_space<vmem>>, vector<16x16x128xf32>
    %119 = vector.shape_cast %118 : vector<16x16x128xf32> to vector<256x128xf32>
    %120 = arith.truncf %119 : vector<256x128xf32> to vector<256x128xbf16>
    %c6 = arith.constant 6 : index
    %c0_130 = arith.constant 0 : index
    %c0_131 = arith.constant 0 : index
    %121 = vector.load %arg3[%c6, %c0_130, %c0_131] : memref<9x128x128xbf16, #tpu.memory_space<vmem>>, vector<1x128x128xbf16>
    %122 = vector.shape_cast %121 : vector<1x128x128xbf16> to vector<128x128xbf16>
    %cst_132 = arith.constant dense<0.000000e+00> : vector<256x128xf32>
    %123 = tpu.matmul %120, %122, %cst_132 {dimension_numbers = #tpu.dot_dimension_numbers<[1], [0], [0], [1], [0, 0, 1, 1], [], []>} : vector<256x128xbf16>, vector<128x128xbf16>, vector<256x128xf32> -> vector<256x128xf32>
    %124 = arith.addf %117, %123 : vector<256x128xf32>
    %c2_133 = arith.constant 2 : index
    %c1_134 = arith.constant 1 : index
    %c0_135 = arith.constant 0 : index
    %125 = vector.load %arg7[%c2_133, %c1_134, %c0_135] : memref<18x24x128xf32, #tpu.memory_space<vmem>>, vector<16x16x128xf32>
    %126 = vector.shape_cast %125 : vector<16x16x128xf32> to vector<256x128xf32>
    %127 = arith.truncf %126 : vector<256x128xf32> to vector<256x128xbf16>
    %c7 = arith.constant 7 : index
    %c0_136 = arith.constant 0 : index
    %c0_137 = arith.constant 0 : index
    %128 = vector.load %arg3[%c7, %c0_136, %c0_137] : memref<9x128x128xbf16, #tpu.memory_space<vmem>>, vector<1x128x128xbf16>
    %129 = vector.shape_cast %128 : vector<1x128x128xbf16> to vector<128x128xbf16>
    %cst_138 = arith.constant dense<0.000000e+00> : vector<256x128xf32>
    %130 = tpu.matmul %127, %129, %cst_138 {dimension_numbers = #tpu.dot_dimension_numbers<[1], [0], [0], [1], [0, 0, 1, 1], [], []>} : vector<256x128xbf16>, vector<128x128xbf16>, vector<256x128xf32> -> vector<256x128xf32>
    %131 = arith.addf %124, %130 : vector<256x128xf32>
    %c2_139 = arith.constant 2 : index
    %c2_140 = arith.constant 2 : index
    %c0_141 = arith.constant 0 : index
    %132 = vector.load %arg7[%c2_139, %c2_140, %c0_141] : memref<18x24x128xf32, #tpu.memory_space<vmem>>, vector<16x16x128xf32>
    %133 = vector.shape_cast %132 : vector<16x16x128xf32> to vector<256x128xf32>
    %134 = arith.truncf %133 : vector<256x128xf32> to vector<256x128xbf16>
    %c8_142 = arith.constant 8 : index
    %c0_143 = arith.constant 0 : index
    %c0_144 = arith.constant 0 : index
    %135 = vector.load %arg3[%c8_142, %c0_143, %c0_144] : memref<9x128x128xbf16, #tpu.memory_space<vmem>>, vector<1x128x128xbf16>
    %136 = vector.shape_cast %135 : vector<1x128x128xbf16> to vector<128x128xbf16>
    %cst_145 = arith.constant dense<0.000000e+00> : vector<256x128xf32>
    %137 = tpu.matmul %134, %136, %cst_145 {dimension_numbers = #tpu.dot_dimension_numbers<[1], [0], [0], [1], [0, 0, 1, 1], [], []>} : vector<256x128xbf16>, vector<128x128xbf16>, vector<256x128xf32> -> vector<256x128xf32>
    %138 = arith.addf %131, %137 : vector<256x128xf32>
    %c2_146 = arith.constant 2 : index
    %c0_147 = arith.constant 0 : index
    %139 = vector.load %arg4[%c2_146, %c0_147] : memref<4x128xf32, #tpu.memory_space<vmem>>, vector<1x128xf32>
    %140 = vector.shape_cast %139 : vector<1x128xf32> to vector<128xf32>
    %141 = vector.shape_cast %140 : vector<128xf32> to vector<1x128xf32>
    %142 = vector.broadcast %141 : vector<1x128xf32> to vector<256x128xf32>
    %143 = arith.mulf %138, %142 : vector<256x128xf32>
    %c3_148 = arith.constant 3 : index
    %c0_149 = arith.constant 0 : index
    %144 = vector.load %arg4[%c3_148, %c0_149] : memref<4x128xf32, #tpu.memory_space<vmem>>, vector<1x128xf32>
    %145 = vector.shape_cast %144 : vector<1x128xf32> to vector<128xf32>
    %146 = vector.shape_cast %145 : vector<128xf32> to vector<1x128xf32>
    %147 = vector.broadcast %146 : vector<1x128xf32> to vector<256x128xf32>
    %148 = arith.addf %143, %147 : vector<256x128xf32>
    %cst_150 = arith.constant 0.000000e+00 : f32
    %149 = vector.broadcast %cst_150 : f32 to vector<256x128xf32>
    %150 = arith.cmpf ogt, %148, %149 : vector<256x128xf32>
    %cst_151 = arith.constant 0.00999999977 : f32
    %151 = vector.broadcast %cst_151 : f32 to vector<256x128xf32>
    %152 = arith.mulf %151, %148 : vector<256x128xf32>
    %153 = arith.select %150, %148, %152 : vector<256x128xi1>, vector<256x128xf32>
    %154 = arith.addf %153, %66 : vector<256x128xf32>
    %155 = vector.extract_strided_slice %154 {offsets = [0, 0], sizes = [256, 8], strides = [1, 1]} : vector<256x128xf32> to vector<256x8xf32>
    %156 = vector.shape_cast %155 : vector<256x8xf32> to vector<1x16x16x8xf32>
    %c0_152 = arith.constant 0 : index
    %c0_153 = arith.constant 0 : index
    %c0_154 = arith.constant 0 : index
    %c0_155 = arith.constant 0 : index
    %157 = vector.load %arg5[%c0_152, %c0_153, %c0_154, %c0_155] : memref<1x16x16x8xf32, #tpu.memory_space<vmem>>, vector<1x16x16x8xf32>
    tpu.vector_store %arg5[%c0_152, %c0_153, %c0_154, %c0_155], %156 {strides = array<i32>} : memref<1x16x16x8xf32, #tpu.memory_space<vmem>>, vector<1x16x16x8xf32>,
    return
  }
  func.func @transform_0(%arg0: i32) -> (i32, i32, i32, i32) {
    %c0_i32 = arith.constant 0 : i32
    %c0_i32_0 = arith.constant 0 : i32
    %c0_i32_1 = arith.constant 0 : i32
    %c0_i32_2 = arith.constant 0 : i32
    return %arg0, %c0_i32, %c0_i32_0, %c0_i32_1 : i32, i32, i32, i32
  }
  func.func @transform_1(%arg0: i32) -> (i32, i32) {
    %c0_i32 = arith.constant 0 : i32
    %c0_i32_0 = arith.constant 0 : i32
    %c0_i32_1 = arith.constant 0 : i32
    return %c0_i32, %c0_i32_0 : i32, i32
  }
  func.func @transform_2(%arg0: i32) -> (i32, i32, i32) {
    %c0_i32 = arith.constant 0 : i32
    %c0_i32_0 = arith.constant 0 : i32
    %c0_i32_1 = arith.constant 0 : i32
    %c0_i32_2 = arith.constant 0 : i32
    return %c0_i32, %c0_i32_0, %c0_i32_1 : i32, i32, i32
  }
  func.func @transform_3(%arg0: i32) -> (i32, i32) {
    %c0_i32 = arith.constant 0 : i32
    %c0_i32_0 = arith.constant 0 : i32
    %c0_i32_1 = arith.constant 0 : i32
    return %c0_i32, %c0_i32_0 : i32, i32
  }
  func.func @transform_4(%arg0: i32) -> (i32, i32, i32, i32) {
    %c0_i32 = arith.constant 0 : i32
    %c0_i32_0 = arith.constant 0 : i32
    %c0_i32_1 = arith.constant 0 : i32
    %c0_i32_2 = arith.constant 0 : i32
    return %arg0, %c0_i32, %c0_i32_0, %c0_i32_1 : i32, i32, i32, i32
  }
}

</mosaic_0001>

<llo_original>
// kernel: tpu_custom_call.1
$region0: #{tpu_custom_call.1}
  #allocation0 [shape = 'u32[]', space=smem, size = 0x4, offset = 0x4, fixed_abs, tag = 'smem constant byte address 0x4 - core index']
  #allocation1 [shape = 'u32[144,128]{1,0:T(1,128)}', space=vmem, size = 0x12000, scoped, tag = 'internal scratch']
  #allocation2 [shape = 'f32[18,24,4]{2,1,0:T(8,128)}', space=vmem, size = 0x36000, scoped, tag = 'scratch operand']
  #allocation3 [shape = 'f32[18,24,128]{2,1,0:T(8,128)}', space=vmem, size = 0x36000, scoped, tag = 'scratch operand']
  #allocation4 [shape = 'bf16[256,48]{1,0:T(16,128)(2,1)}', space=vmem, size = 0x10000, scoped, tag = 'scratch operand']
  %s0 = inlined_call_operand.vmem [shape: f32[2,16,16,4], index: 0, kind: input, shape index: {}]
  %s1 = inlined_call_operand.vmem [shape: bf16[48,128], index: 1, kind: input, shape index: {}]
  %s2 = inlined_call_operand.vmem [shape: bf16[9,128,128], index: 2, kind: input, shape index: {}]
  %s3 = inlined_call_operand.vmem [shape: f32[4,128], index: 3, kind: input, shape index: {}]
  %s4 = inlined_call_operand.vmem [shape: f32[2,16,16,8], index: 4, kind: output, shape index: {}]
  %s5 = sld [smem:[#allocation0]]
  $region49: #{tpu_custom_call.1} parent=0
    _
  %s7 = ssub.s32 1, %s5
  %s8 = scalar_select 0, %s7, %s5
  loop: start=0, step=1, limit=4
  $region2: #{tpu_custom_call.1} parent=0 // loop_pre_header
    _
  $region3: #{tpu_custom_call.1} parent=0 // loop_header
    %s10 = sphi 0, %s14
    %p11 = scmp.ge.s32.totalorder %s10, 4
    %s20 = sphi 0, %s22
    %s23 = sphi 0, %s20
    %s24 = sphi 0, %s23
    %s40 = sphi 0, %s24
    %s44 = sphi 0, %s44
    %s46 = sphi 0, %s44
    %s47 = sphi 0, %s46
    %s61 = sphi 0, %s47
    %s65 = sphi 0, %s65
    %s67 = sphi 0, %s65
    %s68 = sphi 0, %s67
    %s82 = sphi 0, %s68
    %s86 = sphi 0, %s86
    %s88 = sphi 0, %s86
    %s89 = sphi 0, %s88
    %s103 = sphi 0, %s89
    %s109 = sphi 0, %s111
    %s112 = sphi 0, %s109
    %s113 = sphi 0, %s112
    %s129 = sphi 0, %s113
  $region4: #{tpu_custom_call.1} parent=0 // loop_header_branch
    %13 = sbr.rel (%p11) target = $region8
  $region5: #{tpu_custom_call.1} parent=0 // loop_body
    %s15 = ssub.s32 %s10, 1
    %s16 = ssub.s32 %s10, 2
    %s17 = sadd.s32 %s10, 1
    %s18 = ssub.s32 %s10, %s17
    %p19 = scmp.eq.s32.totalorder %s18, 0
    %s21 = sadd.s32 %s20, 1
    %s22 = scalar_select %p19, %s20, %s21
    %p25 = pneg %p19
    %p26 = scmp.eq.s32.totalorder %s10, 1
    %p27 = por %p25, %p26
    %p28 = scmp.ne.s32.totalorder %s20, %s23
    %p29 = scmp.eq.s32.totalorder %s10, 0
    %p30 = por %p28, %p29
    %p31 = scmp.ne.s32.totalorder %s20, %s23
    %p32 = scmp.eq.s32.totalorder %s15, 1
    %p33 = por %p31, %p32
    %p34 = scmp.ne.s32.totalorder %s23, %s24
    %p35 = scmp.eq.s32.totalorder %s15, 0
    %p36 = por %p34, %p35
    %p37 = scmp.ne.s32.totalorder %s23, %s24
    %p38 = scmp.eq.s32.totalorder %s16, 1
    %p39 = por %p37, %p38
    %p41 = scmp.ne.s32.totalorder %s24, %s40
    %p42 = scmp.eq.s32.totalorder %s16, 0
    %p43 = por %p41, %p42
    %s45 = sadd.s32 %s44, 1
    %p48 = scmp.eq.s32.totalorder %s10, 1
    %p49 = scmp.ne.s32.totalorder %s44, %s46
    %p50 = scmp.eq.s32.totalorder %s10, 0
    %p51 = por %p49, %p50
    %p52 = scmp.ne.s32.totalorder %s44, %s46
    %p53 = scmp.eq.s32.totalorder %s15, 1
    %p54 = por %p52, %p53
    %p55 = scmp.ne.s32.totalorder %s46, %s47
    %p56 = scmp.eq.s32.totalorder %s15, 0
    %p57 = por %p55, %p56
    %p58 = scmp.ne.s32.totalorder %s46, %s47
    %p59 = scmp.eq.s32.totalorder %s16, 1
    %p60 = por %p58, %p59
    %p62 = scmp.ne.s32.totalorder %s47, %s61
    %p63 = scmp.eq.s32.totalorder %s16, 0
    %p64 = por %p62, %p63
    %s66 = sadd.s32 %s65, 1
    %p69 = scmp.eq.s32.totalorder %s10, 1
    %p70 = scmp.ne.s32.totalorder %s65, %s67
    %p71 = scmp.eq.s32.totalorder %s10, 0
    %p72 = por %p70, %p71
    %p73 = scmp.ne.s32.totalorder %s65, %s67
    %p74 = scmp.eq.s32.totalorder %s15, 1
    %p75 = por %p73, %p74
    %p76 = scmp.ne.s32.totalorder %s67, %s68
    %p77 = scmp.eq.s32.totalorder %s15, 0
    %p78 = por %p76, %p77
    %p79 = scmp.ne.s32.totalorder %s67, %s68
    %p80 = scmp.eq.s32.totalorder %s16, 1
    %p81 = por %p79, %p80
    %p83 = scmp.ne.s32.totalorder %s68, %s82
    %p84 = scmp.eq.s32.totalorder %s16, 0
    %p85 = por %p83, %p84
    %s87 = sadd.s32 %s86, 1
    %p90 = scmp.eq.s32.totalorder %s10, 1
    %p91 = scmp.ne.s32.totalorder %s86, %s88
    %p92 = scmp.eq.s32.totalorder %s10, 0
    %p93 = por %p91, %p92
    %p94 = scmp.ne.s32.totalorder %s86, %s88
    %p95 = scmp.eq.s32.totalorder %s15, 1
    %p96 = por %p94, %p95
    %p97 = scmp.ne.s32.totalorder %s88, %s89
    %p98 = scmp.eq.s32.totalorder %s15, 0
    %p99 = por %p97, %p98
    %p100 = scmp.ne.s32.totalorder %s88, %s89
    %p101 = scmp.eq.s32.totalorder %s16, 1
    %p102 = por %p100, %p101
    %p104 = scmp.ne.s32.totalorder %s89, %s103
    %p105 = scmp.eq.s32.totalorder %s16, 0
    %p106 = por %p104, %p105
    %s107 = ssub.s32 %s10, %s17
    %p108 = scmp.eq.s32.totalorder %s107, 0
    %s110 = sadd.s32 %s109, 1
    %s111 = scalar_select %p108, %s109, %s110
    %p114 = pneg %p108
    %p115 = scmp.eq.s32.totalorder %s10, 1
    %p116 = por %p114, %p115
    %p117 = scmp.ne.s32.totalorder %s109, %s112
    %p118 = scmp.eq.s32.totalorder %s10, 0
    %p119 = por %p117, %p118
    %p120 = scmp.ne.s32.totalorder %s109, %s112
    %p121 = scmp.eq.s32.totalorder %s15, 1
    %p122 = por %p120, %p121
    %p123 = scmp.ne.s32.totalorder %s112, %s113
    %p124 = scmp.eq.s32.totalorder %s15, 0
    %p125 = por %p123, %p124
    %p126 = scmp.ne.s32.totalorder %s112, %s113
    %p127 = scmp.eq.s32.totalorder %s16, 1
    %p128 = por %p126, %p127
    %p130 = scmp.ne.s32.totalorder %s113, %s129
    %p131 = scmp.eq.s32.totalorder %s16, 0
    %p132 = por %p130, %p131
    %p133 = scmp.le.s32.totalorder 1, %s10
    %p134 = scmp.lt.s32.totalorder %s10, 3
    %p135 = pnand %p133, %p134
    %p136 = pneg %p135
    // Predicated region
    $region9: #{tpu_custom_call.1} parent=5 // pred_check
      _
    $region10: #{tpu_custom_call.1} parent=5 // pred_check_branch
      %138 = sbr.rel (%p135) target = $region12
    $region11: #{tpu_custom_call.1} parent=5 // pred_region
      %s139 = ssub.s32 %s10, 1
      // Predicated region
      $region13: #{tpu_custom_call.1} parent=11 // pred_check
        %p140 = pneg %p57
      $region14: #{tpu_custom_call.1} parent=11 // pred_check_branch
        %142 = sbr.rel (%p140) target = $region16
      $region15: #{tpu_custom_call.1} parent=11 // pred_region
        _
      $region16: #{tpu_custom_call.1} parent=11 // pred_fallthru
        _
      // Predicated region
      $region17: #{tpu_custom_call.1} parent=11 // pred_check
        %p143 = pneg %p78
      $region18: #{tpu_custom_call.1} parent=11 // pred_check_branch
        %145 = sbr.rel (%p143) target = $region20
      $region19: #{tpu_custom_call.1} parent=11 // pred_region
        _
      $region20: #{tpu_custom_call.1} parent=11 // pred_fallthru
        _
      // Predicated region
      $region21: #{tpu_custom_call.1} parent=11 // pred_check
        %p146 = pneg %p99
      $region22: #{tpu_custom_call.1} parent=11 // pred_check_branch
        %148 = sbr.rel (%p146) target = $region24
      $region23: #{tpu_custom_call.1} parent=11 // pred_region
        _
      $region24: #{tpu_custom_call.1} parent=11 // pred_fallthru
        _
    $region12: #{tpu_custom_call.1} parent=5 // pred_fallthru
      _
    %p149 = scmp.lt.s32.totalorder %s10, 2
    // Predicated region
    $region25: #{tpu_custom_call.1} parent=5 // pred_check
      %p150 = pneg %p149
    $region26: #{tpu_custom_call.1} parent=5 // pred_check_branch
      %152 = sbr.rel (%p150) target = $region28
    $region27: #{tpu_custom_call.1} parent=5 // pred_region
      // Predicated region
      $region29: #{tpu_custom_call.1} parent=27 // pred_check
        %p153 = pneg %p30
      $region30: #{tpu_custom_call.1} parent=27 // pred_check_branch
        %155 = sbr.rel (%p153) target = $region32
      $region31: #{tpu_custom_call.1} parent=27 // pred_region
        %p156 = scmp.lt.s32.totalorder %s10, 1
        %s157 = scalar_select %p156, %s10, 1
        %s158 = smul.addr %s157, 32
        %s159 = smul.addr %s158, 8
        %s160 = scalar_lea.vmem %s0, %s159
      $region32: #{tpu_custom_call.1} parent=27 // pred_fallthru
        _
    $region28: #{tpu_custom_call.1} parent=5 // pred_fallthru
      _
    %p161 = scmp.le.s32.totalorder 1, %s10
    %p162 = scmp.lt.s32.totalorder %s10, 3
    %p163 = pnand %p161, %p162
    %p164 = pneg %p163
    // Predicated region
    $region33: #{tpu_custom_call.1} parent=5 // pred_check
      _
    $region34: #{tpu_custom_call.1} parent=5 // pred_check_branch
      %166 = sbr.rel (%p163) target = $region36
    $region35: #{tpu_custom_call.1} parent=5 // pred_region
      %s167 = ssub.s32 %s10, 1
      %p168 = scmp.lt.s32.totalorder %s15, 1
      %s169 = scalar_select %p168, %s15, 1
      %s170 = smul.addr %s169, 32
      %s171 = smul.addr %s170, 8
      %s172 = scalar_lea.vmem %s0, %s171
      %p173 = pneg %p36
      %p174 = pneg %p33
      %p175 = pneg %p57
      %p176 = pneg %p54
      %p177 = pneg %p78
      %p178 = pneg %p75
      %p179 = pneg %p99
      %p180 = pneg %p96
      %p181 = pneg %p125
      %p182 = pneg %p122
      %p183 = scmp.lt.s32.totalorder %s15, 1
      %s184 = scalar_select %p183, %s15, 1
      %s185 = smul.addr %s184, 32
      %s186 = smul.addr %s185, 8
      %s187 = scalar_lea.vmem %s4, %s186
      %p188 = scmp.lt.s32.totalorder %s15, 1
      %s189 = scalar_select %p188, %s15, 1
      %s190 = smul.addr %s189, 32
      %s191 = smul.addr %s190, 8
      %s192 = scalar_lea.vmem %s0, %s191
      %p193 = scmp.lt.s32.totalorder %s15, 1
      %s194 = scalar_select %p193, %s15, 1
      %s195 = smul.addr %s194, 32
      %s196 = smul.addr %s195, 8
      %s197 = scalar_lea.vmem %s4, %s196
      %vm199 = vcmask 31744
      %200 = vst.msk [vmem:[#allocation2] sm:$0xff] %vm199, 0.0
      %201 = vst.msk [vmem:[#allocation2 + $0x8] sm:$0xff] %vm199, 0.0
      %202 = vst.msk [vmem:[#allocation2 + $0x10] sm:$0xff] %vm199, 0.0
      %s203 = scalar_lea.vmem [#allocation2], 408
      %204 = vst.msk [vmem:[%s203] sm:$0xff] %vm199, 0.0
      %205 = vst.msk [vmem:[%s203 + $0x8] sm:$0xff] %vm199, 0.0
      %206 = vst.msk [vmem:[%s203 + $0x10] sm:$0xff] %vm199, 0.0
      %s207 = scalar_lea.vmem [#allocation2], 24
      %vm208 = vcmask 24576
      %209 = vst.msk [vmem:[%s207] sm:$0x1] %vm208, 0.0
      %210 = vst.msk [vmem:[%s207 + $0x18] sm:$0x1] %vm208, 0.0
      %211 = vst.msk [vmem:[%s207 + $0x30] sm:$0x1] %vm208, 0.0
      %212 = vst.msk [vmem:[%s207 + $0x48] sm:$0x1] %vm208, 0.0
      %213 = vst.msk [vmem:[%s207 + $0x60] sm:$0x1] %vm208, 0.0
      %214 = vst.msk [vmem:[%s207 + $0x78] sm:$0x1] %vm208, 0.0
      %215 = vst.msk [vmem:[%s207 + $0x90] sm:$0x1] %vm208, 0.0
      %216 = vst.msk [vmem:[%s207 + $0xa8] sm:$0x1] %vm208, 0.0
      %217 = vst.msk [vmem:[%s207 + $0xc0] sm:$0x1] %vm208, 0.0
      %218 = vst.msk [vmem:[%s207 + $0xd8] sm:$0x1] %vm208, 0.0
      %219 = vst.msk [vmem:[%s207 + $0xf0] sm:$0x1] %vm208, 0.0
      %220 = vst.msk [vmem:[%s207 + $0x108] sm:$0x1] %vm208, 0.0
      %221 = vst.msk [vmem:[%s207 + $0x120] sm:$0x1] %vm208, 0.0
      %222 = vst.msk [vmem:[%s207 + $0x138] sm:$0x1] %vm208, 0.0
      %223 = vst.msk [vmem:[%s207 + $0x150] sm:$0x1] %vm208, 0.0
      %224 = vst.msk [vmem:[%s207 + $0x168] sm:$0x1] %vm208, 0.0
      %225 = vst.msk [vmem:[%s207 + $0x11] sm:$0x1] %vm208, 0.0
      %226 = vst.msk [vmem:[%s207 + $0x29] sm:$0x1] %vm208, 0.0
      %227 = vst.msk [vmem:[%s207 + $0x41] sm:$0x1] %vm208, 0.0
      %228 = vst.msk [vmem:[%s207 + $0x59] sm:$0x1] %vm208, 0.0
      %229 = vst.msk [vmem:[%s207 + $0x71] sm:$0x1] %vm208, 0.0
      %230 = vst.msk [vmem:[%s207 + $0x89] sm:$0x1] %vm208, 0.0
      %231 = vst.msk [vmem:[%s207 + $0xa1] sm:$0x1] %vm208, 0.0
      %232 = vst.msk [vmem:[%s207 + $0xb9] sm:$0x1] %vm208, 0.0
      %233 = vst.msk [vmem:[%s207 + $0xd1] sm:$0x1] %vm208, 0.0
      %234 = vst.msk [vmem:[%s207 + $0xe9] sm:$0x1] %vm208, 0.0
      %235 = vst.msk [vmem:[%s207 + $0x101] sm:$0x1] %vm208, 0.0
      %236 = vst.msk [vmem:[%s207 + $0x119] sm:$0x1] %vm208, 0.0
      %237 = vst.msk [vmem:[%s207 + $0x131] sm:$0x1] %vm208, 0.0
      %238 = vst.msk [vmem:[%s207 + $0x149] sm:$0x1] %vm208, 0.0
      %239 = vst.msk [vmem:[%s207 + $0x161] sm:$0x1] %vm208, 0.0
      %240 = vst.msk [vmem:[%s207 + $0x179] sm:$0x1] %vm208, 0.0
      %v241 = vld [vmem:[%s192] sm:$0xff]
      %v242 = vld [vmem:[%s192 + $0x8] sm:$0xff]
      %v243 = vld [vmem:[%s192 + $0x10] sm:$0xff]
      %v244 = vld [vmem:[%s192 + $0x18] sm:$0xff]
      %v245 = vld [vmem:[%s192 + $0x20] sm:$0xff]
      %v246 = vld [vmem:[%s192 + $0x28] sm:$0xff]
      %v247 = vld [vmem:[%s192 + $0x30] sm:$0xff]
      %v248 = vld [vmem:[%s192 + $0x38] sm:$0xff]
      %v249 = vld [vmem:[%s192 + $0x40] sm:$0xff]
      %v250 = vld [vmem:[%s192 + $0x48] sm:$0xff]
      %v251 = vld [vmem:[%s192 + $0x50] sm:$0xff]
      %v252 = vld [vmem:[%s192 + $0x58] sm:$0xff]
      %v253 = vld [vmem:[%s192 + $0x60] sm:$0xff]
      %v254 = vld [vmem:[%s192 + $0x68] sm:$0xff]
      %v255 = vld [vmem:[%s192 + $0x70] sm:$0xff]
      %v256 = vld [vmem:[%s192 + $0x78] sm:$0xff]
      %v257 = vld [vmem:[%s192 + $0x80] sm:$0xff]
      %v258 = vld [vmem:[%s192 + $0x88] sm:$0xff]
      %v259 = vld [vmem:[%s192 + $0x90] sm:$0xff]
      %v260 = vld [vmem:[%s192 + $0x98] sm:$0xff]
      %v261 = vld [vmem:[%s192 + $0xa0] sm:$0xff]
      %v262 = vld [vmem:[%s192 + $0xa8] sm:$0xff]
      %v263 = vld [vmem:[%s192 + $0xb0] sm:$0xff]
      %v264 = vld [vmem:[%s192 + $0xb8] sm:$0xff]
      %v265 = vld [vmem:[%s192 + $0xc0] sm:$0xff]
      %v266 = vld [vmem:[%s192 + $0xc8] sm:$0xff]
      %v267 = vld [vmem:[%s192 + $0xd0] sm:$0xff]
      %v268 = vld [vmem:[%s192 + $0xd8] sm:$0xff]
      %v269 = vld [vmem:[%s192 + $0xe0] sm:$0xff]
      %v270 = vld [vmem:[%s192 + $0xe8] sm:$0xff]
      %v271 = vld [vmem:[%s192 + $0xf0] sm:$0xff]
      %v272 = vld [vmem:[%s192 + $0xf8] sm:$0xff]
      %273 = vst.msk [vmem:[%s207 + $0x1] sm:$0xff] %vm199, %v241
      %274 = vst.msk [vmem:[%s207 + $0x9] sm:$0xff] %vm199, %v242
      %275 = vst.msk [vmem:[%s207 + $0x19] sm:$0xff] %vm199, %v243
      %276 = vst.msk [vmem:[%s207 + $0x21] sm:$0xff] %vm199, %v244
      %277 = vst.msk [vmem:[%s207 + $0x31] sm:$0xff] %vm199, %v245
      %278 = vst.msk [vmem:[%s207 + $0x39] sm:$0xff] %vm199, %v246
      %279 = vst.msk [vmem:[%s207 + $0x49] sm:$0xff] %vm199, %v247
      %280 = vst.msk [vmem:[%s207 + $0x51] sm:$0xff] %vm199, %v248
      %281 = vst.msk [vmem:[%s207 + $0x61] sm:$0xff] %vm199, %v249
      %282 = vst.msk [vmem:[%s207 + $0x69] sm:$0xff] %vm199, %v250
      %283 = vst.msk [vmem:[%s207 + $0x79] sm:$0xff] %vm199, %v251
      %284 = vst.msk [vmem:[%s207 + $0x81] sm:$0xff] %vm199, %v252
      %285 = vst.msk [vmem:[%s207 + $0x91] sm:$0xff] %vm199, %v253
      %286 = vst.msk [vmem:[%s207 + $0x99] sm:$0xff] %vm199, %v254
      %287 = vst.msk [vmem:[%s207 + $0xa9] sm:$0xff] %vm199, %v255
      %288 = vst.msk [vmem:[%s207 + $0xb1] sm:$0xff] %vm199, %v256
      %289 = vst.msk [vmem:[%s207 + $0xc1] sm:$0xff] %vm199, %v257
      %290 = vst.msk [vmem:[%s207 + $0xc9] sm:$0xff] %vm199, %v258
      %291 = vst.msk [vmem:[%s207 + $0xd9] sm:$0xff] %vm199, %v259
      %292 = vst.msk [vmem:[%s207 + $0xe1] sm:$0xff] %vm199, %v260
      %293 = vst.msk [vmem:[%s207 + $0xf1] sm:$0xff] %vm199, %v261
      %294 = vst.msk [vmem:[%s207 + $0xf9] sm:$0xff] %vm199, %v262
      %295 = vst.msk [vmem:[%s207 + $0x109] sm:$0xff] %vm199, %v263
      %296 = vst.msk [vmem:[%s207 + $0x111] sm:$0xff] %vm199, %v264
      %297 = vst.msk [vmem:[%s207 + $0x121] sm:$0xff] %vm199, %v265
      %298 = vst.msk [vmem:[%s207 + $0x129] sm:$0xff] %vm199, %v266
      %299 = vst.msk [vmem:[%s207 + $0x139] sm:$0xff] %vm199, %v267
      %300 = vst.msk [vmem:[%s207 + $0x141] sm:$0xff] %vm199, %v268
      %301 = vst.msk [vmem:[%s207 + $0x151] sm:$0xff] %vm199, %v269
      %302 = vst.msk [vmem:[%s207 + $0x159] sm:$0xff] %vm199, %v270
      %303 = vst.msk [vmem:[%s207 + $0x169] sm:$0xff] %vm199, %v271
      %304 = vst.msk [vmem:[%s207 + $0x171] sm:$0xff] %vm199, %v272
      %v305 = vld [vmem:[#allocation2] sm:$0xff]
      %v306 = vld [vmem:[#allocation2 + $0x8] sm:$0xff]
      %v307 = vld [vmem:[#allocation2 + $0x18] sm:$0xff]
      %v308 = vld [vmem:[#allocation2 + $0x20] sm:$0xff]
      %v309 = vld [vmem:[#allocation2 + $0x30] sm:$0xff]
      %v310 = vld [vmem:[#allocation2 + $0x38] sm:$0xff]
      %v311 = vld [vmem:[#allocation2 + $0x48] sm:$0xff]
      %v312 = vld [vmem:[#allocation2 + $0x50] sm:$0xff]
      %v313 = vld [vmem:[#allocation2 + $0x60] sm:$0xff]
      %v314 = vld [vmem:[#allocation2 + $0x68] sm:$0xff]
      %v315 = vld [vmem:[#allocation2 + $0x78] sm:$0xff]
      %v316 = vld [vmem:[#allocation2 + $0x80] sm:$0xff]
      %v317 = vld [vmem:[#allocation2 + $0x90] sm:$0xff]
      %v318 = vld [vmem:[#allocation2 + $0x98] sm:$0xff]
      %v319 = vld [vmem:[#allocation2 + $0xa8] sm:$0xff]
      %v320 = vld [vmem:[#allocation2 + $0xb0] sm:$0xff]
      %v321 = vld [vmem:[#allocation2 + $0xc0] sm:$0xff]
      %v322 = vld [vmem:[#allocation2 + $0xc8] sm:$0xff]
      %v323 = vld [vmem:[#allocation2 + $0xd8] sm:$0xff]
      %v324 = vld [vmem:[#allocation2 + $0xe0] sm:$0xff]
      %v325 = vld [vmem:[#allocation2 + $0xf0] sm:$0xff]
      %v326 = vld [vmem:[#allocation2 + $0xf8] sm:$0xff]
      %v327 = vld [vmem:[#allocation2 + $0x108] sm:$0xff]
      %v328 = vld [vmem:[#allocation2 + $0x110] sm:$0xff]
      %v329 = vld [vmem:[#allocation2 + $0x120] sm:$0xff]
      %v330 = vld [vmem:[#allocation2 + $0x128] sm:$0xff]
      %v331 = vld [vmem:[#allocation2 + $0x138] sm:$0xff]
      %v332 = vld [vmem:[#allocation2 + $0x140] sm:$0xff]
      %v333 = vld [vmem:[#allocation2 + $0x150] sm:$0xff]
      %v334 = vld [vmem:[#allocation2 + $0x158] sm:$0xff]
      %v335 = vld [vmem:[#allocation2 + $0x168] sm:$0xff]
      %v336 = vld [vmem:[#allocation2 + $0x170] sm:$0xff]
      %v337 = vpack.c.bf16 %v306, %v305
      %v338 = vpack.c.bf16 %v308, %v307
      %v339 = vpack.c.bf16 %v310, %v309
      %v340 = vpack.c.bf16 %v312, %v311
      %v341 = vpack.c.bf16 %v314, %v313
      %v342 = vpack.c.bf16 %v316, %v315
      %v343 = vpack.c.bf16 %v318, %v317
      %v344 = vpack.c.bf16 %v320, %v319
      %v345 = vpack.c.bf16 %v322, %v321
      %v346 = vpack.c.bf16 %v324, %v323
      %v347 = vpack.c.bf16 %v326, %v325
      %v348 = vpack.c.bf16 %v328, %v327
      %v349 = vpack.c.bf16 %v330, %v329
      %v350 = vpack.c.bf16 %v332, %v331
      %v351 = vpack.c.bf16 %v334, %v333
      %v352 = vpack.c.bf16 %v336, %v335
      %353 = vst.msk [vmem:[#allocation4] sm:$0xff] %vm199, %v337
      %354 = vst.msk [vmem:[#allocation4 + $0x8] sm:$0xff] %vm199, %v338
      %355 = vst.msk [vmem:[#allocation4 + $0x10] sm:$0xff] %vm199, %v339
      %356 = vst.msk [vmem:[#allocation4 + $0x18] sm:$0xff] %vm199, %v340
      %357 = vst.msk [vmem:[#allocation4 + $0x20] sm:$0xff] %vm199, %v341
      %358 = vst.msk [vmem:[#allocation4 + $0x28] sm:$0xff] %vm199, %v342
      %359 = vst.msk [vmem:[#allocation4 + $0x30] sm:$0xff] %vm199, %v343
      %360 = vst.msk [vmem:[#allocation4 + $0x38] sm:$0xff] %vm199, %v344
      %361 = vst.msk [vmem:[#allocation4 + $0x40] sm:$0xff] %vm199, %v345
      %362 = vst.msk [vmem:[#allocation4 + $0x48] sm:$0xff] %vm199, %v346
      %363 = vst.msk [vmem:[#allocation4 + $0x50] sm:$0xff] %vm199, %v347
      %364 = vst.msk [vmem:[#allocation4 + $0x58] sm:$0xff] %vm199, %v348
      %365 = vst.msk [vmem:[#allocation4 + $0x60] sm:$0xff] %vm199, %v349
      %366 = vst.msk [vmem:[#allocation4 + $0x68] sm:$0xff] %vm199, %v350
      %367 = vst.msk [vmem:[#allocation4 + $0x70] sm:$0xff] %vm199, %v351
      %368 = vst.msk [vmem:[#allocation4 + $0x78] sm:$0xff] %vm199, %v352
      %v369 = vld [vmem:[#allocation2 + $0x1] sm:$0xff]
      %v370 = vld [vmem:[#allocation2 + $0x9] sm:$0xff]
      %v371 = vld [vmem:[#allocation2 + $0x19] sm:$0xff]
      %v372 = vld [vmem:[#allocation2 + $0x21] sm:$0xff]
      %v373 = vld [vmem:[#allocation2 + $0x31] sm:$0xff]
      %v374 = vld [vmem:[#allocation2 + $0x39] sm:$0xff]
      %v375 = vld [vmem:[#allocation2 + $0x49] sm:$0xff]
      %v376 = vld [vmem:[#allocation2 + $0x51] sm:$0xff]
      %v377 = vld [vmem:[#allocation2 + $0x61] sm:$0xff]
      %v378 = vld [vmem:[#allocation2 + $0x69] sm:$0xff]
      %v379 = vld [vmem:[#allocation2 + $0x79] sm:$0xff]
      %v380 = vld [vmem:[#allocation2 + $0x81] sm:$0xff]
      %v381 = vld [vmem:[#allocation2 + $0x91] sm:$0xff]
      %v382 = vld [vmem:[#allocation2 + $0x99] sm:$0xff]
      %v383 = vld [vmem:[#allocation2 + $0xa9] sm:$0xff]
      %v384 = vld [vmem:[#allocation2 + $0xb1] sm:$0xff]
      %v385 = vld [vmem:[#allocation2 + $0xc1] sm:$0xff]
      %v386 = vld [vmem:[#allocation2 + $0xc9] sm:$0xff]
      %v387 = vld [vmem:[#allocation2 + $0xd9] sm:$0xff]
      %v388 = vld [vmem:[#allocation2 + $0xe1] sm:$0xff]
      %v389 = vld [vmem:[#allocation2 + $0xf1] sm:$0xff]
      %v390 = vld [vmem:[#allocation2 + $0xf9] sm:$0xff]
      %v391 = vld [vmem:[#allocation2 + $0x109] sm:$0xff]
      %v392 = vld [vmem:[#allocation2 + $0x111] sm:$0xff]
      %v393 = vld [vmem:[#allocation2 + $0x121] sm:$0xff]
      %v394 = vld [vmem:[#allocation2 + $0x129] sm:$0xff]
      %v395 = vld [vmem:[#allocation2 + $0x139] sm:$0xff]
      %v396 = vld [vmem:[#allocation2 + $0x141] sm:$0xff]
      %v397 = vld [vmem:[#allocation2 + $0x151] sm:$0xff]
      %v398 = vld [vmem:[#allocation2 + $0x159] sm:$0xff]
      %v399 = vld [vmem:[#allocation2 + $0x169] sm:$0xff]
      %v400 = vld [vmem:[#allocation2 + $0x171] sm:$0xff]
      %v401 = vpack.c.bf16 %v370, %v369
      %v402 = vpack.c.bf16 %v372, %v371
      %v403 = vpack.c.bf16 %v374, %v373
      %v404 = vpack.c.bf16 %v376, %v375
      %v405 = vpack.c.bf16 %v378, %v377
      %v406 = vpack.c.bf16 %v380, %v379
      %v407 = vpack.c.bf16 %v382, %v381
      %v408 = vpack.c.bf16 %v384, %v383
      %v409 = vpack.c.bf16 %v386, %v385
      %v410 = vpack.c.bf16 %v388, %v387
      %v411 = vpack.c.bf16 %v390, %v389
      %v412 = vpack.c.bf16 %v392, %v391
      %v413 = vpack.c.bf16 %v394, %v393
      %v414 = vpack.c.bf16 %v396, %v395
      %v415 = vpack.c.bf16 %v398, %v397
      %v416 = vpack.c.bf16 %v400, %v399
      %433 = vrot.lane.b32.xlu0 %v401, 4
      %v434 = vpop.permute.xlu0 %433
      %435 = vrot.lane.b32.xlu0 %v402, 4
      %v436 = vpop.permute.xlu0 %435
      %437 = vrot.lane.b32.xlu0 %v403, 4
      %v438 = vpop.permute.xlu0 %437
      %439 = vrot.lane.b32.xlu0 %v404, 4
      %v440 = vpop.permute.xlu0 %439
      %441 = vrot.lane.b32.xlu0 %v405, 4
      %v442 = vpop.permute.xlu0 %441
      %443 = vrot.lane.b32.xlu0 %v406, 4
      %v444 = vpop.permute.xlu0 %443
      %445 = vrot.lane.b32.xlu0 %v407, 4
      %v446 = vpop.permute.xlu0 %445
      %447 = vrot.lane.b32.xlu0 %v408, 4
      %v448 = vpop.permute.xlu0 %447
      %449 = vrot.lane.b32.xlu0 %v409, 4
      %v450 = vpop.permute.xlu0 %449
      %451 = vrot.lane.b32.xlu0 %v410, 4
      %v452 = vpop.permute.xlu0 %451
      %453 = vrot.lane.b32.xlu0 %v411, 4
      %v454 = vpop.permute.xlu0 %453
      %455 = vrot.lane.b32.xlu0 %v412, 4
      %v456 = vpop.permute.xlu0 %455
      %457 = vrot.lane.b32.xlu0 %v413, 4
      %v458 = vpop.permute.xlu0 %457
      %459 = vrot.lane.b32.xlu0 %v414, 4
      %v460 = vpop.permute.xlu0 %459
      %461 = vrot.lane.b32.xlu0 %v415, 4
      %v462 = vpop.permute.xlu0 %461
      %463 = vrot.lane.b32.xlu0 %v416, 4
      %v464 = vpop.permute.xlu0 %463
      %vm481 = vcmask 64544
      %482 = vst.msk [vmem:[#allocation4] sm:$0xff] %vm481, %v434
      %483 = vst.msk [vmem:[#allocation4 + $0x8] sm:$0xff] %vm481, %v436
      %484 = vst.msk [vmem:[#allocation4 + $0x10] sm:$0xff] %vm481, %v438
      %485 = vst.msk [vmem:[#allocation4 + $0x18] sm:$0xff] %vm481, %v440
      %486 = vst.msk [vmem:[#allocation4 + $0x20] sm:$0xff] %vm481, %v442
      %487 = vst.msk [vmem:[#allocation4 + $0x28] sm:$0xff] %vm481, %v444
      %488 = vst.msk [vmem:[#allocation4 + $0x30] sm:$0xff] %vm481, %v446
      %489 = vst.msk [vmem:[#allocation4 + $0x38] sm:$0xff] %vm481, %v448
      %490 = vst.msk [vmem:[#allocation4 + $0x40] sm:$0xff] %vm481, %v450
      %491 = vst.msk [vmem:[#allocation4 + $0x48] sm:$0xff] %vm481, %v452
      %492 = vst.msk [vmem:[#allocation4 + $0x50] sm:$0xff] %vm481, %v454
      %493 = vst.msk [vmem:[#allocation4 + $0x58] sm:$0xff] %vm481, %v456
      %494 = vst.msk [vmem:[#allocation4 + $0x60] sm:$0xff] %vm481, %v458
      %495 = vst.msk [vmem:[#allocation4 + $0x68] sm:$0xff] %vm481, %v460
      %496 = vst.msk [vmem:[#allocation4 + $0x70] sm:$0xff] %vm481, %v462
      %497 = vst.msk [vmem:[#allocation4 + $0x78] sm:$0xff] %vm481, %v464
      %v498 = vld [vmem:[#allocation2 + $0x2] sm:$0xff]
      %v499 = vld [vmem:[#allocation2 + $0xa] sm:$0xff]
      %v500 = vld [vmem:[#allocation2 + $0x1a] sm:$0xff]
      %v501 = vld [vmem:[#allocation2 + $0x22] sm:$0xff]
      %v502 = vld [vmem:[#allocation2 + $0x32] sm:$0xff]
      %v503 = vld [vmem:[#allocation2 + $0x3a] sm:$0xff]
      %v504 = vld [vmem:[#allocation2 + $0x4a] sm:$0xff]
      %v505 = vld [vmem:[#allocation2 + $0x52] sm:$0xff]
      %v506 = vld [vmem:[#allocation2 + $0x62] sm:$0xff]
      %v507 = vld [vmem:[#allocation2 + $0x6a] sm:$0xff]
      %v508 = vld [vmem:[#allocation2 + $0x7a] sm:$0xff]
      %v509 = vld [vmem:[#allocation2 + $0x82] sm:$0xff]
      %v510 = vld [vmem:[#allocation2 + $0x92] sm:$0xff]
      %v511 = vld [vmem:[#allocation2 + $0x9a] sm:$0xff]
      %v512 = vld [vmem:[#allocation2 + $0xaa] sm:$0xff]
      %v513 = vld [vmem:[#allocation2 + $0xb2] sm:$0xff]
      %v514 = vld [vmem:[#allocation2 + $0xc2] sm:$0xff]
      %v515 = vld [vmem:[#allocation2 + $0xca] sm:$0xff]
      %v516 = vld [vmem:[#allocation2 + $0xda] sm:$0xff]
      %v517 = vld [vmem:[#allocation2 + $0xe2] sm:$0xff]
      %v518 = vld [vmem:[#allocation2 + $0xf2] sm:$0xff]
      %v519 = vld [vmem:[#allocation2 + $0xfa] sm:$0xff]
      %v520 = vld [vmem:[#allocation2 + $0x10a] sm:$0xff]
      %v521 = vld [vmem:[#allocation2 + $0x112] sm:$0xff]
      %v522 = vld [vmem:[#allocation2 + $0x122] sm:$0xff]
      %v523 = vld [vmem:[#allocation2 + $0x12a] sm:$0xff]
      %v524 = vld [vmem:[#allocation2 + $0x13a] sm:$0xff]
      %v525 = vld [vmem:[#allocation2 + $0x142] sm:$0xff]
      %v526 = vld [vmem:[#allocation2 + $0x152] sm:$0xff]
      %v527 = vld [vmem:[#allocation2 + $0x15a] sm:$0xff]
      %v528 = vld [vmem:[#allocation2 + $0x16a] sm:$0xff]
      %v529 = vld [vmem:[#allocation2 + $0x172] sm:$0xff]
      %v530 = vpack.c.bf16 %v499, %v498
      %v531 = vpack.c.bf16 %v501, %v500
      %v532 = vpack.c.bf16 %v503, %v502
      %v533 = vpack.c.bf16 %v505, %v504
      %v534 = vpack.c.bf16 %v507, %v506
      %v535 = vpack.c.bf16 %v509, %v508
      %v536 = vpack.c.bf16 %v511, %v510
      %v537 = vpack.c.bf16 %v513, %v512
      %v538 = vpack.c.bf16 %v515, %v514
      %v539 = vpack.c.bf16 %v517, %v516
      %v540 = vpack.c.bf16 %v519, %v518
      %v541 = vpack.c.bf16 %v521, %v520
      %v542 = vpack.c.bf16 %v523, %v522
      %v543 = vpack.c.bf16 %v525, %v524
      %v544 = vpack.c.bf16 %v527, %v526
      %v545 = vpack.c.bf16 %v529, %v528
      %562 = vrot.lane.b32.xlu0 %v530, 8
      %v563 = vpop.permute.xlu0 %562
      %564 = vrot.lane.b32.xlu0 %v531, 8
      %v565 = vpop.permute.xlu0 %564
      %566 = vrot.lane.b32.xlu0 %v532, 8
      %v567 = vpop.permute.xlu0 %566
      %568 = vrot.lane.b32.xlu0 %v533, 8
      %v569 = vpop.permute.xlu0 %568
      %570 = vrot.lane.b32.xlu0 %v534, 8
      %v571 = vpop.permute.xlu0 %570
      %572 = vrot.lane.b32.xlu0 %v535, 8
      %v573 = vpop.permute.xlu0 %572
      %574 = vrot.lane.b32.xlu0 %v536, 8
      %v575 = vpop.permute.xlu0 %574
      %576 = vrot.lane.b32.xlu0 %v537, 8
      %v577 = vpop.permute.xlu0 %576
      %578 = vrot.lane.b32.xlu0 %v538, 8
      %v579 = vpop.permute.xlu0 %578
      %580 = vrot.lane.b32.xlu0 %v539, 8
      %v581 = vpop.permute.xlu0 %580
      %582 = vrot.lane.b32.xlu0 %v540, 8
      %v583 = vpop.permute.xlu0 %582
      %584 = vrot.lane.b32.xlu0 %v541, 8
      %v585 = vpop.permute.xlu0 %584
      %586 = vrot.lane.b32.xlu0 %v542, 8
      %v587 = vpop.permute.xlu0 %586
      %588 = vrot.lane.b32.xlu0 %v543, 8
      %v589 = vpop.permute.xlu0 %588
      %590 = vrot.lane.b32.xlu0 %v544, 8
      %v591 = vpop.permute.xlu0 %590
      %592 = vrot.lane.b32.xlu0 %v545, 8
      %v593 = vpop.permute.xlu0 %592
      %vm610 = vcmask 97344
      %611 = vst.msk [vmem:[#allocation4] sm:$0xff] %vm610, %v563
      %612 = vst.msk [vmem:[#allocation4 + $0x8] sm:$0xff] %vm610, %v565
      %613 = vst.msk [vmem:[#allocation4 + $0x10] sm:$0xff] %vm610, %v567
      %614 = vst.msk [vmem:[#allocation4 + $0x18] sm:$0xff] %vm610, %v569
      %615 = vst.msk [vmem:[#allocation4 + $0x20] sm:$0xff] %vm610, %v571
      %616 = vst.msk [vmem:[#allocation4 + $0x28] sm:$0xff] %vm610, %v573
      %617 = vst.msk [vmem:[#allocation4 + $0x30] sm:$0xff] %vm610, %v575
      %618 = vst.msk [vmem:[#allocation4 + $0x38] sm:$0xff] %vm610, %v577
      %619 = vst.msk [vmem:[#allocation4 + $0x40] sm:$0xff] %vm610, %v579
      %620 = vst.msk [vmem:[#allocation4 + $0x48] sm:$0xff] %vm610, %v581
      %621 = vst.msk [vmem:[#allocation4 + $0x50] sm:$0xff] %vm610, %v583
      %622 = vst.msk [vmem:[#allocation4 + $0x58] sm:$0xff] %vm610, %v585
      %623 = vst.msk [vmem:[#allocation4 + $0x60] sm:$0xff] %vm610, %v587
      %624 = vst.msk [vmem:[#allocation4 + $0x68] sm:$0xff] %vm610, %v589
      %625 = vst.msk [vmem:[#allocation4 + $0x70] sm:$0xff] %vm610, %v591
      %626 = vst.msk [vmem:[#allocation4 + $0x78] sm:$0xff] %vm610, %v593
      %v627 = vld [vmem:[%s207] sm:$0xff]
      %v628 = vld [vmem:[%s207 + $0x8] sm:$0xff]
      %v629 = vld [vmem:[%s207 + $0x18] sm:$0xff]
      %v630 = vld [vmem:[%s207 + $0x20] sm:$0xff]
      %v631 = vld [vmem:[%s207 + $0x30] sm:$0xff]
      %v632 = vld [vmem:[%s207 + $0x38] sm:$0xff]
      %v633 = vld [vmem:[%s207 + $0x48] sm:$0xff]
      %v634 = vld [vmem:[%s207 + $0x50] sm:$0xff]
      %v635 = vld [vmem:[%s207 + $0x60] sm:$0xff]
      %v636 = vld [vmem:[%s207 + $0x68] sm:$0xff]
      %v637 = vld [vmem:[%s207 + $0x78] sm:$0xff]
      %v638 = vld [vmem:[%s207 + $0x80] sm:$0xff]
      %v639 = vld [vmem:[%s207 + $0x90] sm:$0xff]
      %v640 = vld [vmem:[%s207 + $0x98] sm:$0xff]
      %v641 = vld [vmem:[%s207 + $0xa8] sm:$0xff]
      %v642 = vld [vmem:[%s207 + $0xb0] sm:$0xff]
      %v643 = vld [vmem:[%s207 + $0xc0] sm:$0xff]
      %v644 = vld [vmem:[%s207 + $0xc8] sm:$0xff]
      %v645 = vld [vmem:[%s207 + $0xd8] sm:$0xff]
      %v646 = vld [vmem:[%s207 + $0xe0] sm:$0xff]
      %v647 = vld [vmem:[%s207 + $0xf0] sm:$0xff]
      %v648 = vld [vmem:[%s207 + $0xf8] sm:$0xff]
      %v649 = vld [vmem:[%s207 + $0x108] sm:$0xff]
      %v650 = vld [vmem:[%s207 + $0x110] sm:$0xff]
      %v651 = vld [vmem:[%s207 + $0x120] sm:$0xff]
      %v652 = vld [vmem:[%s207 + $0x128] sm:$0xff]
      %v653 = vld [vmem:[%s207 + $0x138] sm:$0xff]
      %v654 = vld [vmem:[%s207 + $0x140] sm:$0xff]
      %v655 = vld [vmem:[%s207 + $0x150] sm:$0xff]
      %v656 = vld [vmem:[%s207 + $0x158] sm:$0xff]
      %v657 = vld [vmem:[%s207 + $0x168] sm:$0xff]
      %v658 = vld [vmem:[%s207 + $0x170] sm:$0xff]
      %v659 = vpack.c.bf16 %v628, %v627
      %v660 = vpack.c.bf16 %v630, %v629
      %v661 = vpack.c.bf16 %v632, %v631
      %v662 = vpack.c.bf16 %v634, %v633
      %v663 = vpack.c.bf16 %v636, %v635
      %v664 = vpack.c.bf16 %v638, %v637
      %v665 = vpack.c.bf16 %v640, %v639
      %v666 = vpack.c.bf16 %v642, %v641
      %v667 = vpack.c.bf16 %v644, %v643
      %v668 = vpack.c.bf16 %v646, %v645
      %v669 = vpack.c.bf16 %v648, %v647
      %v670 = vpack.c.bf16 %v650, %v649
      %v671 = vpack.c.bf16 %v652, %v651
      %v672 = vpack.c.bf16 %v654, %v653
      %v673 = vpack.c.bf16 %v656, %v655
      %v674 = vpack.c.bf16 %v658, %v657
      %691 = vrot.lane.b32.xlu0 %v659, 12
      %v692 = vpop.permute.xlu0 %691
      %693 = vrot.lane.b32.xlu0 %v660, 12
      %v694 = vpop.permute.xlu0 %693
      %695 = vrot.lane.b32.xlu0 %v661, 12
      %v696 = vpop.permute.xlu0 %695
      %697 = vrot.lane.b32.xlu0 %v662, 12
      %v698 = vpop.permute.xlu0 %697
      %699 = vrot.lane.b32.xlu0 %v663, 12
      %v700 = vpop.permute.xlu0 %699
      %701 = vrot.lane.b32.xlu0 %v664, 12
      %v702 = vpop.permute.xlu0 %701
      %703 = vrot.lane.b32.xlu0 %v665, 12
      %v704 = vpop.permute.xlu0 %703
      %705 = vrot.lane.b32.xlu0 %v666, 12
      %v706 = vpop.permute.xlu0 %705
      %707 = vrot.lane.b32.xlu0 %v667, 12
      %v708 = vpop.permute.xlu0 %707
      %709 = vrot.lane.b32.xlu0 %v668, 12
      %v710 = vpop.permute.xlu0 %709
      %711 = vrot.lane.b32.xlu0 %v669, 12
      %v712 = vpop.permute.xlu0 %711
      %713 = vrot.lane.b32.xlu0 %v670, 12
      %v714 = vpop.permute.xlu0 %713
      %715 = vrot.lane.b32.xlu0 %v671, 12
      %v716 = vpop.permute.xlu0 %715
      %717 = vrot.lane.b32.xlu0 %v672, 12
      %v718 = vpop.permute.xlu0 %717
      %719 = vrot.lane.b32.xlu0 %v673, 12
      %v720 = vpop.permute.xlu0 %719
      %721 = vrot.lane.b32.xlu0 %v674, 12
      %v722 = vpop.permute.xlu0 %721
      %vm739 = vcmask 130144
      %740 = vst.msk [vmem:[#allocation4] sm:$0xff] %vm739, %v692
      %741 = vst.msk [vmem:[#allocation4 + $0x8] sm:$0xff] %vm739, %v694
      %742 = vst.msk [vmem:[#allocation4 + $0x10] sm:$0xff] %vm739, %v696
      %743 = vst.msk [vmem:[#allocation4 + $0x18] sm:$0xff] %vm739, %v698
      %744 = vst.msk [vmem:[#allocation4 + $0x20] sm:$0xff] %vm739, %v700
      %745 = vst.msk [vmem:[#allocation4 + $0x28] sm:$0xff] %vm739, %v702
      %746 = vst.msk [vmem:[#allocation4 + $0x30] sm:$0xff] %vm739, %v704
      %747 = vst.msk [vmem:[#allocation4 + $0x38] sm:$0xff] %vm739, %v706
      %748 = vst.msk [vmem:[#allocation4 + $0x40] sm:$0xff] %vm739, %v708
      %749 = vst.msk [vmem:[#allocation4 + $0x48] sm:$0xff] %vm739, %v710
      %750 = vst.msk [vmem:[#allocation4 + $0x50] sm:$0xff] %vm739, %v712
      %751 = vst.msk [vmem:[#allocation4 + $0x58] sm:$0xff] %vm739, %v714
      %752 = vst.msk [vmem:[#allocation4 + $0x60] sm:$0xff] %vm739, %v716
      %753 = vst.msk [vmem:[#allocation4 + $0x68] sm:$0xff] %vm739, %v718
      %754 = vst.msk [vmem:[#allocation4 + $0x70] sm:$0xff] %vm739, %v720
      %755 = vst.msk [vmem:[#allocation4 + $0x78] sm:$0xff] %vm739, %v722
      %v756 = vld [vmem:[%s207 + $0x1] sm:$0xff]
      %v757 = vld [vmem:[%s207 + $0x9] sm:$0xff]
      %v758 = vld [vmem:[%s207 + $0x19] sm:$0xff]
      %v759 = vld [vmem:[%s207 + $0x21] sm:$0xff]
      %v760 = vld [vmem:[%s207 + $0x31] sm:$0xff]
      %v761 = vld [vmem:[%s207 + $0x39] sm:$0xff]
      %v762 = vld [vmem:[%s207 + $0x49] sm:$0xff]
      %v763 = vld [vmem:[%s207 + $0x51] sm:$0xff]
      %v764 = vld [vmem:[%s207 + $0x61] sm:$0xff]
      %v765 = vld [vmem:[%s207 + $0x69] sm:$0xff]
      %v766 = vld [vmem:[%s207 + $0x79] sm:$0xff]
      %v767 = vld [vmem:[%s207 + $0x81] sm:$0xff]
      %v768 = vld [vmem:[%s207 + $0x91] sm:$0xff]
      %v769 = vld [vmem:[%s207 + $0x99] sm:$0xff]
      %v770 = vld [vmem:[%s207 + $0xa9] sm:$0xff]
      %v771 = vld [vmem:[%s207 + $0xb1] sm:$0xff]
      %v772 = vld [vmem:[%s207 + $0xc1] sm:$0xff]
      %v773 = vld [vmem:[%s207 + $0xc9] sm:$0xff]
      %v774 = vld [vmem:[%s207 + $0xd9] sm:$0xff]
      %v775 = vld [vmem:[%s207 + $0xe1] sm:$0xff]
      %v776 = vld [vmem:[%s207 + $0xf1] sm:$0xff]
      %v777 = vld [vmem:[%s207 + $0xf9] sm:$0xff]
      %v778 = vld [vmem:[%s207 + $0x109] sm:$0xff]
      %v779 = vld [vmem:[%s207 + $0x111] sm:$0xff]
      %v780 = vld [vmem:[%s207 + $0x121] sm:$0xff]
      %v781 = vld [vmem:[%s207 + $0x129] sm:$0xff]
      %v782 = vld [vmem:[%s207 + $0x139] sm:$0xff]
      %v783 = vld [vmem:[%s207 + $0x141] sm:$0xff]
      %v784 = vld [vmem:[%s207 + $0x151] sm:$0xff]
      %v785 = vld [vmem:[%s207 + $0x159] sm:$0xff]
      %v786 = vld [vmem:[%s207 + $0x169] sm:$0xff]
      %v787 = vld [vmem:[%s207 + $0x171] sm:$0xff]
      %v788 = vpack.c.bf16 %v757, %v756
      %v789 = vpack.c.bf16 %v759, %v758
      %v790 = vpack.c.bf16 %v761, %v760
      %v791 = vpack.c.bf16 %v763, %v762
      %v792 = vpack.c.bf16 %v765, %v764
      %v793 = vpack.c.bf16 %v767, %v766
      %v794 = vpack.c.bf16 %v769, %v768
      %v795 = vpack.c.bf16 %v771, %v770
      %v796 = vpack.c.bf16 %v773, %v772
      %v797 = vpack.c.bf16 %v775, %v774
      %v798 = vpack.c.bf16 %v777, %v776
      %v799 = vpack.c.bf16 %v779, %v778
      %v800 = vpack.c.bf16 %v781, %v780
      %v801 = vpack.c.bf16 %v783, %v782
      %v802 = vpack.c.bf16 %v785, %v784
      %v803 = vpack.c.bf16 %v787, %v786
      %820 = vrot.lane.b32.xlu0 %v788, 16
      %v821 = vpop.permute.xlu0 %820
      %822 = vrot.lane.b32.xlu0 %v789, 16
      %v823 = vpop.permute.xlu0 %822
      %824 = vrot.lane.b32.xlu0 %v790, 16
      %v825 = vpop.permute.xlu0 %824
      %826 = vrot.lane.b32.xlu0 %v791, 16
      %v827 = vpop.permute.xlu0 %826
      %828 = vrot.lane.b32.xlu0 %v792, 16
      %v829 = vpop.permute.xlu0 %828
      %830 = vrot.lane.b32.xlu0 %v793, 16
      %v831 = vpop.permute.xlu0 %830
      %832 = vrot.lane.b32.xlu0 %v794, 16
      %v833 = vpop.permute.xlu0 %832
      %834 = vrot.lane.b32.xlu0 %v795, 16
      %v835 = vpop.permute.xlu0 %834
      %836 = vrot.lane.b32.xlu0 %v796, 16
      %v837 = vpop.permute.xlu0 %836
      %838 = vrot.lane.b32.xlu0 %v797, 16
      %v839 = vpop.permute.xlu0 %838
      %840 = vrot.lane.b32.xlu0 %v798, 16
      %v841 = vpop.permute.xlu0 %840
      %842 = vrot.lane.b32.xlu0 %v799, 16
      %v843 = vpop.permute.xlu0 %842
      %844 = vrot.lane.b32.xlu0 %v800, 16
      %v845 = vpop.permute.xlu0 %844
      %846 = vrot.lane.b32.xlu0 %v801, 16
      %v847 = vpop.permute.xlu0 %846
      %848 = vrot.lane.b32.xlu0 %v802, 16
      %v849 = vpop.permute.xlu0 %848
      %850 = vrot.lane.b32.xlu0 %v803, 16
      %v851 = vpop.permute.xlu0 %850
      %vm868 = vcmask 162944
      %869 = vst.msk [vmem:[#allocation4] sm:$0xff] %vm868, %v821
      %870 = vst.msk [vmem:[#allocation4 + $0x8] sm:$0xff] %vm868, %v823
      %871 = vst.msk [vmem:[#allocation4 + $0x10] sm:$0xff] %vm868, %v825
      %872 = vst.msk [vmem:[#allocation4 + $0x18] sm:$0xff] %vm868, %v827
      %873 = vst.msk [vmem:[#allocation4 + $0x20] sm:$0xff] %vm868, %v829
      %874 = vst.msk [vmem:[#allocation4 + $0x28] sm:$0xff] %vm868, %v831
      %875 = vst.msk [vmem:[#allocation4 + $0x30] sm:$0xff] %vm868, %v833
      %876 = vst.msk [vmem:[#allocation4 + $0x38] sm:$0xff] %vm868, %v835
      %877 = vst.msk [vmem:[#allocation4 + $0x40] sm:$0xff] %vm868, %v837
      %878 = vst.msk [vmem:[#allocation4 + $0x48] sm:$0xff] %vm868, %v839
      %879 = vst.msk [vmem:[#allocation4 + $0x50] sm:$0xff] %vm868, %v841
      %880 = vst.msk [vmem:[#allocation4 + $0x58] sm:$0xff] %vm868, %v843
      %881 = vst.msk [vmem:[#allocation4 + $0x60] sm:$0xff] %vm868, %v845
      %882 = vst.msk [vmem:[#allocation4 + $0x68] sm:$0xff] %vm868, %v847
      %883 = vst.msk [vmem:[#allocation4 + $0x70] sm:$0xff] %vm868, %v849
      %884 = vst.msk [vmem:[#allocation4 + $0x78] sm:$0xff] %vm868, %v851
      %v885 = vld [vmem:[%s207 + $0x2] sm:$0xff]
      %v886 = vld [vmem:[%s207 + $0xa] sm:$0xff]
      %v887 = vld [vmem:[%s207 + $0x1a] sm:$0xff]
      %v888 = vld [vmem:[%s207 + $0x22] sm:$0xff]
      %v889 = vld [vmem:[%s207 + $0x32] sm:$0xff]
      %v890 = vld [vmem:[%s207 + $0x3a] sm:$0xff]
      %v891 = vld [vmem:[%s207 + $0x4a] sm:$0xff]
      %v892 = vld [vmem:[%s207 + $0x52] sm:$0xff]
      %v893 = vld [vmem:[%s207 + $0x62] sm:$0xff]
      %v894 = vld [vmem:[%s207 + $0x6a] sm:$0xff]
      %v895 = vld [vmem:[%s207 + $0x7a] sm:$0xff]
      %v896 = vld [vmem:[%s207 + $0x82] sm:$0xff]
      %v897 = vld [vmem:[%s207 + $0x92] sm:$0xff]
      %v898 = vld [vmem:[%s207 + $0x9a] sm:$0xff]
      %v899 = vld [vmem:[%s207 + $0xaa] sm:$0xff]
      %v900 = vld [vmem:[%s207 + $0xb2] sm:$0xff]
      %v901 = vld [vmem:[%s207 + $0xc2] sm:$0xff]
      %v902 = vld [vmem:[%s207 + $0xca] sm:$0xff]
      %v903 = vld [vmem:[%s207 + $0xda] sm:$0xff]
      %v904 = vld [vmem:[%s207 + $0xe2] sm:$0xff]
      %v905 = vld [vmem:[%s207 + $0xf2] sm:$0xff]
      %v906 = vld [vmem:[%s207 + $0xfa] sm:$0xff]
      %v907 = vld [vmem:[%s207 + $0x10a] sm:$0xff]
      %v908 = vld [vmem:[%s207 + $0x112] sm:$0xff]
      %v909 = vld [vmem:[%s207 + $0x122] sm:$0xff]
      %v910 = vld [vmem:[%s207 + $0x12a] sm:$0xff]
      %v911 = vld [vmem:[%s207 + $0x13a] sm:$0xff]
      %v912 = vld [vmem:[%s207 + $0x142] sm:$0xff]
      %v913 = vld [vmem:[%s207 + $0x152] sm:$0xff]
      %v914 = vld [vmem:[%s207 + $0x15a] sm:$0xff]
      %v915 = vld [vmem:[%s207 + $0x16a] sm:$0xff]
      %v916 = vld [vmem:[%s207 + $0x172] sm:$0xff]
      %v917 = vpack.c.bf16 %v886, %v885
      %v918 = vpack.c.bf16 %v888, %v887
      %v919 = vpack.c.bf16 %v890, %v889
      %v920 = vpack.c.bf16 %v892, %v891
      %v921 = vpack.c.bf16 %v894, %v893
      %v922 = vpack.c.bf16 %v896, %v895
      %v923 = vpack.c.bf16 %v898, %v897
      %v924 = vpack.c.bf16 %v900, %v899
      %v925 = vpack.c.bf16 %v902, %v901
      %v926 = vpack.c.bf16 %v904, %v903
      %v927 = vpack.c.bf16 %v906, %v905
      %v928 = vpack.c.bf16 %v908, %v907
      %v929 = vpack.c.bf16 %v910, %v909
      %v930 = vpack.c.bf16 %v912, %v911
      %v931 = vpack.c.bf16 %v914, %v913
      %v932 = vpack.c.bf16 %v916, %v915
      %949 = vrot.lane.b32.xlu0 %v917, 20
      %v950 = vpop.permute.xlu0 %949
      %951 = vrot.lane.b32.xlu0 %v918, 20
      %v952 = vpop.permute.xlu0 %951
      %953 = vrot.lane.b32.xlu0 %v919, 20
      %v954 = vpop.permute.xlu0 %953
      %955 = vrot.lane.b32.xlu0 %v920, 20
      %v956 = vpop.permute.xlu0 %955
      %957 = vrot.lane.b32.xlu0 %v921, 20
      %v958 = vpop.permute.xlu0 %957
      %959 = vrot.lane.b32.xlu0 %v922, 20
      %v960 = vpop.permute.xlu0 %959
      %961 = vrot.lane.b32.xlu0 %v923, 20
      %v962 = vpop.permute.xlu0 %961
      %963 = vrot.lane.b32.xlu0 %v924, 20
      %v964 = vpop.permute.xlu0 %963
      %965 = vrot.lane.b32.xlu0 %v925, 20
      %v966 = vpop.permute.xlu0 %965
      %967 = vrot.lane.b32.xlu0 %v926, 20
      %v968 = vpop.permute.xlu0 %967
      %969 = vrot.lane.b32.xlu0 %v927, 20
      %v970 = vpop.permute.xlu0 %969
      %971 = vrot.lane.b32.xlu0 %v928, 20
      %v972 = vpop.permute.xlu0 %971
      %973 = vrot.lane.b32.xlu0 %v929, 20
      %v974 = vpop.permute.xlu0 %973
      %975 = vrot.lane.b32.xlu0 %v930, 20
      %v976 = vpop.permute.xlu0 %975
      %977 = vrot.lane.b32.xlu0 %v931, 20
      %v978 = vpop.permute.xlu0 %977
      %979 = vrot.lane.b32.xlu0 %v932, 20
      %v980 = vpop.permute.xlu0 %979
      %vm997 = vcmask 195744
      %998 = vst.msk [vmem:[#allocation4] sm:$0xff] %vm997, %v950
      %999 = vst.msk [vmem:[#allocation4 + $0x8] sm:$0xff] %vm997, %v952
      %1000 = vst.msk [vmem:[#allocation4 + $0x10] sm:$0xff] %vm997, %v954
      %1001 = vst.msk [vmem:[#allocation4 + $0x18] sm:$0xff] %vm997, %v956
      %1002 = vst.msk [vmem:[#allocation4 + $0x20] sm:$0xff] %vm997, %v958
      %1003 = vst.msk [vmem:[#allocation4 + $0x28] sm:$0xff] %vm997, %v960
      %1004 = vst.msk [vmem:[#allocation4 + $0x30] sm:$0xff] %vm997, %v962
      %1005 = vst.msk [vmem:[#allocation4 + $0x38] sm:$0xff] %vm997, %v964
      %1006 = vst.msk [vmem:[#allocation4 + $0x40] sm:$0xff] %vm997, %v966
      %1007 = vst.msk [vmem:[#allocation4 + $0x48] sm:$0xff] %vm997, %v968
      %1008 = vst.msk [vmem:[#allocation4 + $0x50] sm:$0xff] %vm997, %v970
      %1009 = vst.msk [vmem:[#allocation4 + $0x58] sm:$0xff] %vm997, %v972
      %1010 = vst.msk [vmem:[#allocation4 + $0x60] sm:$0xff] %vm997, %v974
      %1011 = vst.msk [vmem:[#allocation4 + $0x68] sm:$0xff] %vm997, %v976
      %1012 = vst.msk [vmem:[#allocation4 + $0x70] sm:$0xff] %vm997, %v978
      %1013 = vst.msk [vmem:[#allocation4 + $0x78] sm:$0xff] %vm997, %v980
      %s1014 = scalar_lea.vmem [#allocation2], 48
      %v1015 = vld [vmem:[%s1014] sm:$0xff]
      %v1016 = vld [vmem:[%s1014 + $0x8] sm:$0xff]
      %v1017 = vld [vmem:[%s1014 + $0x18] sm:$0xff]
      %v1018 = vld [vmem:[%s1014 + $0x20] sm:$0xff]
      %v1019 = vld [vmem:[%s1014 + $0x30] sm:$0xff]
      %v1020 = vld [vmem:[%s1014 + $0x38] sm:$0xff]
      %v1021 = vld [vmem:[%s1014 + $0x48] sm:$0xff]
      %v1022 = vld [vmem:[%s1014 + $0x50] sm:$0xff]
      %v1023 = vld [vmem:[%s1014 + $0x60] sm:$0xff]
      %v1024 = vld [vmem:[%s1014 + $0x68] sm:$0xff]
      %v1025 = vld [vmem:[%s1014 + $0x78] sm:$0xff]
      %v1026 = vld [vmem:[%s1014 + $0x80] sm:$0xff]
      %v1027 = vld [vmem:[%s1014 + $0x90] sm:$0xff]
      %v1028 = vld [vmem:[%s1014 + $0x98] sm:$0xff]
      %v1029 = vld [vmem:[%s1014 + $0xa8] sm:$0xff]
      %v1030 = vld [vmem:[%s1014 + $0xb0] sm:$0xff]
      %v1031 = vld [vmem:[%s1014 + $0xc0] sm:$0xff]
      %v1032 = vld [vmem:[%s1014 + $0xc8] sm:$0xff]
      %v1033 = vld [vmem:[%s1014 + $0xd8] sm:$0xff]
      %v1034 = vld [vmem:[%s1014 + $0xe0] sm:$0xff]
      %v1035 = vld [vmem:[%s1014 + $0xf0] sm:$0xff]
      %v1036 = vld [vmem:[%s1014 + $0xf8] sm:$0xff]
      %v1037 = vld [vmem:[%s1014 + $0x108] sm:$0xff]
      %v1038 = vld [vmem:[%s1014 + $0x110] sm:$0xff]
      %v1039 = vld [vmem:[%s1014 + $0x120] sm:$0xff]
      %v1040 = vld [vmem:[%s1014 + $0x128] sm:$0xff]
      %v1041 = vld [vmem:[%s1014 + $0x138] sm:$0xff]
      %v1042 = vld [vmem:[%s1014 + $0x140] sm:$0xff]
      %v1043 = vld [vmem:[%s1014 + $0x150] sm:$0xff]
      %v1044 = vld [vmem:[%s1014 + $0x158] sm:$0xff]
      %v1045 = vld [vmem:[%s1014 + $0x168] sm:$0xff]
      %v1046 = vld [vmem:[%s1014 + $0x170] sm:$0xff]
      %v1047 = vpack.c.bf16 %v1016, %v1015
      %v1048 = vpack.c.bf16 %v1018, %v1017
      %v1049 = vpack.c.bf16 %v1020, %v1019
      %v1050 = vpack.c.bf16 %v1022, %v1021
      %v1051 = vpack.c.bf16 %v1024, %v1023
      %v1052 = vpack.c.bf16 %v1026, %v1025
      %v1053 = vpack.c.bf16 %v1028, %v1027
      %v1054 = vpack.c.bf16 %v1030, %v1029
      %v1055 = vpack.c.bf16 %v1032, %v1031
      %v1056 = vpack.c.bf16 %v1034, %v1033
      %v1057 = vpack.c.bf16 %v1036, %v1035
      %v1058 = vpack.c.bf16 %v1038, %v1037
      %v1059 = vpack.c.bf16 %v1040, %v1039
      %v1060 = vpack.c.bf16 %v1042, %v1041
      %v1061 = vpack.c.bf16 %v1044, %v1043
      %v1062 = vpack.c.bf16 %v1046, %v1045
      %1079 = vrot.lane.b32.xlu0 %v1047, 24
      %v1080 = vpop.permute.xlu0 %1079
      %1081 = vrot.lane.b32.xlu0 %v1048, 24
      %v1082 = vpop.permute.xlu0 %1081
      %1083 = vrot.lane.b32.xlu0 %v1049, 24
      %v1084 = vpop.permute.xlu0 %1083
      %1085 = vrot.lane.b32.xlu0 %v1050, 24
      %v1086 = vpop.permute.xlu0 %1085
      %1087 = vrot.lane.b32.xlu0 %v1051, 24
      %v1088 = vpop.permute.xlu0 %1087
      %1089 = vrot.lane.b32.xlu0 %v1052, 24
      %v1090 = vpop.permute.xlu0 %1089
      %1091 = vrot.lane.b32.xlu0 %v1053, 24
      %v1092 = vpop.permute.xlu0 %1091
      %1093 = vrot.lane.b32.xlu0 %v1054, 24
      %v1094 = vpop.permute.xlu0 %1093
      %1095 = vrot.lane.b32.xlu0 %v1055, 24
      %v1096 = vpop.permute.xlu0 %1095
      %1097 = vrot.lane.b32.xlu0 %v1056, 24
      %v1098 = vpop.permute.xlu0 %1097
      %1099 = vrot.lane.b32.xlu0 %v1057, 24
      %v1100 = vpop.permute.xlu0 %1099
      %1101 = vrot.lane.b32.xlu0 %v1058, 24
      %v1102 = vpop.permute.xlu0 %1101
      %1103 = vrot.lane.b32.xlu0 %v1059, 24
      %v1104 = vpop.permute.xlu0 %1103
      %1105 = vrot.lane.b32.xlu0 %v1060, 24
      %v1106 = vpop.permute.xlu0 %1105
      %1107 = vrot.lane.b32.xlu0 %v1061, 24
      %v1108 = vpop.permute.xlu0 %1107
      %1109 = vrot.lane.b32.xlu0 %v1062, 24
      %v1110 = vpop.permute.xlu0 %1109
      %vm1127 = vcmask 228544
      %1128 = vst.msk [vmem:[#allocation4] sm:$0xff] %vm1127, %v1080
      %1129 = vst.msk [vmem:[#allocation4 + $0x8] sm:$0xff] %vm1127, %v1082
      %1130 = vst.msk [vmem:[#allocation4 + $0x10] sm:$0xff] %vm1127, %v1084
      %1131 = vst.msk [vmem:[#allocation4 + $0x18] sm:$0xff] %vm1127, %v1086
      %1132 = vst.msk [vmem:[#allocation4 + $0x20] sm:$0xff] %vm1127, %v1088
      %1133 = vst.msk [vmem:[#allocation4 + $0x28] sm:$0xff] %vm1127, %v1090
      %1134 = vst.msk [vmem:[#allocation4 + $0x30] sm:$0xff] %vm1127, %v1092
      %1135 = vst.msk [vmem:[#allocation4 + $0x38] sm:$0xff] %vm1127, %v1094
      %1136 = vst.msk [vmem:[#allocation4 + $0x40] sm:$0xff] %vm1127, %v1096
      %1137 = vst.msk [vmem:[#allocation4 + $0x48] sm:$0xff] %vm1127, %v1098
      %1138 = vst.msk [vmem:[#allocation4 + $0x50] sm:$0xff] %vm1127, %v1100
      %1139 = vst.msk [vmem:[#allocation4 + $0x58] sm:$0xff] %vm1127, %v1102
      %1140 = vst.msk [vmem:[#allocation4 + $0x60] sm:$0xff] %vm1127, %v1104
      %1141 = vst.msk [vmem:[#allocation4 + $0x68] sm:$0xff] %vm1127, %v1106
      %1142 = vst.msk [vmem:[#allocation4 + $0x70] sm:$0xff] %vm1127, %v1108
      %1143 = vst.msk [vmem:[#allocation4 + $0x78] sm:$0xff] %vm1127, %v1110
      %v1144 = vld [vmem:[%s1014 + $0x1] sm:$0xff]
      %v1145 = vld [vmem:[%s1014 + $0x9] sm:$0xff]
      %v1146 = vld [vmem:[%s1014 + $0x19] sm:$0xff]
      %v1147 = vld [vmem:[%s1014 + $0x21] sm:$0xff]
      %v1148 = vld [vmem:[%s1014 + $0x31] sm:$0xff]
      %v1149 = vld [vmem:[%s1014 + $0x39] sm:$0xff]
      %v1150 = vld [vmem:[%s1014 + $0x49] sm:$0xff]
      %v1151 = vld [vmem:[%s1014 + $0x51] sm:$0xff]
      %v1152 = vld [vmem:[%s1014 + $0x61] sm:$0xff]
      %v1153 = vld [vmem:[%s1014 + $0x69] sm:$0xff]
      %v1154 = vld [vmem:[%s1014 + $0x79] sm:$0xff]
      %v1155 = vld [vmem:[%s1014 + $0x81] sm:$0xff]
      %v1156 = vld [vmem:[%s1014 + $0x91] sm:$0xff]
      %v1157 = vld [vmem:[%s1014 + $0x99] sm:$0xff]
      %v1158 = vld [vmem:[%s1014 + $0xa9] sm:$0xff]
      %v1159 = vld [vmem:[%s1014 + $0xb1] sm:$0xff]
      %v1160 = vld [vmem:[%s1014 + $0xc1] sm:$0xff]
      %v1161 = vld [vmem:[%s1014 + $0xc9] sm:$0xff]
      %v1162 = vld [vmem:[%s1014 + $0xd9] sm:$0xff]
      %v1163 = vld [vmem:[%s1014 + $0xe1] sm:$0xff]
      %v1164 = vld [vmem:[%s1014 + $0xf1] sm:$0xff]
      %v1165 = vld [vmem:[%s1014 + $0xf9] sm:$0xff]
      %v1166 = vld [vmem:[%s1014 + $0x109] sm:$0xff]
      %v1167 = vld [vmem:[%s1014 + $0x111] sm:$0xff]
      %v1168 = vld [vmem:[%s1014 + $0x121] sm:$0xff]
      %v1169 = vld [vmem:[%s1014 + $0x129] sm:$0xff]
      %v1170 = vld [vmem:[%s1014 + $0x139] sm:$0xff]
      %v1171 = vld [vmem:[%s1014 + $0x141] sm:$0xff]
      %v1172 = vld [vmem:[%s1014 + $0x151] sm:$0xff]
      %v1173 = vld [vmem:[%s1014 + $0x159] sm:$0xff]
      %v1174 = vld [vmem:[%s1014 + $0x169] sm:$0xff]
      %v1175 = vld [vmem:[%s1014 + $0x171] sm:$0xff]
      %v1176 = vpack.c.bf16 %v1145, %v1144
      %v1177 = vpack.c.bf16 %v1147, %v1146
      %v1178 = vpack.c.bf16 %v1149, %v1148
      %v1179 = vpack.c.bf16 %v1151, %v1150
      %v1180 = vpack.c.bf16 %v1153, %v1152
      %v1181 = vpack.c.bf16 %v1155, %v1154
      %v1182 = vpack.c.bf16 %v1157, %v1156
      %v1183 = vpack.c.bf16 %v1159, %v1158
      %v1184 = vpack.c.bf16 %v1161, %v1160
      %v1185 = vpack.c.bf16 %v1163, %v1162
      %v1186 = vpack.c.bf16 %v1165, %v1164
      %v1187 = vpack.c.bf16 %v1167, %v1166
      %v1188 = vpack.c.bf16 %v1169, %v1168
      %v1189 = vpack.c.bf16 %v1171, %v1170
      %v1190 = vpack.c.bf16 %v1173, %v1172
      %v1191 = vpack.c.bf16 %v1175, %v1174
      %1208 = vrot.lane.b32.xlu0 %v1176, 28
      %v1209 = vpop.permute.xlu0 %1208
      %1210 = vrot.lane.b32.xlu0 %v1177, 28
      %v1211 = vpop.permute.xlu0 %1210
      %1212 = vrot.lane.b32.xlu0 %v1178, 28
      %v1213 = vpop.permute.xlu0 %1212
      %1214 = vrot.lane.b32.xlu0 %v1179, 28
      %v1215 = vpop.permute.xlu0 %1214
      %1216 = vrot.lane.b32.xlu0 %v1180, 28
      %v1217 = vpop.permute.xlu0 %1216
      %1218 = vrot.lane.b32.xlu0 %v1181, 28
      %v1219 = vpop.permute.xlu0 %1218
      %1220 = vrot.lane.b32.xlu0 %v1182, 28
      %v1221 = vpop.permute.xlu0 %1220
      %1222 = vrot.lane.b32.xlu0 %v1183, 28
      %v1223 = vpop.permute.xlu0 %1222
      %1224 = vrot.lane.b32.xlu0 %v1184, 28
      %v1225 = vpop.permute.xlu0 %1224
      %1226 = vrot.lane.b32.xlu0 %v1185, 28
      %v1227 = vpop.permute.xlu0 %1226
      %1228 = vrot.lane.b32.xlu0 %v1186, 28
      %v1229 = vpop.permute.xlu0 %1228
      %1230 = vrot.lane.b32.xlu0 %v1187, 28
      %v1231 = vpop.permute.xlu0 %1230
      %1232 = vrot.lane.b32.xlu0 %v1188, 28
      %v1233 = vpop.permute.xlu0 %1232
      %1234 = vrot.lane.b32.xlu0 %v1189, 28
      %v1235 = vpop.permute.xlu0 %1234
      %1236 = vrot.lane.b32.xlu0 %v1190, 28
      %v1237 = vpop.permute.xlu0 %1236
      %1238 = vrot.lane.b32.xlu0 %v1191, 28
      %v1239 = vpop.permute.xlu0 %1238
      %vm1256 = vcmask 261344
      %1257 = vst.msk [vmem:[#allocation4] sm:$0xff] %vm1256, %v1209
      %1258 = vst.msk [vmem:[#allocation4 + $0x8] sm:$0xff] %vm1256, %v1211
      %1259 = vst.msk [vmem:[#allocation4 + $0x10] sm:$0xff] %vm1256, %v1213
      %1260 = vst.msk [vmem:[#allocation4 + $0x18] sm:$0xff] %vm1256, %v1215
      %1261 = vst.msk [vmem:[#allocation4 + $0x20] sm:$0xff] %vm1256, %v1217
      %1262 = vst.msk [vmem:[#allocation4 + $0x28] sm:$0xff] %vm1256, %v1219
      %1263 = vst.msk [vmem:[#allocation4 + $0x30] sm:$0xff] %vm1256, %v1221
      %1264 = vst.msk [vmem:[#allocation4 + $0x38] sm:$0xff] %vm1256, %v1223
      %1265 = vst.msk [vmem:[#allocation4 + $0x40] sm:$0xff] %vm1256, %v1225
      %1266 = vst.msk [vmem:[#allocation4 + $0x48] sm:$0xff] %vm1256, %v1227
      %1267 = vst.msk [vmem:[#allocation4 + $0x50] sm:$0xff] %vm1256, %v1229
      %1268 = vst.msk [vmem:[#allocation4 + $0x58] sm:$0xff] %vm1256, %v1231
      %1269 = vst.msk [vmem:[#allocation4 + $0x60] sm:$0xff] %vm1256, %v1233
      %1270 = vst.msk [vmem:[#allocation4 + $0x68] sm:$0xff] %vm1256, %v1235
      %1271 = vst.msk [vmem:[#allocation4 + $0x70] sm:$0xff] %vm1256, %v1237
      %1272 = vst.msk [vmem:[#allocation4 + $0x78] sm:$0xff] %vm1256, %v1239
      %v1273 = vld [vmem:[%s1014 + $0x2] sm:$0xff]
      %v1274 = vld [vmem:[%s1014 + $0xa] sm:$0xff]
      %v1275 = vld [vmem:[%s1014 + $0x1a] sm:$0xff]
      %v1276 = vld [vmem:[%s1014 + $0x22] sm:$0xff]
      %v1277 = vld [vmem:[%s1014 + $0x32] sm:$0xff]
      %v1278 = vld [vmem:[%s1014 + $0x3a] sm:$0xff]
      %v1279 = vld [vmem:[%s1014 + $0x4a] sm:$0xff]
      %v1280 = vld [vmem:[%s1014 + $0x52] sm:$0xff]
      %v1281 = vld [vmem:[%s1014 + $0x62] sm:$0xff]
      %v1282 = vld [vmem:[%s1014 + $0x6a] sm:$0xff]
      %v1283 = vld [vmem:[%s1014 + $0x7a] sm:$0xff]
      %v1284 = vld [vmem:[%s1014 + $0x82] sm:$0xff]
      %v1285 = vld [vmem:[%s1014 + $0x92] sm:$0xff]
      %v1286 = vld [vmem:[%s1014 + $0x9a] sm:$0xff]
      %v1287 = vld [vmem:[%s1014 + $0xaa] sm:$0xff]
      %v1288 = vld [vmem:[%s1014 + $0xb2] sm:$0xff]
      %v1289 = vld [vmem:[%s1014 + $0xc2] sm:$0xff]
      %v1290 = vld [vmem:[%s1014 + $0xca] sm:$0xff]
      %v1291 = vld [vmem:[%s1014 + $0xda] sm:$0xff]
      %v1292 = vld [vmem:[%s1014 + $0xe2] sm:$0xff]
      %v1293 = vld [vmem:[%s1014 + $0xf2] sm:$0xff]
      %v1294 = vld [vmem:[%s1014 + $0xfa] sm:$0xff]
      %v1295 = vld [vmem:[%s1014 + $0x10a] sm:$0xff]
      %v1296 = vld [vmem:[%s1014 + $0x112] sm:$0xff]
      %v1297 = vld [vmem:[%s1014 + $0x122] sm:$0xff]
      %v1298 = vld [vmem:[%s1014 + $0x12a] sm:$0xff]
      %v1299 = vld [vmem:[%s1014 + $0x13a] sm:$0xff]
      %v1300 = vld [vmem:[%s1014 + $0x142] sm:$0xff]
      %v1301 = vld [vmem:[%s1014 + $0x152] sm:$0xff]
      %v1302 = vld [vmem:[%s1014 + $0x15a] sm:$0xff]
      %v1303 = vld [vmem:[%s1014 + $0x16a] sm:$0xff]
      %v1304 = vld [vmem:[%s1014 + $0x172] sm:$0xff]
      %v1305 = vpack.c.bf16 %v1274, %v1273
      %v1306 = vpack.c.bf16 %v1276, %v1275
      %v1307 = vpack.c.bf16 %v1278, %v1277
      %v1308 = vpack.c.bf16 %v1280, %v1279
      %v1309 = vpack.c.bf16 %v1282, %v1281
      %v1310 = vpack.c.bf16 %v1284, %v1283
      %v1311 = vpack.c.bf16 %v1286, %v1285
      %v1312 = vpack.c.bf16 %v1288, %v1287
      %v1313 = vpack.c.bf16 %v1290, %v1289
      %v1314 = vpack.c.bf16 %v1292, %v1291
      %v1315 = vpack.c.bf16 %v1294, %v1293
      %v1316 = vpack.c.bf16 %v1296, %v1295
      %v1317 = vpack.c.bf16 %v1298, %v1297
      %v1318 = vpack.c.bf16 %v1300, %v1299
      %v1319 = vpack.c.bf16 %v1302, %v1301
      %v1320 = vpack.c.bf16 %v1304, %v1303
      %1337 = vrot.lane.b32.xlu0 %v1305, 32
      %v1338 = vpop.permute.xlu0 %1337
      %1339 = vrot.lane.b32.xlu0 %v1306, 32
      %v1340 = vpop.permute.xlu0 %1339
      %1341 = vrot.lane.b32.xlu0 %v1307, 32
      %v1342 = vpop.permute.xlu0 %1341
      %1343 = vrot.lane.b32.xlu0 %v1308, 32
      %v1344 = vpop.permute.xlu0 %1343
      %1345 = vrot.lane.b32.xlu0 %v1309, 32
      %v1346 = vpop.permute.xlu0 %1345
      %1347 = vrot.lane.b32.xlu0 %v1310, 32
      %v1348 = vpop.permute.xlu0 %1347
      %1349 = vrot.lane.b32.xlu0 %v1311, 32
      %v1350 = vpop.permute.xlu0 %1349
      %1351 = vrot.lane.b32.xlu0 %v1312, 32
      %v1352 = vpop.permute.xlu0 %1351
      %1353 = vrot.lane.b32.xlu0 %v1313, 32
      %v1354 = vpop.permute.xlu0 %1353
      %1355 = vrot.lane.b32.xlu0 %v1314, 32
      %v1356 = vpop.permute.xlu0 %1355
      %1357 = vrot.lane.b32.xlu0 %v1315, 32
      %v1358 = vpop.permute.xlu0 %1357
      %1359 = vrot.lane.b32.xlu0 %v1316, 32
      %v1360 = vpop.permute.xlu0 %1359
      %1361 = vrot.lane.b32.xlu0 %v1317, 32
      %v1362 = vpop.permute.xlu0 %1361
      %1363 = vrot.lane.b32.xlu0 %v1318, 32
      %v1364 = vpop.permute.xlu0 %1363
      %1365 = vrot.lane.b32.xlu0 %v1319, 32
      %v1366 = vpop.permute.xlu0 %1365
      %1367 = vrot.lane.b32.xlu0 %v1320, 32
      %v1368 = vpop.permute.xlu0 %1367
      %vm1385 = vcmask 294144
      %1386 = vst.msk [vmem:[#allocation4] sm:$0xff] %vm1385, %v1338
      %1387 = vst.msk [vmem:[#allocation4 + $0x8] sm:$0xff] %vm1385, %v1340
      %1388 = vst.msk [vmem:[#allocation4 + $0x10] sm:$0xff] %vm1385, %v1342
      %1389 = vst.msk [vmem:[#allocation4 + $0x18] sm:$0xff] %vm1385, %v1344
      %1390 = vst.msk [vmem:[#allocation4 + $0x20] sm:$0xff] %vm1385, %v1346
      %1391 = vst.msk [vmem:[#allocation4 + $0x28] sm:$0xff] %vm1385, %v1348
      %1392 = vst.msk [vmem:[#allocation4 + $0x30] sm:$0xff] %vm1385, %v1350
      %1393 = vst.msk [vmem:[#allocation4 + $0x38] sm:$0xff] %vm1385, %v1352
      %1394 = vst.msk [vmem:[#allocation4 + $0x40] sm:$0xff] %vm1385, %v1354
      %1395 = vst.msk [vmem:[#allocation4 + $0x48] sm:$0xff] %vm1385, %v1356
      %1396 = vst.msk [vmem:[#allocation4 + $0x50] sm:$0xff] %vm1385, %v1358
      %1397 = vst.msk [vmem:[#allocation4 + $0x58] sm:$0xff] %vm1385, %v1360
      %1398 = vst.msk [vmem:[#allocation4 + $0x60] sm:$0xff] %vm1385, %v1362
      %1399 = vst.msk [vmem:[#allocation4 + $0x68] sm:$0xff] %vm1385, %v1364
      %1400 = vst.msk [vmem:[#allocation4 + $0x70] sm:$0xff] %vm1385, %v1366
      %1401 = vst.msk [vmem:[#allocation4 + $0x78] sm:$0xff] %vm1385, %v1368
      %vm1402 = vcmask 392480
      %1403 = vst.msk [vmem:[#allocation4] sm:$0xff] %vm1402, 0
      %1404 = vst.msk [vmem:[#allocation4 + $0x8] sm:$0xff] %vm1402, 0
      %1405 = vst.msk [vmem:[#allocation4 + $0x10] sm:$0xff] %vm1402, 0
      %1406 = vst.msk [vmem:[#allocation4 + $0x18] sm:$0xff] %vm1402, 0
      %1407 = vst.msk [vmem:[#allocation4 + $0x20] sm:$0xff] %vm1402, 0
      %1408 = vst.msk [vmem:[#allocation4 + $0x28] sm:$0xff] %vm1402, 0
      %1409 = vst.msk [vmem:[#allocation4 + $0x30] sm:$0xff] %vm1402, 0
      %1410 = vst.msk [vmem:[#allocation4 + $0x38] sm:$0xff] %vm1402, 0
      %1411 = vst.msk [vmem:[#allocation4 + $0x40] sm:$0xff] %vm1402, 0
      %1412 = vst.msk [vmem:[#allocation4 + $0x48] sm:$0xff] %vm1402, 0
      %1413 = vst.msk [vmem:[#allocation4 + $0x50] sm:$0xff] %vm1402, 0
      %1414 = vst.msk [vmem:[#allocation4 + $0x58] sm:$0xff] %vm1402, 0
      %1415 = vst.msk [vmem:[#allocation4 + $0x60] sm:$0xff] %vm1402, 0
      %1416 = vst.msk [vmem:[#allocation4 + $0x68] sm:$0xff] %vm1402, 0
      %1417 = vst.msk [vmem:[#allocation4 + $0x70] sm:$0xff] %vm1402, 0
      %1418 = vst.msk [vmem:[#allocation4 + $0x78] sm:$0xff] %vm1402, 0
      %v1419 = vld [vmem:[#allocation4] sm:$0xff]
      %v1420 = vld [vmem:[#allocation4 + $0x8] sm:$0xff]
      %v1421 = vld [vmem:[#allocation4 + $0x10] sm:$0xff]
      %v1422 = vld [vmem:[#allocation4 + $0x18] sm:$0xff]
      %v1423 = vld [vmem:[#allocation4 + $0x20] sm:$0xff]
      %v1424 = vld [vmem:[#allocation4 + $0x28] sm:$0xff]
      %v1425 = vld [vmem:[#allocation4 + $0x30] sm:$0xff]
      %v1426 = vld [vmem:[#allocation4 + $0x38] sm:$0xff]
      %v1427 = vld [vmem:[#allocation4 + $0x40] sm:$0xff]
      %v1428 = vld [vmem:[#allocation4 + $0x48] sm:$0xff]
      %v1429 = vld [vmem:[#allocation4 + $0x50] sm:$0xff]
      %v1430 = vld [vmem:[#allocation4 + $0x58] sm:$0xff]
      %v1431 = vld [vmem:[#allocation4 + $0x60] sm:$0xff]
      %v1432 = vld [vmem:[#allocation4 + $0x68] sm:$0xff]
      %v1433 = vld [vmem:[#allocation4 + $0x70] sm:$0xff]
      %v1434 = vld [vmem:[#allocation4 + $0x78] sm:$0xff]
      %v1435 = vld [vmem:[%s1] sm:$0xf]
      %v1436 = vld [vmem:[%s1 + $0x4] sm:$0xf]
      %v1437 = vld [vmem:[%s1 + $0x8] sm:$0xf]
      %v1438 = vld [vmem:[%s1 + $0xc] sm:$0xf]
      %v1439 = vld [vmem:[%s1 + $0x10] sm:$0xf]
      %v1440 = vld [vmem:[%s1 + $0x14] sm:$0xf]
      %v1447 = vunpack.c.l.b16 %v1435
      %v1448 = vunpack.c.l.b16 %v1436
      %v1449 = vunpack.c.l.b16 %v1437
      %v1450 = vunpack.c.l.b16 %v1438
      %v1451 = vunpack.c.l.b16 %v1439
      %v1452 = vunpack.c.l.b16 %v1440
      %v1453 = vpack.c.b16 %v1448, %v1447
      %v1454 = vpack.c.b16 %v1450, %v1449
      %v1455 = vpack.c.b16 %v1452, %v1451
      %vm1459 = vcmask 392192
      %v1461 = vsel %vm1459, %v1419, 0
      %v1464 = vsel %vm1459, %v1420, 0
      %v1467 = vsel %vm1459, %v1421, 0
      %v1470 = vsel %vm1459, %v1422, 0
      %v1473 = vsel %vm1459, %v1423, 0
      %v1476 = vsel %vm1459, %v1424, 0
      %v1479 = vsel %vm1459, %v1425, 0
      %v1482 = vsel %vm1459, %v1426, 0
      %v1485 = vsel %vm1459, %v1427, 0
      %v1488 = vsel %vm1459, %v1428, 0
      %v1491 = vsel %vm1459, %v1429, 0
      %v1494 = vsel %vm1459, %v1430, 0
      %v1497 = vsel %vm1459, %v1431, 0
      %v1500 = vsel %vm1459, %v1432, 0
      %v1503 = vsel %vm1459, %v1433, 0
      %v1506 = vsel %vm1459, %v1434, 0
      %1508 = vmatprep.subr.bf16.mxu0 0
      %1509 = vmatpush1.bf16.msra.mxu0 %v1453
      %1510 = vmatprep.subr.bf16.mxu0 0
      %1511 = vmatpush1.bf16.msra.mxu0 %v1454
      %1512 = vmatprep.subr.bf16.mxu0 0
      %1513 = vmatpush1.bf16.msra.mxu0 %v1455
      %1514 = vmatprep.subr.bf16.mxu0 0
      %1515 = vmatpush1.bf16.msra.mxu0 0
      %1516 = vmatprep.subr.bf16.mxu0 0
      %1517 = vmatpush1.bf16.msra.mxu0 0
      %1518 = vmatprep.subr.bf16.mxu0 0
      %1519 = vmatpush1.bf16.msra.mxu0 0
      %1520 = vmatprep.subr.bf16.mxu0 0
      %1521 = vmatpush1.bf16.msra.mxu0 0
      %1522 = vmatprep.subr.bf16.mxu0 0
      %1523 = vmatpush1.bf16.msra.mxu0 0
      %1524 = vmatprep.subr.bf16.mxu0 0
      %1525 = vmatpush1.bf16.msra.mxu0 0
      %1526 = vmatprep.subr.bf16.mxu0 0
      %1527 = vmatpush1.bf16.msra.mxu0 0
      %1528 = vmatprep.subr.bf16.mxu0 0
      %1529 = vmatpush1.bf16.msra.mxu0 0
      %1530 = vmatprep.subr.bf16.mxu0 0
      %1531 = vmatpush1.bf16.msra.mxu0 0
      %1532 = vmatprep.subr.bf16.mxu0 0
      %1533 = vmatpush1.bf16.msra.mxu0 0
      %1534 = vmatprep.subr.bf16.mxu0 0
      %1535 = vmatpush1.bf16.msra.mxu0 0
      %1536 = vmatprep.subr.bf16.mxu0 0
      %1537 = vmatpush1.bf16.msra.mxu0 0
      %1538 = vmatprep.subr.bf16.mxu0 0
      %1539 = vmatpush1.bf16.msra.mxu0 0
      %1540 = vmatprep.mubr.bf16.mxu0 0
      %1541 = vmatmul.mubr.bf16.gmra.mrb[0].mxu0 %v1461
      %v1542 = vpop.f32.mrb[0].mxu0
      %v1543 = vadd.f32 0.0, %v1542
      %v1544 = vpop.f32.mrb[0].mxu0
      %v1545 = vpop.f32.mrb[0].mxu0
      %v1546 = vadd.f32 0.0, %v1545
      %v1547 = vpop.f32.mrb[0].mxu0
      %1548 = vmatprep.mubr.bf16.mxu0 0
      %1549 = vmatmul.mubr.bf16.gmra.mrb[0].mxu0 %v1464
      %v1550 = vpop.f32.mrb[0].mxu0
      %v1551 = vadd.f32 0.0, %v1550
      %v1552 = vpop.f32.mrb[0].mxu0
      %v1553 = vpop.f32.mrb[0].mxu0
      %v1554 = vadd.f32 0.0, %v1553
      %v1555 = vpop.f32.mrb[0].mxu0
      %1556 = vmatprep.mubr.bf16.mxu0 0
      %1557 = vmatmul.mubr.bf16.gmra.mrb[0].mxu0 %v1467
      %v1558 = vpop.f32.mrb[0].mxu0
      %v1559 = vadd.f32 0.0, %v1558
      %v1560 = vpop.f32.mrb[0].mxu0
      %v1561 = vpop.f32.mrb[0].mxu0
      %v1562 = vadd.f32 0.0, %v1561
      %v1563 = vpop.f32.mrb[0].mxu0
      %1564 = vmatprep.mubr.bf16.mxu0 0
      %1565 = vmatmul.mubr.bf16.gmra.mrb[0].mxu0 %v1470
      %v1566 = vpop.f32.mrb[0].mxu0
      %v1567 = vadd.f32 0.0, %v1566
      %v1568 = vpop.f32.mrb[0].mxu0
      %v1569 = vpop.f32.mrb[0].mxu0
      %v1570 = vadd.f32 0.0, %v1569
      %v1571 = vpop.f32.mrb[0].mxu0
      %1572 = vmatprep.mubr.bf16.mxu0 0
      %1573 = vmatmul.mubr.bf16.gmra.mrb[0].mxu0 %v1473
      %v1574 = vpop.f32.mrb[0].mxu0
      %v1575 = vadd.f32 0.0, %v1574
      %v1576 = vpop.f32.mrb[0].mxu0
      %v1577 = vpop.f32.mrb[0].mxu0
      %v1578 = vadd.f32 0.0, %v1577
      %v1579 = vpop.f32.mrb[0].mxu0
      %1580 = vmatprep.mubr.bf16.mxu0 0
      %1581 = vmatmul.mubr.bf16.gmra.mrb[0].mxu0 %v1476
      %v1582 = vpop.f32.mrb[0].mxu0
      %v1583 = vadd.f32 0.0, %v1582
      %v1584 = vpop.f32.mrb[0].mxu0
      %v1585 = vpop.f32.mrb[0].mxu0
      %v1586 = vadd.f32 0.0, %v1585
      %v1587 = vpop.f32.mrb[0].mxu0
      %1588 = vmatprep.mubr.bf16.mxu0 0
      %1589 = vmatmul.mubr.bf16.gmra.mrb[0].mxu0 %v1479
      %v1590 = vpop.f32.mrb[0].mxu0
      %v1591 = vadd.f32 0.0, %v1590
      %v1592 = vpop.f32.mrb[0].mxu0
      %v1593 = vpop.f32.mrb[0].mxu0
      %v1594 = vadd.f32 0.0, %v1593
      %v1595 = vpop.f32.mrb[0].mxu0
      %1596 = vmatprep.mubr.bf16.mxu0 0
      %1597 = vmatmul.mubr.bf16.gmra.mrb[0].mxu0 %v1482
      %v1598 = vpop.f32.mrb[0].mxu0
      %v1599 = vadd.f32 0.0, %v1598
      %v1600 = vpop.f32.mrb[0].mxu0
      %v1601 = vpop.f32.mrb[0].mxu0
      %v1602 = vadd.f32 0.0, %v1601
      %v1603 = vpop.f32.mrb[0].mxu0
      %1604 = vmatprep.mubr.bf16.mxu0 0
      %1605 = vmatmul.mubr.bf16.gmra.mrb[0].mxu0 %v1485
      %v1606 = vpop.f32.mrb[0].mxu0
      %v1607 = vadd.f32 0.0, %v1606
      %v1608 = vpop.f32.mrb[0].mxu0
      %v1609 = vpop.f32.mrb[0].mxu0
      %v1610 = vadd.f32 0.0, %v1609
      %v1611 = vpop.f32.mrb[0].mxu0
      %1612 = vmatprep.mubr.bf16.mxu0 0
      %1613 = vmatmul.mubr.bf16.gmra.mrb[0].mxu0 %v1488
      %v1614 = vpop.f32.mrb[0].mxu0
      %v1615 = vadd.f32 0.0, %v1614
      %v1616 = vpop.f32.mrb[0].mxu0
      %v1617 = vpop.f32.mrb[0].mxu0
      %v1618 = vadd.f32 0.0, %v1617
      %v1619 = vpop.f32.mrb[0].mxu0
      %1620 = vmatprep.mubr.bf16.mxu0 0
      %1621 = vmatmul.mubr.bf16.gmra.mrb[0].mxu0 %v1491
      %v1622 = vpop.f32.mrb[0].mxu0
      %v1623 = vadd.f32 0.0, %v1622
      %v1624 = vpop.f32.mrb[0].mxu0
      %v1625 = vpop.f32.mrb[0].mxu0
      %v1626 = vadd.f32 0.0, %v1625
      %v1627 = vpop.f32.mrb[0].mxu0
      %1628 = vmatprep.mubr.bf16.mxu0 0
      %1629 = vmatmul.mubr.bf16.gmra.mrb[0].mxu0 %v1494
      %v1630 = vpop.f32.mrb[0].mxu0
      %v1631 = vadd.f32 0.0, %v1630
      %v1632 = vpop.f32.mrb[0].mxu0
      %v1633 = vpop.f32.mrb[0].mxu0
      %v1634 = vadd.f32 0.0, %v1633
      %v1635 = vpop.f32.mrb[0].mxu0
      %1636 = vmatprep.mubr.bf16.mxu0 0
      %1637 = vmatmul.mubr.bf16.gmra.mrb[0].mxu0 %v1497
      %v1638 = vpop.f32.mrb[0].mxu0
      %v1639 = vadd.f32 0.0, %v1638
      %v1640 = vpop.f32.mrb[0].mxu0
      %v1641 = vpop.f32.mrb[0].mxu0
      %v1642 = vadd.f32 0.0, %v1641
      %v1643 = vpop.f32.mrb[0].mxu0
      %1644 = vmatprep.mubr.bf16.mxu0 0
      %1645 = vmatmul.mubr.bf16.gmra.mrb[0].mxu0 %v1500
      %v1646 = vpop.f32.mrb[0].mxu0
      %v1647 = vadd.f32 0.0, %v1646
      %v1648 = vpop.f32.mrb[0].mxu0
      %v1649 = vpop.f32.mrb[0].mxu0
      %v1650 = vadd.f32 0.0, %v1649
      %v1651 = vpop.f32.mrb[0].mxu0
      %1652 = vmatprep.mubr.bf16.mxu0 0
      %1653 = vmatmul.mubr.bf16.gmra.mrb[0].mxu0 %v1503
      %v1654 = vpop.f32.mrb[0].mxu0
      %v1655 = vadd.f32 0.0, %v1654
      %v1656 = vpop.f32.mrb[0].mxu0
      %v1657 = vpop.f32.mrb[0].mxu0
      %v1658 = vadd.f32 0.0, %v1657
      %v1659 = vpop.f32.mrb[0].mxu0
      %1660 = vmatprep.mubr.bf16.mxu0 0
      %1661 = vmatmul.mubr.bf16.gmra.mrb[0].mxu0 %v1506
      %v1662 = vpop.f32.mrb[0].mxu0
      %v1663 = vadd.f32 0.0, %v1662
      %v1664 = vpop.f32.mrb[0].mxu0
      %v1665 = vpop.f32.mrb[0].mxu0
      %v1666 = vadd.f32 0.0, %v1665
      %v1667 = vpop.f32.mrb[0].mxu0
      %1668 = vdwg.mxu0
      %v1669 = vld [vmem:[%s3] sm:$0x1]
      %v1670 = vlaneseq
      %v1671 = vshrl.u32 %v1670, 7
      %v1672 = vsub.s32 0, %v1671
      %v1673 = vrot.slane %v1669, %v1672
      %v1674 = vmul.f32 %v1543, %v1673
      %v1675 = vmul.f32 %v1546, %v1673
      %v1676 = vmul.f32 %v1551, %v1673
      %v1677 = vmul.f32 %v1554, %v1673
      %v1678 = vmul.f32 %v1559, %v1673
      %v1679 = vmul.f32 %v1562, %v1673
      %v1680 = vmul.f32 %v1567, %v1673
      %v1681 = vmul.f32 %v1570, %v1673
      %v1682 = vmul.f32 %v1575, %v1673
      %v1683 = vmul.f32 %v1578, %v1673
      %v1684 = vmul.f32 %v1583, %v1673
      %v1685 = vmul.f32 %v1586, %v1673
      %v1686 = vmul.f32 %v1591, %v1673
      %v1687 = vmul.f32 %v1594, %v1673
      %v1688 = vmul.f32 %v1599, %v1673
      %v1689 = vmul.f32 %v1602, %v1673
      %v1690 = vmul.f32 %v1607, %v1673
      %v1691 = vmul.f32 %v1610, %v1673
      %v1692 = vmul.f32 %v1615, %v1673
      %v1693 = vmul.f32 %v1618, %v1673
      %v1694 = vmul.f32 %v1623, %v1673
      %v1695 = vmul.f32 %v1626, %v1673
      %v1696 = vmul.f32 %v1631, %v1673
      %v1697 = vmul.f32 %v1634, %v1673
      %v1698 = vmul.f32 %v1639, %v1673
      %v1699 = vmul.f32 %v1642, %v1673
      %v1700 = vmul.f32 %v1647, %v1673
      %v1701 = vmul.f32 %v1650, %v1673
      %v1702 = vmul.f32 %v1655, %v1673
      %v1703 = vmul.f32 %v1658, %v1673
      %v1704 = vmul.f32 %v1663, %v1673
      %v1705 = vmul.f32 %v1666, %v1673
      %v1706 = vld [vmem:[%s3 + $0x1] sm:$0x1]
      %v1707 = vlaneseq
      %v1708 = vshrl.u32 %v1707, 7
      %v1709 = vsub.s32 0, %v1708
      %v1710 = vrot.slane %v1706, %v1709
      %v1711 = vadd.f32 %v1674, %v1710
      %v1712 = vadd.f32 %v1675, %v1710
      %v1713 = vadd.f32 %v1676, %v1710
      %v1714 = vadd.f32 %v1677, %v1710
      %v1715 = vadd.f32 %v1678, %v1710
      %v1716 = vadd.f32 %v1679, %v1710
      %v1717 = vadd.f32 %v1680, %v1710
      %v1718 = vadd.f32 %v1681, %v1710
      %v1719 = vadd.f32 %v1682, %v1710
      %v1720 = vadd.f32 %v1683, %v1710
      %v1721 = vadd.f32 %v1684, %v1710
      %v1722 = vadd.f32 %v1685, %v1710
      %v1723 = vadd.f32 %v1686, %v1710
      %v1724 = vadd.f32 %v1687, %v1710
      %v1725 = vadd.f32 %v1688, %v1710
      %v1726 = vadd.f32 %v1689, %v1710
      %v1727 = vadd.f32 %v1690, %v1710
      %v1728 = vadd.f32 %v1691, %v1710
      %v1729 = vadd.f32 %v1692, %v1710
      %v1730 = vadd.f32 %v1693, %v1710
      %v1731 = vadd.f32 %v1694, %v1710
      %v1732 = vadd.f32 %v1695, %v1710
      %v1733 = vadd.f32 %v1696, %v1710
      %v1734 = vadd.f32 %v1697, %v1710
      %v1735 = vadd.f32 %v1698, %v1710
      %v1736 = vadd.f32 %v1699, %v1710
      %v1737 = vadd.f32 %v1700, %v1710
      %v1738 = vadd.f32 %v1701, %v1710
      %v1739 = vadd.f32 %v1702, %v1710
      %v1740 = vadd.f32 %v1703, %v1710
      %v1741 = vadd.f32 %v1704, %v1710
      %v1742 = vadd.f32 %v1705, %v1710
      %vm1743 = vcmp.gt.f32.partialorder %v1711, 0.0
      %vm1744 = vcmp.gt.f32.partialorder %v1712, 0.0
      %vm1745 = vcmp.gt.f32.partialorder %v1713, 0.0
      %vm1746 = vcmp.gt.f32.partialorder %v1714, 0.0
      %vm1747 = vcmp.gt.f32.partialorder %v1715, 0.0
      %vm1748 = vcmp.gt.f32.partialorder %v1716, 0.0
      %vm1749 = vcmp.gt.f32.partialorder %v1717, 0.0
      %vm1750 = vcmp.gt.f32.partialorder %v1718, 0.0
      %vm1751 = vcmp.gt.f32.partialorder %v1719, 0.0
      %vm1752 = vcmp.gt.f32.partialorder %v1720, 0.0
      %vm1753 = vcmp.gt.f32.partialorder %v1721, 0.0
      %vm1754 = vcmp.gt.f32.partialorder %v1722, 0.0
      %vm1755 = vcmp.gt.f32.partialorder %v1723, 0.0
      %vm1756 = vcmp.gt.f32.partialorder %v1724, 0.0
      %vm1757 = vcmp.gt.f32.partialorder %v1725, 0.0
      %vm1758 = vcmp.gt.f32.partialorder %v1726, 0.0
      %vm1759 = vcmp.gt.f32.partialorder %v1727, 0.0
      %vm1760 = vcmp.gt.f32.partialorder %v1728, 0.0
      %vm1761 = vcmp.gt.f32.partialorder %v1729, 0.0
      %vm1762 = vcmp.gt.f32.partialorder %v1730, 0.0
      %vm1763 = vcmp.gt.f32.partialorder %v1731, 0.0
      %vm1764 = vcmp.gt.f32.partialorder %v1732, 0.0
      %vm1765 = vcmp.gt.f32.partialorder %v1733, 0.0
      %vm1766 = vcmp.gt.f32.partialorder %v1734, 0.0
      %vm1767 = vcmp.gt.f32.partialorder %v1735, 0.0
      %vm1768 = vcmp.gt.f32.partialorder %v1736, 0.0
      %vm1769 = vcmp.gt.f32.partialorder %v1737, 0.0
      %vm1770 = vcmp.gt.f32.partialorder %v1738, 0.0
      %vm1771 = vcmp.gt.f32.partialorder %v1739, 0.0
      %vm1772 = vcmp.gt.f32.partialorder %v1740, 0.0
      %vm1773 = vcmp.gt.f32.partialorder %v1741, 0.0
      %vm1774 = vcmp.gt.f32.partialorder %v1742, 0.0
      %v1775 = vmul.f32 %v1711, 0.01
      %v1776 = vmul.f32 %v1712, 0.01
      %v1777 = vmul.f32 %v1713, 0.01
      %v1778 = vmul.f32 %v1714, 0.01
      %v1779 = vmul.f32 %v1715, 0.01
      %v1780 = vmul.f32 %v1716, 0.01
      %v1781 = vmul.f32 %v1717, 0.01
      %v1782 = vmul.f32 %v1718, 0.01
      %v1783 = vmul.f32 %v1719, 0.01
      %v1784 = vmul.f32 %v1720, 0.01
      %v1785 = vmul.f32 %v1721, 0.01
      %v1786 = vmul.f32 %v1722, 0.01
      %v1787 = vmul.f32 %v1723, 0.01
      %v1788 = vmul.f32 %v1724, 0.01
      %v1789 = vmul.f32 %v1725, 0.01
      %v1790 = vmul.f32 %v1726, 0.01
      %v1791 = vmul.f32 %v1727, 0.01
      %v1792 = vmul.f32 %v1728, 0.01
      %v1793 = vmul.f32 %v1729, 0.01
      %v1794 = vmul.f32 %v1730, 0.01
      %v1795 = vmul.f32 %v1731, 0.01
      %v1796 = vmul.f32 %v1732, 0.01
      %v1797 = vmul.f32 %v1733, 0.01
      %v1798 = vmul.f32 %v1734, 0.01
      %v1799 = vmul.f32 %v1735, 0.01
      %v1800 = vmul.f32 %v1736, 0.01
      %v1801 = vmul.f32 %v1737, 0.01
      %v1802 = vmul.f32 %v1738, 0.01
      %v1803 = vmul.f32 %v1739, 0.01
      %v1804 = vmul.f32 %v1740, 0.01
      %v1805 = vmul.f32 %v1741, 0.01
      %v1806 = vmul.f32 %v1742, 0.01
      %v1807 = vsel %vm1743, %v1711, %v1775
      %v1808 = vsel %vm1744, %v1712, %v1776
      %v1809 = vsel %vm1745, %v1713, %v1777
      %v1810 = vsel %vm1746, %v1714, %v1778
      %v1811 = vsel %vm1747, %v1715, %v1779
      %v1812 = vsel %vm1748, %v1716, %v1780
      %v1813 = vsel %vm1749, %v1717, %v1781
      %v1814 = vsel %vm1750, %v1718, %v1782
      %v1815 = vsel %vm1751, %v1719, %v1783
      %v1816 = vsel %vm1752, %v1720, %v1784
      %v1817 = vsel %vm1753, %v1721, %v1785
      %v1818 = vsel %vm1754, %v1722, %v1786
      %v1819 = vsel %vm1755, %v1723, %v1787
      %v1820 = vsel %vm1756, %v1724, %v1788
      %v1821 = vsel %vm1757, %v1725, %v1789
      %v1822 = vsel %vm1758, %v1726, %v1790
      %v1823 = vsel %vm1759, %v1727, %v1791
      %v1824 = vsel %vm1760, %v1728, %v1792
      %v1825 = vsel %vm1761, %v1729, %v1793
      %v1826 = vsel %vm1762, %v1730, %v1794
      %v1827 = vsel %vm1763, %v1731, %v1795
      %v1828 = vsel %vm1764, %v1732, %v1796
      %v1829 = vsel %vm1765, %v1733, %v1797
      %v1830 = vsel %vm1766, %v1734, %v1798
      %v1831 = vsel %vm1767, %v1735, %v1799
      %v1832 = vsel %vm1768, %v1736, %v1800
      %v1833 = vsel %vm1769, %v1737, %v1801
      %v1834 = vsel %vm1770, %v1738, %v1802
      %v1835 = vsel %vm1771, %v1739, %v1803
      %v1836 = vsel %vm1772, %v1740, %v1804
      %v1837 = vsel %vm1773, %v1741, %v1805
      %v1838 = vsel %vm1774, %v1742, %v1806
      %1839 = vst [vmem:[#allocation3] sm:$0xff] 0.0
      %1840 = vst [vmem:[#allocation3 + $0x8] sm:$0xff] 0.0
      %1841 = vst [vmem:[#allocation3 + $0x10] sm:$0xff] 0.0
      %s1842 = scalar_lea.vmem [#allocation3], 408
      %1843 = vst [vmem:[%s1842] sm:$0xff] 0.0
      %1844 = vst [vmem:[%s1842 + $0x8] sm:$0xff] 0.0
      %1845 = vst [vmem:[%s1842 + $0x10] sm:$0xff] 0.0
      %s1846 = scalar_lea.vmem [#allocation3], 24
      %1847 = vst [vmem:[%s1846] sm:$0x1] 0.0
      %1848 = vst [vmem:[%s1846 + $0x18] sm:$0x1] 0.0
      %1849 = vst [vmem:[%s1846 + $0x30] sm:$0x1] 0.0
      %1850 = vst [vmem:[%s1846 + $0x48] sm:$0x1] 0.0
      %1851 = vst [vmem:[%s1846 + $0x60] sm:$0x1] 0.0
      %1852 = vst [vmem:[%s1846 + $0x78] sm:$0x1] 0.0
      %1853 = vst [vmem:[%s1846 + $0x90] sm:$0x1] 0.0
      %1854 = vst [vmem:[%s1846 + $0xa8] sm:$0x1] 0.0
      %1855 = vst [vmem:[%s1846 + $0xc0] sm:$0x1] 0.0
      %1856 = vst [vmem:[%s1846 + $0xd8] sm:$0x1] 0.0
      %1857 = vst [vmem:[%s1846 + $0xf0] sm:$0x1] 0.0
      %1858 = vst [vmem:[%s1846 + $0x108] sm:$0x1] 0.0
      %1859 = vst [vmem:[%s1846 + $0x120] sm:$0x1] 0.0
      %1860 = vst [vmem:[%s1846 + $0x138] sm:$0x1] 0.0
      %1861 = vst [vmem:[%s1846 + $0x150] sm:$0x1] 0.0
      %1862 = vst [vmem:[%s1846 + $0x168] sm:$0x1] 0.0
      %1863 = vst [vmem:[%s1846 + $0x11] sm:$0x1] 0.0
      %1864 = vst [vmem:[%s1846 + $0x29] sm:$0x1] 0.0
      %1865 = vst [vmem:[%s1846 + $0x41] sm:$0x1] 0.0
      %1866 = vst [vmem:[%s1846 + $0x59] sm:$0x1] 0.0
      %1867 = vst [vmem:[%s1846 + $0x71] sm:$0x1] 0.0
      %1868 = vst [vmem:[%s1846 + $0x89] sm:$0x1] 0.0
      %1869 = vst [vmem:[%s1846 + $0xa1] sm:$0x1] 0.0
      %1870 = vst [vmem:[%s1846 + $0xb9] sm:$0x1] 0.0
      %1871 = vst [vmem:[%s1846 + $0xd1] sm:$0x1] 0.0
      %1872 = vst [vmem:[%s1846 + $0xe9] sm:$0x1] 0.0
      %1873 = vst [vmem:[%s1846 + $0x101] sm:$0x1] 0.0
      %1874 = vst [vmem:[%s1846 + $0x119] sm:$0x1] 0.0
      %1875 = vst [vmem:[%s1846 + $0x131] sm:$0x1] 0.0
      %1876 = vst [vmem:[%s1846 + $0x149] sm:$0x1] 0.0
      %1877 = vst [vmem:[%s1846 + $0x161] sm:$0x1] 0.0
      %1878 = vst [vmem:[%s1846 + $0x179] sm:$0x1] 0.0
      %1879 = vst [vmem:[%s1846 + $0x1] sm:$0xff] %v1807
      %1880 = vst [vmem:[%s1846 + $0x9] sm:$0xff] %v1808
      %1881 = vst [vmem:[%s1846 + $0x19] sm:$0xff] %v1809
      %1882 = vst [vmem:[%s1846 + $0x21] sm:$0xff] %v1810
      %1883 = vst [vmem:[%s1846 + $0x31] sm:$0xff] %v1811
      %1884 = vst [vmem:[%s1846 + $0x39] sm:$0xff] %v1812
      %1885 = vst [vmem:[%s1846 + $0x49] sm:$0xff] %v1813
      %1886 = vst [vmem:[%s1846 + $0x51] sm:$0xff] %v1814
      %1887 = vst [vmem:[%s1846 + $0x61] sm:$0xff] %v1815
      %1888 = vst [vmem:[%s1846 + $0x69] sm:$0xff] %v1816
      %1889 = vst [vmem:[%s1846 + $0x79] sm:$0xff] %v1817
      %1890 = vst [vmem:[%s1846 + $0x81] sm:$0xff] %v1818
      %1891 = vst [vmem:[%s1846 + $0x91] sm:$0xff] %v1819
      %1892 = vst [vmem:[%s1846 + $0x99] sm:$0xff] %v1820
      %1893 = vst [vmem:[%s1846 + $0xa9] sm:$0xff] %v1821
      %1894 = vst [vmem:[%s1846 + $0xb1] sm:$0xff] %v1822
      %1895 = vst [vmem:[%s1846 + $0xc1] sm:$0xff] %v1823
      %1896 = vst [vmem:[%s1846 + $0xc9] sm:$0xff] %v1824
      %1897 = vst [vmem:[%s1846 + $0xd9] sm:$0xff] %v1825
      %1898 = vst [vmem:[%s1846 + $0xe1] sm:$0xff] %v1826
      %1899 = vst [vmem:[%s1846 + $0xf1] sm:$0xff] %v1827
      %1900 = vst [vmem:[%s1846 + $0xf9] sm:$0xff] %v1828
      %1901 = vst [vmem:[%s1846 + $0x109] sm:$0xff] %v1829
      %1902 = vst [vmem:[%s1846 + $0x111] sm:$0xff] %v1830
      %1903 = vst [vmem:[%s1846 + $0x121] sm:$0xff] %v1831
      %1904 = vst [vmem:[%s1846 + $0x129] sm:$0xff] %v1832
      %1905 = vst [vmem:[%s1846 + $0x139] sm:$0xff] %v1833
      %1906 = vst [vmem:[%s1846 + $0x141] sm:$0xff] %v1834
      %1907 = vst [vmem:[%s1846 + $0x151] sm:$0xff] %v1835
      %1908 = vst [vmem:[%s1846 + $0x159] sm:$0xff] %v1836
      %1909 = vst [vmem:[%s1846 + $0x169] sm:$0xff] %v1837
      %1910 = vst [vmem:[%s1846 + $0x171] sm:$0xff] %v1838
      %v1911 = vld [vmem:[#allocation3] sm:$0xff]
      %v1912 = vld [vmem:[#allocation3 + $0x8] sm:$0xff]
      %v1913 = vld [vmem:[#allocation3 + $0x18] sm:$0xff]
      %v1914 = vld [vmem:[#allocation3 + $0x20] sm:$0xff]
      %v1915 = vld [vmem:[#allocation3 + $0x30] sm:$0xff]
      %v1916 = vld [vmem:[#allocation3 + $0x38] sm:$0xff]
      %v1917 = vld [vmem:[#allocation3 + $0x48] sm:$0xff]
      %v1918 = vld [vmem:[#allocation3 + $0x50] sm:$0xff]
      %v1919 = vld [vmem:[#allocation3 + $0x60] sm:$0xff]
      %v1920 = vld [vmem:[#allocation3 + $0x68] sm:$0xff]
      %v1921 = vld [vmem:[#allocation3 + $0x78] sm:$0xff]
      %v1922 = vld [vmem:[#allocation3 + $0x80] sm:$0xff]
      %v1923 = vld [vmem:[#allocation3 + $0x90] sm:$0xff]
      %v1924 = vld [vmem:[#allocation3 + $0x98] sm:$0xff]
      %v1925 = vld [vmem:[#allocation3 + $0xa8] sm:$0xff]
      %v1926 = vld [vmem:[#allocation3 + $0xb0] sm:$0xff]
      %v1927 = vld [vmem:[#allocation3 + $0xc0] sm:$0xff]
      %v1928 = vld [vmem:[#allocation3 + $0xc8] sm:$0xff]
      %v1929 = vld [vmem:[#allocation3 + $0xd8] sm:$0xff]
      %v1930 = vld [vmem:[#allocation3 + $0xe0] sm:$0xff]
      %v1931 = vld [vmem:[#allocation3 + $0xf0] sm:$0xff]
      %v1932 = vld [vmem:[#allocation3 + $0xf8] sm:$0xff]
      %v1933 = vld [vmem:[#allocation3 + $0x108] sm:$0xff]
      %v1934 = vld [vmem:[#allocation3 + $0x110] sm:$0xff]
      %v1935 = vld [vmem:[#allocation3 + $0x120] sm:$0xff]
      %v1936 = vld [vmem:[#allocation3 + $0x128] sm:$0xff]
      %v1937 = vld [vmem:[#allocation3 + $0x138] sm:$0xff]
      %v1938 = vld [vmem:[#allocation3 + $0x140] sm:$0xff]
      %v1939 = vld [vmem:[#allocation3 + $0x150] sm:$0xff]
      %v1940 = vld [vmem:[#allocation3 + $0x158] sm:$0xff]
      %v1941 = vld [vmem:[#allocation3 + $0x168] sm:$0xff]
      %v1942 = vld [vmem:[#allocation3 + $0x170] sm:$0xff]
      %v1943 = vpack.c.bf16 %v1912, %v1911
      %v1944 = vpack.c.bf16 %v1914, %v1913
      %v1945 = vpack.c.bf16 %v1916, %v1915
      %v1946 = vpack.c.bf16 %v1918, %v1917
      %v1947 = vpack.c.bf16 %v1920, %v1919
      %v1948 = vpack.c.bf16 %v1922, %v1921
      %v1949 = vpack.c.bf16 %v1924, %v1923
      %v1950 = vpack.c.bf16 %v1926, %v1925
      %v1951 = vpack.c.bf16 %v1928, %v1927
      %v1952 = vpack.c.bf16 %v1930, %v1929
      %v1953 = vpack.c.bf16 %v1932, %v1931
      %v1954 = vpack.c.bf16 %v1934, %v1933
      %v1955 = vpack.c.bf16 %v1936, %v1935
      %v1956 = vpack.c.bf16 %v1938, %v1937
      %v1957 = vpack.c.bf16 %v1940, %v1939
      %v1958 = vpack.c.bf16 %v1942, %v1941
      %v1959 = vld [vmem:[%s2] sm:$0xf]
      %v1960 = vld [vmem:[%s2 + $0x4] sm:$0xf]
      %v1961 = vld [vmem:[%s2 + $0x8] sm:$0xf]
      %v1962 = vld [vmem:[%s2 + $0xc] sm:$0xf]
      %v1963 = vld [vmem:[%s2 + $0x10] sm:$0xf]
      %v1964 = vld [vmem:[%s2 + $0x14] sm:$0xf]
      %v1965 = vld [vmem:[%s2 + $0x18] sm:$0xf]
      %v1966 = vld [vmem:[%s2 + $0x1c] sm:$0xf]
      %v1967 = vld [vmem:[%s2 + $0x20] sm:$0xf]
      %v1968 = vld [vmem:[%s2 + $0x24] sm:$0xf]
      %v1969 = vld [vmem:[%s2 + $0x28] sm:$0xf]
      %v1970 = vld [vmem:[%s2 + $0x2c] sm:$0xf]
      %v1971 = vld [vmem:[%s2 + $0x30] sm:$0xf]
      %v1972 = vld [vmem:[%s2 + $0x34] sm:$0xf]
      %v1973 = vld [vmem:[%s2 + $0x38] sm:$0xf]
      %v1974 = vld [vmem:[%s2 + $0x3c] sm:$0xf]
      %v1975 = vld [vmem:[#allocation3 + $0x1] sm:$0xff]
      %v1976 = vld [vmem:[#allocation3 + $0x9] sm:$0xff]
      %v1977 = vld [vmem:[#allocation3 + $0x19] sm:$0xff]
      %v1978 = vld [vmem:[#allocation3 + $0x21] sm:$0xff]
      %v1979 = vld [vmem:[#allocation3 + $0x31] sm:$0xff]
      %v1980 = vld [vmem:[#allocation3 + $0x39] sm:$0xff]
      %v1981 = vld [vmem:[#allocation3 + $0x49] sm:$0xff]
      %v1982 = vld [vmem:[#allocation3 + $0x51] sm:$0xff]
      %v1983 = vld [vmem:[#allocation3 + $0x61] sm:$0xff]
      %v1984 = vld [vmem:[#allocation3 + $0x69] sm:$0xff]
      %v1985 = vld [vmem:[#allocation3 + $0x79] sm:$0xff]
      %v1986 = vld [vmem:[#allocation3 + $0x81] sm:$0xff]
      %v1987 = vld [vmem:[#allocation3 + $0x91] sm:$0xff]
      %v1988 = vld [vmem:[#allocation3 + $0x99] sm:$0xff]
      %v1989 = vld [vmem:[#allocation3 + $0xa9] sm:$0xff]
      %v1990 = vld [vmem:[#allocation3 + $0xb1] sm:$0xff]
      %v1991 = vld [vmem:[#allocation3 + $0xc1] sm:$0xff]
      %v1992 = vld [vmem:[#allocation3 + $0xc9] sm:$0xff]
      %v1993 = vld [vmem:[#allocation3 + $0xd9] sm:$0xff]
      %v1994 = vld [vmem:[#allocation3 + $0xe1] sm:$0xff]
      %v1995 = vld [vmem:[#allocation3 + $0xf1] sm:$0xff]
      %v1996 = vld [vmem:[#allocation3 + $0xf9] sm:$0xff]
      %v1997 = vld [vmem:[#allocation3 + $0x109] sm:$0xff]
      %v1998 = vld [vmem:[#allocation3 + $0x111] sm:$0xff]
      %v1999 = vld [vmem:[#allocation3 + $0x121] sm:$0xff]
      %v2000 = vld [vmem:[#allocation3 + $0x129] sm:$0xff]
      %v2001 = vld [vmem:[#allocation3 + $0x139] sm:$0xff]
      %v2002 = vld [vmem:[#allocation3 + $0x141] sm:$0xff]
      %v2003 = vld [vmem:[#allocation3 + $0x151] sm:$0xff]
      %v2004 = vld [vmem:[#allocation3 + $0x159] sm:$0xff]
      %v2005 = vld [vmem:[#allocation3 + $0x169] sm:$0xff]
      %v2006 = vld [vmem:[#allocation3 + $0x171] sm:$0xff]
      %v2007 = vpack.c.bf16 %v1976, %v1975
      %v2008 = vpack.c.bf16 %v1978, %v1977
      %v2009 = vpack.c.bf16 %v1980, %v1979
      %v2010 = vpack.c.bf16 %v1982, %v1981
      %v2011 = vpack.c.bf16 %v1984, %v1983
      %v2012 = vpack.c.bf16 %v1986, %v1985
      %v2013 = vpack.c.bf16 %v1988, %v1987
      %v2014 = vpack.c.bf16 %v1990, %v1989
      %v2015 = vpack.c.bf16 %v1992, %v1991
      %v2016 = vpack.c.bf16 %v1994, %v1993
      %v2017 = vpack.c.bf16 %v1996, %v1995
      %v2018 = vpack.c.bf16 %v1998, %v1997
      %v2019 = vpack.c.bf16 %v2000, %v1999
      %v2020 = vpack.c.bf16 %v2002, %v2001
      %v2021 = vpack.c.bf16 %v2004, %v2003
      %v2022 = vpack.c.bf16 %v2006, %v2005
      %s2023 = scalar_lea.vmem %s2, 64
      %v2024 = vld [vmem:[%s2023] sm:$0xf]
      %v2025 = vld [vmem:[%s2023 + $0x4] sm:$0xf]
      %v2026 = vld [vmem:[%s2023 + $0x8] sm:$0xf]
      %v2027 = vld [vmem:[%s2023 + $0xc] sm:$0xf]
      %v2028 = vld [vmem:[%s2023 + $0x10] sm:$0xf]
      %v2029 = vld [vmem:[%s2023 + $0x14] sm:$0xf]
      %v2030 = vld [vmem:[%s2023 + $0x18] sm:$0xf]
      %v2031 = vld [vmem:[%s2023 + $0x1c] sm:$0xf]
      %v2032 = vld [vmem:[%s2023 + $0x20] sm:$0xf]
      %v2033 = vld [vmem:[%s2023 + $0x24] sm:$0xf]
      %v2034 = vld [vmem:[%s2023 + $0x28] sm:$0xf]
      %v2035 = vld [vmem:[%s2023 + $0x2c] sm:$0xf]
      %v2036 = vld [vmem:[%s2023 + $0x30] sm:$0xf]
      %v2037 = vld [vmem:[%s2023 + $0x34] sm:$0xf]
      %v2038 = vld [vmem:[%s2023 + $0x38] sm:$0xf]
      %v2039 = vld [vmem:[%s2023 + $0x3c] sm:$0xf]
      %v2056 = vunpack.c.l.b16 %v2024
      %v2057 = vunpack.c.l.b16 %v2025
      %v2058 = vunpack.c.l.b16 %v2026
      %v2059 = vunpack.c.l.b16 %v2027
      %v2060 = vunpack.c.l.b16 %v2028
      %v2061 = vunpack.c.l.b16 %v2029
      %v2062 = vunpack.c.l.b16 %v2030
      %v2063 = vunpack.c.l.b16 %v2031
      %v2064 = vunpack.c.l.b16 %v2032
      %v2065 = vunpack.c.l.b16 %v2033
      %v2066 = vunpack.c.l.b16 %v2034
      %v2067 = vunpack.c.l.b16 %v2035
      %v2068 = vunpack.c.l.b16 %v2036
      %v2069 = vunpack.c.l.b16 %v2037
      %v2070 = vunpack.c.l.b16 %v2038
      %v2071 = vunpack.c.l.b16 %v2039
      %v2072 = vpack.c.b16 %v2057, %v2056
      %v2073 = vpack.c.b16 %v2059, %v2058
      %v2074 = vpack.c.b16 %v2061, %v2060
      %v2075 = vpack.c.b16 %v2063, %v2062
      %v2076 = vpack.c.b16 %v2065, %v2064
      %v2077 = vpack.c.b16 %v2067, %v2066
      %v2078 = vpack.c.b16 %v2069, %v2068
      %v2079 = vpack.c.b16 %v2071, %v2070
      %2088 = vmatprep.subr.bf16.mxu0 0
      %2089 = vmatpush1.bf16.msra.mxu0 %v2072
      %2090 = vmatprep.subr.bf16.mxu0 0
      %2091 = vmatpush1.bf16.msra.mxu0 %v2073
      %2092 = vmatprep.subr.bf16.mxu0 0
      %2093 = vmatpush1.bf16.msra.mxu0 %v2074
      %2094 = vmatprep.subr.bf16.mxu0 0
      %2095 = vmatpush1.bf16.msra.mxu0 %v2075
      %2096 = vmatprep.subr.bf16.mxu0 0
      %2097 = vmatpush1.bf16.msra.mxu0 %v2076
      %2098 = vmatprep.subr.bf16.mxu0 0
      %2099 = vmatpush1.bf16.msra.mxu0 %v2077
      %2100 = vmatprep.subr.bf16.mxu0 0
      %2101 = vmatpush1.bf16.msra.mxu0 %v2078
      %2102 = vmatprep.subr.bf16.mxu0 0
      %2103 = vmatpush1.bf16.msra.mxu0 %v2079
      %2104 = vmatprep.subr.bf16.mxu0 0
      %2105 = vmatpush1.bf16.msra.mxu0 0
      %2106 = vmatprep.subr.bf16.mxu0 0
      %2107 = vmatpush1.bf16.msra.mxu0 0
      %2108 = vmatprep.subr.bf16.mxu0 0
      %2109 = vmatpush1.bf16.msra.mxu0 0
      %2110 = vmatprep.subr.bf16.mxu0 0
      %2111 = vmatpush1.bf16.msra.mxu0 0
      %2112 = vmatprep.subr.bf16.mxu0 0
      %2113 = vmatpush1.bf16.msra.mxu0 0
      %2114 = vmatprep.subr.bf16.mxu0 0
      %2115 = vmatpush1.bf16.msra.mxu0 0
      %2116 = vmatprep.subr.bf16.mxu0 0
      %2117 = vmatpush1.bf16.msra.mxu0 0
      %2118 = vmatprep.subr.bf16.mxu0 0
      %2119 = vmatpush1.bf16.msra.mxu0 0
      %2120 = vmatprep.mubr.bf16.mxu0 0
      %2121 = vmatmul.mubr.bf16.gmra.mrb[0].mxu0 %v2007
      %v2122 = vpop.f32.mrb[0].mxu0
      %v2123 = vadd.f32 0.0, %v2122
      %v2124 = vpop.f32.mrb[0].mxu0
      %v2125 = vpop.f32.mrb[0].mxu0
      %v2126 = vadd.f32 0.0, %v2125
      %v2127 = vpop.f32.mrb[0].mxu0
      %2128 = vmatprep.mubr.bf16.mxu0 0
      %2129 = vmatmul.mubr.bf16.gmra.mrb[0].mxu0 %v2008
      %v2130 = vpop.f32.mrb[0].mxu0
      %v2131 = vadd.f32 0.0, %v2130
      %v2132 = vpop.f32.mrb[0].mxu0
      %v2133 = vpop.f32.mrb[0].mxu0
      %v2134 = vadd.f32 0.0, %v2133
      %v2135 = vpop.f32.mrb[0].mxu0
      %2136 = vmatprep.mubr.bf16.mxu0 0
      %2137 = vmatmul.mubr.bf16.gmra.mrb[0].mxu0 %v2009
      %v2138 = vpop.f32.mrb[0].mxu0
      %v2139 = vadd.f32 0.0, %v2138
      %v2140 = vpop.f32.mrb[0].mxu0
      %v2141 = vpop.f32.mrb[0].mxu0
      %v2142 = vadd.f32 0.0, %v2141
      %v2143 = vpop.f32.mrb[0].mxu0
      %2144 = vmatprep.mubr.bf16.mxu0 0
      %2145 = vmatmul.mubr.bf16.gmra.mrb[0].mxu0 %v2010
      %v2146 = vpop.f32.mrb[0].mxu0
      %v2147 = vadd.f32 0.0, %v2146
      %v2148 = vpop.f32.mrb[0].mxu0
      %v2149 = vpop.f32.mrb[0].mxu0
      %v2150 = vadd.f32 0.0, %v2149
      %v2151 = vpop.f32.mrb[0].mxu0
      %2152 = vmatprep.mubr.bf16.mxu0 0
      %2153 = vmatmul.mubr.bf16.gmra.mrb[0].mxu0 %v2011
      %v2154 = vpop.f32.mrb[0].mxu0
      %v2155 = vadd.f32 0.0, %v2154
      %v2156 = vpop.f32.mrb[0].mxu0
      %v2157 = vpop.f32.mrb[0].mxu0
      %v2158 = vadd.f32 0.0, %v2157
      %v2159 = vpop.f32.mrb[0].mxu0
      %2160 = vmatprep.mubr.bf16.mxu0 0
      %2161 = vmatmul.mubr.bf16.gmra.mrb[0].mxu0 %v2012
      %v2162 = vpop.f32.mrb[0].mxu0
      %v2163 = vadd.f32 0.0, %v2162
      %v2164 = vpop.f32.mrb[0].mxu0
      %v2165 = vpop.f32.mrb[0].mxu0
      %v2166 = vadd.f32 0.0, %v2165
      %v2167 = vpop.f32.mrb[0].mxu0
      %2168 = vmatprep.mubr.bf16.mxu0 0
      %2169 = vmatmul.mubr.bf16.gmra.mrb[0].mxu0 %v2013
      %v2170 = vpop.f32.mrb[0].mxu0
      %v2171 = vadd.f32 0.0, %v2170
      %v2172 = vpop.f32.mrb[0].mxu0
      %v2173 = vpop.f32.mrb[0].mxu0
      %v2174 = vadd.f32 0.0, %v2173
      %v2175 = vpop.f32.mrb[0].mxu0
      %2176 = vmatprep.mubr.bf16.mxu0 0
      %2177 = vmatmul.mubr.bf16.gmra.mrb[0].mxu0 %v2014
      %v2178 = vpop.f32.mrb[0].mxu0
      %v2179 = vadd.f32 0.0, %v2178
      %v2180 = vpop.f32.mrb[0].mxu0
      %v2181 = vpop.f32.mrb[0].mxu0
      %v2182 = vadd.f32 0.0, %v2181
      %v2183 = vpop.f32.mrb[0].mxu0
      %2184 = vmatprep.mubr.bf16.mxu0 0
      %2185 = vmatmul.mubr.bf16.gmra.mrb[0].mxu0 %v2015
      %v2186 = vpop.f32.mrb[0].mxu0
      %v2187 = vadd.f32 0.0, %v2186
      %v2188 = vpop.f32.mrb[0].mxu0
      %v2189 = vpop.f32.mrb[0].mxu0
      %v2190 = vadd.f32 0.0, %v2189
      %v2191 = vpop.f32.mrb[0].mxu0
      %2192 = vmatprep.mubr.bf16.mxu0 0
      %2193 = vmatmul.mubr.bf16.gmra.mrb[0].mxu0 %v2016
      %v2194 = vpop.f32.mrb[0].mxu0
      %v2195 = vadd.f32 0.0, %v2194
      %v2196 = vpop.f32.mrb[0].mxu0
      %v2197 = vpop.f32.mrb[0].mxu0
      %v2198 = vadd.f32 0.0, %v2197
      %v2199 = vpop.f32.mrb[0].mxu0
      %2200 = vmatprep.mubr.bf16.mxu0 0
      %2201 = vmatmul.mubr.bf16.gmra.mrb[0].mxu0 %v2017
      %v2202 = vpop.f32.mrb[0].mxu0
      %v2203 = vadd.f32 0.0, %v2202
      %v2204 = vpop.f32.mrb[0].mxu0
      %v2205 = vpop.f32.mrb[0].mxu0
      %v2206 = vadd.f32 0.0, %v2205
      %v2207 = vpop.f32.mrb[0].mxu0
      %2208 = vmatprep.mubr.bf16.mxu0 0
      %2209 = vmatmul.mubr.bf16.gmra.mrb[0].mxu0 %v2018
      %v2210 = vpop.f32.mrb[0].mxu0
      %v2211 = vadd.f32 0.0, %v2210
      %v2212 = vpop.f32.mrb[0].mxu0
      %v2213 = vpop.f32.mrb[0].mxu0
      %v2214 = vadd.f32 0.0, %v2213
      %v2215 = vpop.f32.mrb[0].mxu0
      %2216 = vmatprep.mubr.bf16.mxu0 0
      %2217 = vmatmul.mubr.bf16.gmra.mrb[0].mxu0 %v2019
      %v2218 = vpop.f32.mrb[0].mxu0
      %v2219 = vadd.f32 0.0, %v2218
      %v2220 = vpop.f32.mrb[0].mxu0
      %v2221 = vpop.f32.mrb[0].mxu0
      %v2222 = vadd.f32 0.0, %v2221
      %v2223 = vpop.f32.mrb[0].mxu0
      %2224 = vmatprep.mubr.bf16.mxu0 0
      %2225 = vmatmul.mubr.bf16.gmra.mrb[0].mxu0 %v2020
      %v2226 = vpop.f32.mrb[0].mxu0
      %v2227 = vadd.f32 0.0, %v2226
      %v2228 = vpop.f32.mrb[0].mxu0
      %v2229 = vpop.f32.mrb[0].mxu0
      %v2230 = vadd.f32 0.0, %v2229
      %v2231 = vpop.f32.mrb[0].mxu0
      %2232 = vmatprep.mubr.bf16.mxu0 0
      %2233 = vmatmul.mubr.bf16.gmra.mrb[0].mxu0 %v2021
      %v2234 = vpop.f32.mrb[0].mxu0
      %v2235 = vadd.f32 0.0, %v2234
      %v2236 = vpop.f32.mrb[0].mxu0
      %v2237 = vpop.f32.mrb[0].mxu0
      %v2238 = vadd.f32 0.0, %v2237
      %v2239 = vpop.f32.mrb[0].mxu0
      %2240 = vmatprep.mubr.bf16.mxu0 0
      %2241 = vmatmul.mubr.bf16.gmra.mrb[0].mxu0 %v2022
      %v2242 = vpop.f32.mrb[0].mxu0
      %v2243 = vadd.f32 0.0, %v2242
      %v2244 = vpop.f32.mrb[0].mxu0
      %v2245 = vpop.f32.mrb[0].mxu0
      %v2246 = vadd.f32 0.0, %v2245
      %v2247 = vpop.f32.mrb[0].mxu0
      %2248 = vdwg.mxu0
      %v2265 = vunpack.c.l.b16 %v1959
      %v2266 = vunpack.c.l.b16 %v1960
      %v2267 = vunpack.c.l.b16 %v1961
      %v2268 = vunpack.c.l.b16 %v1962
      %v2269 = vunpack.c.l.b16 %v1963
      %v2270 = vunpack.c.l.b16 %v1964
      %v2271 = vunpack.c.l.b16 %v1965
      %v2272 = vunpack.c.l.b16 %v1966
      %v2273 = vunpack.c.l.b16 %v1967
      %v2274 = vunpack.c.l.b16 %v1968
      %v2275 = vunpack.c.l.b16 %v1969
      %v2276 = vunpack.c.l.b16 %v1970
      %v2277 = vunpack.c.l.b16 %v1971
      %v2278 = vunpack.c.l.b16 %v1972
      %v2279 = vunpack.c.l.b16 %v1973
      %v2280 = vunpack.c.l.b16 %v1974
      %v2281 = vpack.c.b16 %v2266, %v2265
      %v2282 = vpack.c.b16 %v2268, %v2267
      %v2283 = vpack.c.b16 %v2270, %v2269
      %v2284 = vpack.c.b16 %v2272, %v2271
      %v2285 = vpack.c.b16 %v2274, %v2273
      %v2286 = vpack.c.b16 %v2276, %v2275
      %v2287 = vpack.c.b16 %v2278, %v2277
      %v2288 = vpack.c.b16 %v2280, %v2279
      %2297 = vmatprep.subr.bf16.mxu0 0
      %2298 = vmatpush1.bf16.msra.mxu0 %v2281
      %2299 = vmatprep.subr.bf16.mxu0 0
      %2300 = vmatpush1.bf16.msra.mxu0 %v2282
      %2301 = vmatprep.subr.bf16.mxu0 0
      %2302 = vmatpush1.bf16.msra.mxu0 %v2283
      %2303 = vmatprep.subr.bf16.mxu0 0
      %2304 = vmatpush1.bf16.msra.mxu0 %v2284
      %2305 = vmatprep.subr.bf16.mxu0 0
      %2306 = vmatpush1.bf16.msra.mxu0 %v2285
      %2307 = vmatprep.subr.bf16.mxu0 0
      %2308 = vmatpush1.bf16.msra.mxu0 %v2286
      %2309 = vmatprep.subr.bf16.mxu0 0
      %2310 = vmatpush1.bf16.msra.mxu0 %v2287
      %2311 = vmatprep.subr.bf16.mxu0 0
      %2312 = vmatpush1.bf16.msra.mxu0 %v2288
      %2313 = vmatprep.subr.bf16.mxu0 0
      %2314 = vmatpush1.bf16.msra.mxu0 0
      %2315 = vmatprep.subr.bf16.mxu0 0
      %2316 = vmatpush1.bf16.msra.mxu0 0
      %2317 = vmatprep.subr.bf16.mxu0 0
      %2318 = vmatpush1.bf16.msra.mxu0 0
      %2319 = vmatprep.subr.bf16.mxu0 0
      %2320 = vmatpush1.bf16.msra.mxu0 0
      %2321 = vmatprep.subr.bf16.mxu0 0
      %2322 = vmatpush1.bf16.msra.mxu0 0
      %2323 = vmatprep.subr.bf16.mxu0 0
      %2324 = vmatpush1.bf16.msra.mxu0 0
      %2325 = vmatprep.subr.bf16.mxu0 0
      %2326 = vmatpush1.bf16.msra.mxu0 0
      %2327 = vmatprep.subr.bf16.mxu0 0
      %2328 = vmatpush1.bf16.msra.mxu0 0
      %2329 = vmatprep.mubr.bf16.mxu0 0
      %2330 = vmatmul.mubr.bf16.gmra.mrb[0].mxu0 %v1943
      %v2331 = vpop.f32.mrb[0].mxu0
      %v2332 = vadd.f32 %v2123, %v2331
      %v2333 = vpop.f32.mrb[0].mxu0
      %v2334 = vpop.f32.mrb[0].mxu0
      %v2335 = vadd.f32 %v2126, %v2334
      %v2336 = vpop.f32.mrb[0].mxu0
      %2337 = vmatprep.mubr.bf16.mxu0 0
      %2338 = vmatmul.mubr.bf16.gmra.mrb[0].mxu0 %v1944
      %v2339 = vpop.f32.mrb[0].mxu0
      %v2340 = vadd.f32 %v2131, %v2339
      %v2341 = vpop.f32.mrb[0].mxu0
      %v2342 = vpop.f32.mrb[0].mxu0
      %v2343 = vadd.f32 %v2134, %v2342
      %v2344 = vpop.f32.mrb[0].mxu0
      %2345 = vmatprep.mubr.bf16.mxu0 0
      %2346 = vmatmul.mubr.bf16.gmra.mrb[0].mxu0 %v1945
      %v2347 = vpop.f32.mrb[0].mxu0
      %v2348 = vadd.f32 %v2139, %v2347
      %v2349 = vpop.f32.mrb[0].mxu0
      %v2350 = vpop.f32.mrb[0].mxu0
      %v2351 = vadd.f32 %v2142, %v2350
      %v2352 = vpop.f32.mrb[0].mxu0
      %2353 = vmatprep.mubr.bf16.mxu0 0
      %2354 = vmatmul.mubr.bf16.gmra.mrb[0].mxu0 %v1946
      %v2355 = vpop.f32.mrb[0].mxu0
      %v2356 = vadd.f32 %v2147, %v2355
      %v2357 = vpop.f32.mrb[0].mxu0
      %v2358 = vpop.f32.mrb[0].mxu0
      %v2359 = vadd.f32 %v2150, %v2358
      %v2360 = vpop.f32.mrb[0].mxu0
      %2361 = vmatprep.mubr.bf16.mxu0 0
      %2362 = vmatmul.mubr.bf16.gmra.mrb[0].mxu0 %v1947
      %v2363 = vpop.f32.mrb[0].mxu0
      %v2364 = vadd.f32 %v2155, %v2363
      %v2365 = vpop.f32.mrb[0].mxu0
      %v2366 = vpop.f32.mrb[0].mxu0
      %v2367 = vadd.f32 %v2158, %v2366
      %v2368 = vpop.f32.mrb[0].mxu0
      %2369 = vmatprep.mubr.bf16.mxu0 0
      %2370 = vmatmul.mubr.bf16.gmra.mrb[0].mxu0 %v1948
      %v2371 = vpop.f32.mrb[0].mxu0
      %v2372 = vadd.f32 %v2163, %v2371
      %v2373 = vpop.f32.mrb[0].mxu0
      %v2374 = vpop.f32.mrb[0].mxu0
      %v2375 = vadd.f32 %v2166, %v2374
      %v2376 = vpop.f32.mrb[0].mxu0
      %2377 = vmatprep.mubr.bf16.mxu0 0
      %2378 = vmatmul.mubr.bf16.gmra.mrb[0].mxu0 %v1949
      %v2379 = vpop.f32.mrb[0].mxu0
      %v2380 = vadd.f32 %v2171, %v2379
      %v2381 = vpop.f32.mrb[0].mxu0
      %v2382 = vpop.f32.mrb[0].mxu0
      %v2383 = vadd.f32 %v2174, %v2382
      %v2384 = vpop.f32.mrb[0].mxu0
      %2385 = vmatprep.mubr.bf16.mxu0 0
      %2386 = vmatmul.mubr.bf16.gmra.mrb[0].mxu0 %v1950
      %v2387 = vpop.f32.mrb[0].mxu0
      %v2388 = vadd.f32 %v2179, %v2387
      %v2389 = vpop.f32.mrb[0].mxu0
      %v2390 = vpop.f32.mrb[0].mxu0
      %v2391 = vadd.f32 %v2182, %v2390
      %v2392 = vpop.f32.mrb[0].mxu0
      %2393 = vmatprep.mubr.bf16.mxu0 0
      %2394 = vmatmul.mubr.bf16.gmra.mrb[0].mxu0 %v1951
      %v2395 = vpop.f32.mrb[0].mxu0
      %v2396 = vadd.f32 %v2187, %v2395
      %v2397 = vpop.f32.mrb[0].mxu0
      %v2398 = vpop.f32.mrb[0].mxu0
      %v2399 = vadd.f32 %v2190, %v2398
      %v2400 = vpop.f32.mrb[0].mxu0
      %2401 = vmatprep.mubr.bf16.mxu0 0
      %2402 = vmatmul.mubr.bf16.gmra.mrb[0].mxu0 %v1952
      %v2403 = vpop.f32.mrb[0].mxu0
      %v2404 = vadd.f32 %v2195, %v2403
      %v2405 = vpop.f32.mrb[0].mxu0
      %v2406 = vpop.f32.mrb[0].mxu0
      %v2407 = vadd.f32 %v2198, %v2406
      %v2408 = vpop.f32.mrb[0].mxu0
      %2409 = vmatprep.mubr.bf16.mxu0 0
      %2410 = vmatmul.mubr.bf16.gmra.mrb[0].mxu0 %v1953
      %v2411 = vpop.f32.mrb[0].mxu0
      %v2412 = vadd.f32 %v2203, %v2411
      %v2413 = vpop.f32.mrb[0].mxu0
      %v2414 = vpop.f32.mrb[0].mxu0
      %v2415 = vadd.f32 %v2206, %v2414
      %v2416 = vpop.f32.mrb[0].mxu0
      %2417 = vmatprep.mubr.bf16.mxu0 0
      %2418 = vmatmul.mubr.bf16.gmra.mrb[0].mxu0 %v1954
      %v2419 = vpop.f32.mrb[0].mxu0
      %v2420 = vadd.f32 %v2211, %v2419
      %v2421 = vpop.f32.mrb[0].mxu0
      %v2422 = vpop.f32.mrb[0].mxu0
      %v2423 = vadd.f32 %v2214, %v2422
      %v2424 = vpop.f32.mrb[0].mxu0
      %2425 = vmatprep.mubr.bf16.mxu0 0
      %2426 = vmatmul.mubr.bf16.gmra.mrb[0].mxu0 %v1955
      %v2427 = vpop.f32.mrb[0].mxu0
      %v2428 = vadd.f32 %v2219, %v2427
      %v2429 = vpop.f32.mrb[0].mxu0
      %v2430 = vpop.f32.mrb[0].mxu0
      %v2431 = vadd.f32 %v2222, %v2430
      %v2432 = vpop.f32.mrb[0].mxu0
      %2433 = vmatprep.mubr.bf16.mxu0 0
      %2434 = vmatmul.mubr.bf16.gmra.mrb[0].mxu0 %v1956
      %v2435 = vpop.f32.mrb[0].mxu0
      %v2436 = vadd.f32 %v2227, %v2435
      %v2437 = vpop.f32.mrb[0].mxu0
      %v2438 = vpop.f32.mrb[0].mxu0
      %v2439 = vadd.f32 %v2230, %v2438
      %v2440 = vpop.f32.mrb[0].mxu0
      %2441 = vmatprep.mubr.bf16.mxu0 0
      %2442 = vmatmul.mubr.bf16.gmra.mrb[0].mxu0 %v1957
      %v2443 = vpop.f32.mrb[0].mxu0
      %v2444 = vadd.f32 %v2235, %v2443
      %v2445 = vpop.f32.mrb[0].mxu0
      %v2446 = vpop.f32.mrb[0].mxu0
      %v2447 = vadd.f32 %v2238, %v2446
      %v2448 = vpop.f32.mrb[0].mxu0
      %2449 = vmatprep.mubr.bf16.mxu0 0
      %2450 = vmatmul.mubr.bf16.gmra.mrb[0].mxu0 %v1958
      %v2451 = vpop.f32.mrb[0].mxu0
      %v2452 = vadd.f32 %v2243, %v2451
      %v2453 = vpop.f32.mrb[0].mxu0
      %v2454 = vpop.f32.mrb[0].mxu0
      %v2455 = vadd.f32 %v2246, %v2454
      %v2456 = vpop.f32.mrb[0].mxu0
      %2457 = vdwg.mxu0
      %v2458 = vld [vmem:[#allocation3 + $0x2] sm:$0xff]
      %v2459 = vld [vmem:[#allocation3 + $0xa] sm:$0xff]
      %v2460 = vld [vmem:[#allocation3 + $0x1a] sm:$0xff]
      %v2461 = vld [vmem:[#allocation3 + $0x22] sm:$0xff]
      %v2462 = vld [vmem:[#allocation3 + $0x32] sm:$0xff]
      %v2463 = vld [vmem:[#allocation3 + $0x3a] sm:$0xff]
      %v2464 = vld [vmem:[#allocation3 + $0x4a] sm:$0xff]
      %v2465 = vld [vmem:[#allocation3 + $0x52] sm:$0xff]
      %v2466 = vld [vmem:[#allocation3 + $0x62] sm:$0xff]
      %v2467 = vld [vmem:[#allocation3 + $0x6a] sm:$0xff]
      %v2468 = vld [vmem:[#allocation3 + $0x7a] sm:$0xff]
      %v2469 = vld [vmem:[#allocation3 + $0x82] sm:$0xff]
      %v2470 = vld [vmem:[#allocation3 + $0x92] sm:$0xff]
      %v2471 = vld [vmem:[#allocation3 + $0x9a] sm:$0xff]
      %v2472 = vld [vmem:[#allocation3 + $0xaa] sm:$0xff]
      %v2473 = vld [vmem:[#allocation3 + $0xb2] sm:$0xff]
      %v2474 = vld [vmem:[#allocation3 + $0xc2] sm:$0xff]
      %v2475 = vld [vmem:[#allocation3 + $0xca] sm:$0xff]
      %v2476 = vld [vmem:[#allocation3 + $0xda] sm:$0xff]
      %v2477 = vld [vmem:[#allocation3 + $0xe2] sm:$0xff]
      %v2478 = vld [vmem:[#allocation3 + $0xf2] sm:$0xff]
      %v2479 = vld [vmem:[#allocation3 + $0xfa] sm:$0xff]
      %v2480 = vld [vmem:[#allocation3 + $0x10a] sm:$0xff]
      %v2481 = vld [vmem:[#allocation3 + $0x112] sm:$0xff]
      %v2482 = vld [vmem:[#allocation3 + $0x122] sm:$0xff]
      %v2483 = vld [vmem:[#allocation3 + $0x12a] sm:$0xff]
      %v2484 = vld [vmem:[#allocation3 + $0x13a] sm:$0xff]
      %v2485 = vld [vmem:[#allocation3 + $0x142] sm:$0xff]
      %v2486 = vld [vmem:[#allocation3 + $0x152] sm:$0xff]
      %v2487 = vld [vmem:[#allocation3 + $0x15a] sm:$0xff]
      %v2488 = vld [vmem:[#allocation3 + $0x16a] sm:$0xff]
      %v2489 = vld [vmem:[#allocation3 + $0x172] sm:$0xff]
      %v2490 = vpack.c.bf16 %v2459, %v2458
      %v2491 = vpack.c.bf16 %v2461, %v2460
      %v2492 = vpack.c.bf16 %v2463, %v2462
      %v2493 = vpack.c.bf16 %v2465, %v2464
      %v2494 = vpack.c.bf16 %v2467, %v2466
      %v2495 = vpack.c.bf16 %v2469, %v2468
      %v2496 = vpack.c.bf16 %v2471, %v2470
      %v2497 = vpack.c.bf16 %v2473, %v2472
      %v2498 = vpack.c.bf16 %v2475, %v2474
      %v2499 = vpack.c.bf16 %v2477, %v2476
      %v2500 = vpack.c.bf16 %v2479, %v2478
      %v2501 = vpack.c.bf16 %v2481, %v2480
      %v2502 = vpack.c.bf16 %v2483, %v2482
      %v2503 = vpack.c.bf16 %v2485, %v2484
      %v2504 = vpack.c.bf16 %v2487, %v2486
      %v2505 = vpack.c.bf16 %v2489, %v2488
      %s2506 = scalar_lea.vmem %s2, 128
      %v2507 = vld [vmem:[%s2506] sm:$0xf]
      %v2508 = vld [vmem:[%s2506 + $0x4] sm:$0xf]
      %v2509 = vld [vmem:[%s2506 + $0x8] sm:$0xf]
      %v2510 = vld [vmem:[%s2506 + $0xc] sm:$0xf]
      %v2511 = vld [vmem:[%s2506 + $0x10] sm:$0xf]
      %v2512 = vld [vmem:[%s2506 + $0x14] sm:$0xf]
      %v2513 = vld [vmem:[%s2506 + $0x18] sm:$0xf]
      %v2514 = vld [vmem:[%s2506 + $0x1c] sm:$0xf]
      %v2515 = vld [vmem:[%s2506 + $0x20] sm:$0xf]
      %v2516 = vld [vmem:[%s2506 + $0x24] sm:$0xf]
      %v2517 = vld [vmem:[%s2506 + $0x28] sm:$0xf]
      %v2518 = vld [vmem:[%s2506 + $0x2c] sm:$0xf]
      %v2519 = vld [vmem:[%s2506 + $0x30] sm:$0xf]
      %v2520 = vld [vmem:[%s2506 + $0x34] sm:$0xf]
      %v2521 = vld [vmem:[%s2506 + $0x38] sm:$0xf]
      %v2522 = vld [vmem:[%s2506 + $0x3c] sm:$0xf]
      %v2539 = vunpack.c.l.b16 %v2507
      %v2540 = vunpack.c.l.b16 %v2508
      %v2541 = vunpack.c.l.b16 %v2509
      %v2542 = vunpack.c.l.b16 %v2510
      %v2543 = vunpack.c.l.b16 %v2511
      %v2544 = vunpack.c.l.b16 %v2512
      %v2545 = vunpack.c.l.b16 %v2513
      %v2546 = vunpack.c.l.b16 %v2514
      %v2547 = vunpack.c.l.b16 %v2515
      %v2548 = vunpack.c.l.b16 %v2516
      %v2549 = vunpack.c.l.b16 %v2517
      %v2550 = vunpack.c.l.b16 %v2518
      %v2551 = vunpack.c.l.b16 %v2519
      %v2552 = vunpack.c.l.b16 %v2520
      %v2553 = vunpack.c.l.b16 %v2521
      %v2554 = vunpack.c.l.b16 %v2522
      %v2555 = vpack.c.b16 %v2540, %v2539
      %v2556 = vpack.c.b16 %v2542, %v2541
      %v2557 = vpack.c.b16 %v2544, %v2543
      %v2558 = vpack.c.b16 %v2546, %v2545
      %v2559 = vpack.c.b16 %v2548, %v2547
      %v2560 = vpack.c.b16 %v2550, %v2549
      %v2561 = vpack.c.b16 %v2552, %v2551
      %v2562 = vpack.c.b16 %v2554, %v2553
      %2571 = vmatprep.subr.bf16.mxu0 0
      %2572 = vmatpush1.bf16.msra.mxu0 %v2555
      %2573 = vmatprep.subr.bf16.mxu0 0
      %2574 = vmatpush1.bf16.msra.mxu0 %v2556
      %2575 = vmatprep.subr.bf16.mxu0 0
      %2576 = vmatpush1.bf16.msra.mxu0 %v2557
      %2577 = vmatprep.subr.bf16.mxu0 0
      %2578 = vmatpush1.bf16.msra.mxu0 %v2558
      %2579 = vmatprep.subr.bf16.mxu0 0
      %2580 = vmatpush1.bf16.msra.mxu0 %v2559
      %2581 = vmatprep.subr.bf16.mxu0 0
      %2582 = vmatpush1.bf16.msra.mxu0 %v2560
      %2583 = vmatprep.subr.bf16.mxu0 0
      %2584 = vmatpush1.bf16.msra.mxu0 %v2561
      %2585 = vmatprep.subr.bf16.mxu0 0
      %2586 = vmatpush1.bf16.msra.mxu0 %v2562
      %2587 = vmatprep.subr.bf16.mxu0 0
      %2588 = vmatpush1.bf16.msra.mxu0 0
      %2589 = vmatprep.subr.bf16.mxu0 0
      %2590 = vmatpush1.bf16.msra.mxu0 0
      %2591 = vmatprep.subr.bf16.mxu0 0
      %2592 = vmatpush1.bf16.msra.mxu0 0
      %2593 = vmatprep.subr.bf16.mxu0 0
      %2594 = vmatpush1.bf16.msra.mxu0 0
      %2595 = vmatprep.subr.bf16.mxu0 0
      %2596 = vmatpush1.bf16.msra.mxu0 0
      %2597 = vmatprep.subr.bf16.mxu0 0
      %2598 = vmatpush1.bf16.msra.mxu0 0
      %2599 = vmatprep.subr.bf16.mxu0 0
      %2600 = vmatpush1.bf16.msra.mxu0 0
      %2601 = vmatprep.subr.bf16.mxu0 0
      %2602 = vmatpush1.bf16.msra.mxu0 0
      %2603 = vmatprep.mubr.bf16.mxu0 0
      %2604 = vmatmul.mubr.bf16.gmra.mrb[0].mxu0 %v2490
      %v2605 = vpop.f32.mrb[0].mxu0
      %v2606 = vadd.f32 0.0, %v2605
      %v2607 = vpop.f32.mrb[0].mxu0
      %v2608 = vpop.f32.mrb[0].mxu0
      %v2609 = vadd.f32 0.0, %v2608
      %v2610 = vpop.f32.mrb[0].mxu0
      %2611 = vmatprep.mubr.bf16.mxu0 0
      %2612 = vmatmul.mubr.bf16.gmra.mrb[0].mxu0 %v2491
      %v2613 = vpop.f32.mrb[0].mxu0
      %v2614 = vadd.f32 0.0, %v2613
      %v2615 = vpop.f32.mrb[0].mxu0
      %v2616 = vpop.f32.mrb[0].mxu0
      %v2617 = vadd.f32 0.0, %v2616
      %v2618 = vpop.f32.mrb[0].mxu0
      %2619 = vmatprep.mubr.bf16.mxu0 0
      %2620 = vmatmul.mubr.bf16.gmra.mrb[0].mxu0 %v2492
      %v2621 = vpop.f32.mrb[0].mxu0
      %v2622 = vadd.f32 0.0, %v2621
      %v2623 = vpop.f32.mrb[0].mxu0
      %v2624 = vpop.f32.mrb[0].mxu0
      %v2625 = vadd.f32 0.0, %v2624
      %v2626 = vpop.f32.mrb[0].mxu0
      %2627 = vmatprep.mubr.bf16.mxu0 0
      %2628 = vmatmul.mubr.bf16.gmra.mrb[0].mxu0 %v2493
      %v2629 = vpop.f32.mrb[0].mxu0
      %v2630 = vadd.f32 0.0, %v2629
      %v2631 = vpop.f32.mrb[0].mxu0
      %v2632 = vpop.f32.mrb[0].mxu0
      %v2633 = vadd.f32 0.0, %v2632
      %v2634 = vpop.f32.mrb[0].mxu0
      %2635 = vmatprep.mubr.bf16.mxu0 0
      %2636 = vmatmul.mubr.bf16.gmra.mrb[0].mxu0 %v2494
      %v2637 = vpop.f32.mrb[0].mxu0
      %v2638 = vadd.f32 0.0, %v2637
      %v2639 = vpop.f32.mrb[0].mxu0
      %v2640 = vpop.f32.mrb[0].mxu0
      %v2641 = vadd.f32 0.0, %v2640
      %v2642 = vpop.f32.mrb[0].mxu0
      %2643 = vmatprep.mubr.bf16.mxu0 0
      %2644 = vmatmul.mubr.bf16.gmra.mrb[0].mxu0 %v2495
      %v2645 = vpop.f32.mrb[0].mxu0
      %v2646 = vadd.f32 0.0, %v2645
      %v2647 = vpop.f32.mrb[0].mxu0
      %v2648 = vpop.f32.mrb[0].mxu0
      %v2649 = vadd.f32 0.0, %v2648
      %v2650 = vpop.f32.mrb[0].mxu0
      %2651 = vmatprep.mubr.bf16.mxu0 0
      %2652 = vmatmul.mubr.bf16.gmra.mrb[0].mxu0 %v2496
      %v2653 = vpop.f32.mrb[0].mxu0
      %v2654 = vadd.f32 0.0, %v2653
      %v2655 = vpop.f32.mrb[0].mxu0
      %v2656 = vpop.f32.mrb[0].mxu0
      %v2657 = vadd.f32 0.0, %v2656
      %v2658 = vpop.f32.mrb[0].mxu0
      %2659 = vmatprep.mubr.bf16.mxu0 0
      %2660 = vmatmul.mubr.bf16.gmra.mrb[0].mxu0 %v2497
      %v2661 = vpop.f32.mrb[0].mxu0
      %v2662 = vadd.f32 0.0, %v2661
      %v2663 = vpop.f32.mrb[0].mxu0
      %v2664 = vpop.f32.mrb[0].mxu0
      %v2665 = vadd.f32 0.0, %v2664
      %v2666 = vpop.f32.mrb[0].mxu0
      %2667 = vmatprep.mubr.bf16.mxu0 0
      %2668 = vmatmul.mubr.bf16.gmra.mrb[0].mxu0 %v2498
      %v2669 = vpop.f32.mrb[0].mxu0
      %v2670 = vadd.f32 0.0, %v2669
      %v2671 = vpop.f32.mrb[0].mxu0
      %v2672 = vpop.f32.mrb[0].mxu0
      %v2673 = vadd.f32 0.0, %v2672
      %v2674 = vpop.f32.mrb[0].mxu0
      %2675 = vmatprep.mubr.bf16.mxu0 0
      %2676 = vmatmul.mubr.bf16.gmra.mrb[0].mxu0 %v2499
      %v2677 = vpop.f32.mrb[0].mxu0
      %v2678 = vadd.f32 0.0, %v2677
      %v2679 = vpop.f32.mrb[0].mxu0
      %v2680 = vpop.f32.mrb[0].mxu0
      %v2681 = vadd.f32 0.0, %v2680
      %v2682 = vpop.f32.mrb[0].mxu0
      %2683 = vmatprep.mubr.bf16.mxu0 0
      %2684 = vmatmul.mubr.bf16.gmra.mrb[0].mxu0 %v2500
      %v2685 = vpop.f32.mrb[0].mxu0
      %v2686 = vadd.f32 0.0, %v2685
      %v2687 = vpop.f32.mrb[0].mxu0
      %v2688 = vpop.f32.mrb[0].mxu0
      %v2689 = vadd.f32 0.0, %v2688
      %v2690 = vpop.f32.mrb[0].mxu0
      %2691 = vmatprep.mubr.bf16.mxu0 0
      %2692 = vmatmul.mubr.bf16.gmra.mrb[0].mxu0 %v2501
      %v2693 = vpop.f32.mrb[0].mxu0
      %v2694 = vadd.f32 0.0, %v2693
      %v2695 = vpop.f32.mrb[0].mxu0
      %v2696 = vpop.f32.mrb[0].mxu0
      %v2697 = vadd.f32 0.0, %v2696
      %v2698 = vpop.f32.mrb[0].mxu0
      %2699 = vmatprep.mubr.bf16.mxu0 0
      %2700 = vmatmul.mubr.bf16.gmra.mrb[0].mxu0 %v2502
      %v2701 = vpop.f32.mrb[0].mxu0
      %v2702 = vadd.f32 0.0, %v2701
      %v2703 = vpop.f32.mrb[0].mxu0
      %v2704 = vpop.f32.mrb[0].mxu0
      %v2705 = vadd.f32 0.0, %v2704
      %v2706 = vpop.f32.mrb[0].mxu0
      %2707 = vmatprep.mubr.bf16.mxu0 0
      %2708 = vmatmul.mubr.bf16.gmra.mrb[0].mxu0 %v2503
      %v2709 = vpop.f32.mrb[0].mxu0
      %v2710 = vadd.f32 0.0, %v2709
      %v2711 = vpop.f32.mrb[0].mxu0
      %v2712 = vpop.f32.mrb[0].mxu0
      %v2713 = vadd.f32 0.0, %v2712
      %v2714 = vpop.f32.mrb[0].mxu0
      %2715 = vmatprep.mubr.bf16.mxu0 0
      %2716 = vmatmul.mubr.bf16.gmra.mrb[0].mxu0 %v2504
      %v2717 = vpop.f32.mrb[0].mxu0
      %v2718 = vadd.f32 0.0, %v2717
      %v2719 = vpop.f32.mrb[0].mxu0
      %v2720 = vpop.f32.mrb[0].mxu0
      %v2721 = vadd.f32 0.0, %v2720
      %v2722 = vpop.f32.mrb[0].mxu0
      %2723 = vmatprep.mubr.bf16.mxu0 0
      %2724 = vmatmul.mubr.bf16.gmra.mrb[0].mxu0 %v2505
      %v2725 = vpop.f32.mrb[0].mxu0
      %v2726 = vadd.f32 0.0, %v2725
      %v2727 = vpop.f32.mrb[0].mxu0
      %v2728 = vpop.f32.mrb[0].mxu0
      %v2729 = vadd.f32 0.0, %v2728
      %v2730 = vpop.f32.mrb[0].mxu0
      %2731 = vdwg.mxu0
      %v2732 = vadd.f32 %v2332, %v2606
      %v2733 = vadd.f32 %v2335, %v2609
      %v2734 = vadd.f32 %v2340, %v2614
      %v2735 = vadd.f32 %v2343, %v2617
      %v2736 = vadd.f32 %v2348, %v2622
      %v2737 = vadd.f32 %v2351, %v2625
      %v2738 = vadd.f32 %v2356, %v2630
      %v2739 = vadd.f32 %v2359, %v2633
      %v2740 = vadd.f32 %v2364, %v2638
      %v2741 = vadd.f32 %v2367, %v2641
      %v2742 = vadd.f32 %v2372, %v2646
      %v2743 = vadd.f32 %v2375, %v2649
      %v2744 = vadd.f32 %v2380, %v2654
      %v2745 = vadd.f32 %v2383, %v2657
      %v2746 = vadd.f32 %v2388, %v2662
      %v2747 = vadd.f32 %v2391, %v2665
      %v2748 = vadd.f32 %v2396, %v2670
      %v2749 = vadd.f32 %v2399, %v2673
      %v2750 = vadd.f32 %v2404, %v2678
      %v2751 = vadd.f32 %v2407, %v2681
      %v2752 = vadd.f32 %v2412, %v2686
      %v2753 = vadd.f32 %v2415, %v2689
      %v2754 = vadd.f32 %v2420, %v2694
      %v2755 = vadd.f32 %v2423, %v2697
      %v2756 = vadd.f32 %v2428, %v2702
      %v2757 = vadd.f32 %v2431, %v2705
      %v2758 = vadd.f32 %v2436, %v2710
      %v2759 = vadd.f32 %v2439, %v2713
      %v2760 = vadd.f32 %v2444, %v2718
      %v2761 = vadd.f32 %v2447, %v2721
      %v2762 = vadd.f32 %v2452, %v2726
      %v2763 = vadd.f32 %v2455, %v2729
      %v2764 = vld [vmem:[%s1846] sm:$0xff]
      %v2765 = vld [vmem:[%s1846 + $0x8] sm:$0xff]
      %v2766 = vld [vmem:[%s1846 + $0x18] sm:$0xff]
      %v2767 = vld [vmem:[%s1846 + $0x20] sm:$0xff]
      %v2768 = vld [vmem:[%s1846 + $0x30] sm:$0xff]
      %v2769 = vld [vmem:[%s1846 + $0x38] sm:$0xff]
      %v2770 = vld [vmem:[%s1846 + $0x48] sm:$0xff]
      %v2771 = vld [vmem:[%s1846 + $0x50] sm:$0xff]
      %v2772 = vld [vmem:[%s1846 + $0x60] sm:$0xff]
      %v2773 = vld [vmem:[%s1846 + $0x68] sm:$0xff]
      %v2774 = vld [vmem:[%s1846 + $0x78] sm:$0xff]
      %v2775 = vld [vmem:[%s1846 + $0x80] sm:$0xff]
      %v2776 = vld [vmem:[%s1846 + $0x90] sm:$0xff]
      %v2777 = vld [vmem:[%s1846 + $0x98] sm:$0xff]
      %v2778 = vld [vmem:[%s1846 + $0xa8] sm:$0xff]
      %v2779 = vld [vmem:[%s1846 + $0xb0] sm:$0xff]
      %v2780 = vld [vmem:[%s1846 + $0xc0] sm:$0xff]
      %v2781 = vld [vmem:[%s1846 + $0xc8] sm:$0xff]
      %v2782 = vld [vmem:[%s1846 + $0xd8] sm:$0xff]
      %v2783 = vld [vmem:[%s1846 + $0xe0] sm:$0xff]
      %v2784 = vld [vmem:[%s1846 + $0xf0] sm:$0xff]
      %v2785 = vld [vmem:[%s1846 + $0xf8] sm:$0xff]
      %v2786 = vld [vmem:[%s1846 + $0x108] sm:$0xff]
      %v2787 = vld [vmem:[%s1846 + $0x110] sm:$0xff]
      %v2788 = vld [vmem:[%s1846 + $0x120] sm:$0xff]
      %v2789 = vld [vmem:[%s1846 + $0x128] sm:$0xff]
      %v2790 = vld [vmem:[%s1846 + $0x138] sm:$0xff]
      %v2791 = vld [vmem:[%s1846 + $0x140] sm:$0xff]
      %v2792 = vld [vmem:[%s1846 + $0x150] sm:$0xff]
      %v2793 = vld [vmem:[%s1846 + $0x158] sm:$0xff]
      %v2794 = vld [vmem:[%s1846 + $0x168] sm:$0xff]
      %v2795 = vld [vmem:[%s1846 + $0x170] sm:$0xff]
      %v2796 = vpack.c.bf16 %v2765, %v2764
      %v2797 = vpack.c.bf16 %v2767, %v2766
      %v2798 = vpack.c.bf16 %v2769, %v2768
      %v2799 = vpack.c.bf16 %v2771, %v2770
      %v2800 = vpack.c.bf16 %v2773, %v2772
      %v2801 = vpack.c.bf16 %v2775, %v2774
      %v2802 = vpack.c.bf16 %v2777, %v2776
      %v2803 = vpack.c.bf16 %v2779, %v2778
      %v2804 = vpack.c.bf16 %v2781, %v2780
      %v2805 = vpack.c.bf16 %v2783, %v2782
      %v2806 = vpack.c.bf16 %v2785, %v2784
      %v2807 = vpack.c.bf16 %v2787, %v2786
      %v2808 = vpack.c.bf16 %v2789, %v2788
      %v2809 = vpack.c.bf16 %v2791, %v2790
      %v2810 = vpack.c.bf16 %v2793, %v2792
      %v2811 = vpack.c.bf16 %v2795, %v2794
      %s2812 = scalar_lea.vmem %s2, 192
      %v2813 = vld [vmem:[%s2812] sm:$0xf]
      %v2814 = vld [vmem:[%s2812 + $0x4] sm:$0xf]
      %v2815 = vld [vmem:[%s2812 + $0x8] sm:$0xf]
      %v2816 = vld [vmem:[%s2812 + $0xc] sm:$0xf]
      %v2817 = vld [vmem:[%s2812 + $0x10] sm:$0xf]
      %v2818 = vld [vmem:[%s2812 + $0x14] sm:$0xf]
      %v2819 = vld [vmem:[%s2812 + $0x18] sm:$0xf]
      %v2820 = vld [vmem:[%s2812 + $0x1c] sm:$0xf]
      %v2821 = vld [vmem:[%s2812 + $0x20] sm:$0xf]
      %v2822 = vld [vmem:[%s2812 + $0x24] sm:$0xf]
      %v2823 = vld [vmem:[%s2812 + $0x28] sm:$0xf]
      %v2824 = vld [vmem:[%s2812 + $0x2c] sm:$0xf]
      %v2825 = vld [vmem:[%s2812 + $0x30] sm:$0xf]
      %v2826 = vld [vmem:[%s2812 + $0x34] sm:$0xf]
      %v2827 = vld [vmem:[%s2812 + $0x38] sm:$0xf]
      %v2828 = vld [vmem:[%s2812 + $0x3c] sm:$0xf]
      %v2845 = vunpack.c.l.b16 %v2813
      %v2846 = vunpack.c.l.b16 %v2814
      %v2847 = vunpack.c.l.b16 %v2815
      %v2848 = vunpack.c.l.b16 %v2816
      %v2849 = vunpack.c.l.b16 %v2817
      %v2850 = vunpack.c.l.b16 %v2818
      %v2851 = vunpack.c.l.b16 %v2819
      %v2852 = vunpack.c.l.b16 %v2820
      %v2853 = vunpack.c.l.b16 %v2821
      %v2854 = vunpack.c.l.b16 %v2822
      %v2855 = vunpack.c.l.b16 %v2823
      %v2856 = vunpack.c.l.b16 %v2824
      %v2857 = vunpack.c.l.b16 %v2825
      %v2858 = vunpack.c.l.b16 %v2826
      %v2859 = vunpack.c.l.b16 %v2827
      %v2860 = vunpack.c.l.b16 %v2828
      %v2861 = vpack.c.b16 %v2846, %v2845
      %v2862 = vpack.c.b16 %v2848, %v2847
      %v2863 = vpack.c.b16 %v2850, %v2849
      %v2864 = vpack.c.b16 %v2852, %v2851
      %v2865 = vpack.c.b16 %v2854, %v2853
      %v2866 = vpack.c.b16 %v2856, %v2855
      %v2867 = vpack.c.b16 %v2858, %v2857
      %v2868 = vpack.c.b16 %v2860, %v2859
      %2877 = vmatprep.subr.bf16.mxu0 0
      %2878 = vmatpush1.bf16.msra.mxu0 %v2861
      %2879 = vmatprep.subr.bf16.mxu0 0
      %2880 = vmatpush1.bf16.msra.mxu0 %v2862
      %2881 = vmatprep.subr.bf16.mxu0 0
      %2882 = vmatpush1.bf16.msra.mxu0 %v2863
      %2883 = vmatprep.subr.bf16.mxu0 0
      %2884 = vmatpush1.bf16.msra.mxu0 %v2864
      %2885 = vmatprep.subr.bf16.mxu0 0
      %2886 = vmatpush1.bf16.msra.mxu0 %v2865
      %2887 = vmatprep.subr.bf16.mxu0 0
      %2888 = vmatpush1.bf16.msra.mxu0 %v2866
      %2889 = vmatprep.subr.bf16.mxu0 0
      %2890 = vmatpush1.bf16.msra.mxu0 %v2867
      %2891 = vmatprep.subr.bf16.mxu0 0
      %2892 = vmatpush1.bf16.msra.mxu0 %v2868
      %2893 = vmatprep.subr.bf16.mxu0 0
      %2894 = vmatpush1.bf16.msra.mxu0 0
      %2895 = vmatprep.subr.bf16.mxu0 0
      %2896 = vmatpush1.bf16.msra.mxu0 0
      %2897 = vmatprep.subr.bf16.mxu0 0
      %2898 = vmatpush1.bf16.msra.mxu0 0
      %2899 = vmatprep.subr.bf16.mxu0 0
      %2900 = vmatpush1.bf16.msra.mxu0 0
      %2901 = vmatprep.subr.bf16.mxu0 0
      %2902 = vmatpush1.bf16.msra.mxu0 0
      %2903 = vmatprep.subr.bf16.mxu0 0
      %2904 = vmatpush1.bf16.msra.mxu0 0
      %2905 = vmatprep.subr.bf16.mxu0 0
      %2906 = vmatpush1.bf16.msra.mxu0 0
      %2907 = vmatprep.subr.bf16.mxu0 0
      %2908 = vmatpush1.bf16.msra.mxu0 0
      %2909 = vmatprep.mubr.bf16.mxu0 0
      %2910 = vmatmul.mubr.bf16.gmra.mrb[0].mxu0 %v2796
      %v2911 = vpop.f32.mrb[0].mxu0
      %v2912 = vadd.f32 0.0, %v2911
      %v2913 = vpop.f32.mrb[0].mxu0
      %v2914 = vpop.f32.mrb[0].mxu0
      %v2915 = vadd.f32 0.0, %v2914
      %v2916 = vpop.f32.mrb[0].mxu0
      %2917 = vmatprep.mubr.bf16.mxu0 0
      %2918 = vmatmul.mubr.bf16.gmra.mrb[0].mxu0 %v2797
      %v2919 = vpop.f32.mrb[0].mxu0
      %v2920 = vadd.f32 0.0, %v2919
      %v2921 = vpop.f32.mrb[0].mxu0
      %v2922 = vpop.f32.mrb[0].mxu0
      %v2923 = vadd.f32 0.0, %v2922
      %v2924 = vpop.f32.mrb[0].mxu0
      %2925 = vmatprep.mubr.bf16.mxu0 0
      %2926 = vmatmul.mubr.bf16.gmra.mrb[0].mxu0 %v2798
      %v2927 = vpop.f32.mrb[0].mxu0
      %v2928 = vadd.f32 0.0, %v2927
      %v2929 = vpop.f32.mrb[0].mxu0
      %v2930 = vpop.f32.mrb[0].mxu0
      %v2931 = vadd.f32 0.0, %v2930
      %v2932 = vpop.f32.mrb[0].mxu0
      %2933 = vmatprep.mubr.bf16.mxu0 0
      %2934 = vmatmul.mubr.bf16.gmra.mrb[0].mxu0 %v2799
      %v2935 = vpop.f32.mrb[0].mxu0
      %v2936 = vadd.f32 0.0, %v2935
      %v2937 = vpop.f32.mrb[0].mxu0
      %v2938 = vpop.f32.mrb[0].mxu0
      %v2939 = vadd.f32 0.0, %v2938
      %v2940 = vpop.f32.mrb[0].mxu0
      %2941 = vmatprep.mubr.bf16.mxu0 0
      %2942 = vmatmul.mubr.bf16.gmra.mrb[0].mxu0 %v2800
      %v2943 = vpop.f32.mrb[0].mxu0
      %v2944 = vadd.f32 0.0, %v2943
      %v2945 = vpop.f32.mrb[0].mxu0
      %v2946 = vpop.f32.mrb[0].mxu0
      %v2947 = vadd.f32 0.0, %v2946
      %v2948 = vpop.f32.mrb[0].mxu0
      %2949 = vmatprep.mubr.bf16.mxu0 0
      %2950 = vmatmul.mubr.bf16.gmra.mrb[0].mxu0 %v2801
      %v2951 = vpop.f32.mrb[0].mxu0
      %v2952 = vadd.f32 0.0, %v2951
      %v2953 = vpop.f32.mrb[0].mxu0
      %v2954 = vpop.f32.mrb[0].mxu0
      %v2955 = vadd.f32 0.0, %v2954
      %v2956 = vpop.f32.mrb[0].mxu0
      %2957 = vmatprep.mubr.bf16.mxu0 0
      %2958 = vmatmul.mubr.bf16.gmra.mrb[0].mxu0 %v2802
      %v2959 = vpop.f32.mrb[0].mxu0
      %v2960 = vadd.f32 0.0, %v2959
      %v2961 = vpop.f32.mrb[0].mxu0
      %v2962 = vpop.f32.mrb[0].mxu0
      %v2963 = vadd.f32 0.0, %v2962
      %v2964 = vpop.f32.mrb[0].mxu0
      %2965 = vmatprep.mubr.bf16.mxu0 0
      %2966 = vmatmul.mubr.bf16.gmra.mrb[0].mxu0 %v2803
      %v2967 = vpop.f32.mrb[0].mxu0
      %v2968 = vadd.f32 0.0, %v2967
      %v2969 = vpop.f32.mrb[0].mxu0
      %v2970 = vpop.f32.mrb[0].mxu0
      %v2971 = vadd.f32 0.0, %v2970
      %v2972 = vpop.f32.mrb[0].mxu0
      %2973 = vmatprep.mubr.bf16.mxu0 0
      %2974 = vmatmul.mubr.bf16.gmra.mrb[0].mxu0 %v2804
      %v2975 = vpop.f32.mrb[0].mxu0
      %v2976 = vadd.f32 0.0, %v2975
      %v2977 = vpop.f32.mrb[0].mxu0
      %v2978 = vpop.f32.mrb[0].mxu0
      %v2979 = vadd.f32 0.0, %v2978
      %v2980 = vpop.f32.mrb[0].mxu0
      %2981 = vmatprep.mubr.bf16.mxu0 0
      %2982 = vmatmul.mubr.bf16.gmra.mrb[0].mxu0 %v2805
      %v2983 = vpop.f32.mrb[0].mxu0
      %v2984 = vadd.f32 0.0, %v2983
      %v2985 = vpop.f32.mrb[0].mxu0
      %v2986 = vpop.f32.mrb[0].mxu0
      %v2987 = vadd.f32 0.0, %v2986
      %v2988 = vpop.f32.mrb[0].mxu0
      %2989 = vmatprep.mubr.bf16.mxu0 0
      %2990 = vmatmul.mubr.bf16.gmra.mrb[0].mxu0 %v2806
      %v2991 = vpop.f32.mrb[0].mxu0
      %v2992 = vadd.f32 0.0, %v2991
      %v2993 = vpop.f32.mrb[0].mxu0
      %v2994 = vpop.f32.mrb[0].mxu0
      %v2995 = vadd.f32 0.0, %v2994
      %v2996 = vpop.f32.mrb[0].mxu0
      %2997 = vmatprep.mubr.bf16.mxu0 0
      %2998 = vmatmul.mubr.bf16.gmra.mrb[0].mxu0 %v2807
      %v2999 = vpop.f32.mrb[0].mxu0
      %v3000 = vadd.f32 0.0, %v2999
      %v3001 = vpop.f32.mrb[0].mxu0
      %v3002 = vpop.f32.mrb[0].mxu0
      %v3003 = vadd.f32 0.0, %v3002
      %v3004 = vpop.f32.mrb[0].mxu0
      %3005 = vmatprep.mubr.bf16.mxu0 0
      %3006 = vmatmul.mubr.bf16.gmra.mrb[0].mxu0 %v2808
      %v3007 = vpop.f32.mrb[0].mxu0
      %v3008 = vadd.f32 0.0, %v3007
      %v3009 = vpop.f32.mrb[0].mxu0
      %v3010 = vpop.f32.mrb[0].mxu0
      %v3011 = vadd.f32 0.0, %v3010
      %v3012 = vpop.f32.mrb[0].mxu0
      %3013 = vmatprep.mubr.bf16.mxu0 0
      %3014 = vmatmul.mubr.bf16.gmra.mrb[0].mxu0 %v2809
      %v3015 = vpop.f32.mrb[0].mxu0
      %v3016 = vadd.f32 0.0, %v3015
      %v3017 = vpop.f32.mrb[0].mxu0
      %v3018 = vpop.f32.mrb[0].mxu0
      %v3019 = vadd.f32 0.0, %v3018
      %v3020 = vpop.f32.mrb[0].mxu0
      %3021 = vmatprep.mubr.bf16.mxu0 0
      %3022 = vmatmul.mubr.bf16.gmra.mrb[0].mxu0 %v2810
      %v3023 = vpop.f32.mrb[0].mxu0
      %v3024 = vadd.f32 0.0, %v3023
      %v3025 = vpop.f32.mrb[0].mxu0
      %v3026 = vpop.f32.mrb[0].mxu0
      %v3027 = vadd.f32 0.0, %v3026
      %v3028 = vpop.f32.mrb[0].mxu0
      %3029 = vmatprep.mubr.bf16.mxu0 0
      %3030 = vmatmul.mubr.bf16.gmra.mrb[0].mxu0 %v2811
      %v3031 = vpop.f32.mrb[0].mxu0
      %v3032 = vadd.f32 0.0, %v3031
      %v3033 = vpop.f32.mrb[0].mxu0
      %v3034 = vpop.f32.mrb[0].mxu0
      %v3035 = vadd.f32 0.0, %v3034
      %v3036 = vpop.f32.mrb[0].mxu0
      %3037 = vdwg.mxu0
      %v3038 = vadd.f32 %v2732, %v2912
      %v3039 = vadd.f32 %v2733, %v2915
      %v3040 = vadd.f32 %v2734, %v2920
      %v3041 = vadd.f32 %v2735, %v2923
      %v3042 = vadd.f32 %v2736, %v2928
      %v3043 = vadd.f32 %v2737, %v2931
      %v3044 = vadd.f32 %v2738, %v2936
      %v3045 = vadd.f32 %v2739, %v2939
      %v3046 = vadd.f32 %v2740, %v2944
      %v3047 = vadd.f32 %v2741, %v2947
      %v3048 = vadd.f32 %v2742, %v2952
      %v3049 = vadd.f32 %v2743, %v2955
      %v3050 = vadd.f32 %v2744, %v2960
      %v3051 = vadd.f32 %v2745, %v2963
      %v3052 = vadd.f32 %v2746, %v2968
      %v3053 = vadd.f32 %v2747, %v2971
      %v3054 = vadd.f32 %v2748, %v2976
      %v3055 = vadd.f32 %v2749, %v2979
      %v3056 = vadd.f32 %v2750, %v2984
      %v3057 = vadd.f32 %v2751, %v2987
      %v3058 = vadd.f32 %v2752, %v2992
      %v3059 = vadd.f32 %v2753, %v2995
      %v3060 = vadd.f32 %v2754, %v3000
      %v3061 = vadd.f32 %v2755, %v3003
      %v3062 = vadd.f32 %v2756, %v3008
      %v3063 = vadd.f32 %v2757, %v3011
      %v3064 = vadd.f32 %v2758, %v3016
      %v3065 = vadd.f32 %v2759, %v3019
      %v3066 = vadd.f32 %v2760, %v3024
      %v3067 = vadd.f32 %v2761, %v3027
      %v3068 = vadd.f32 %v2762, %v3032
      %v3069 = vadd.f32 %v2763, %v3035
      %v3070 = vld [vmem:[%s1846 + $0x1] sm:$0xff]
      %v3071 = vld [vmem:[%s1846 + $0x9] sm:$0xff]
      %v3072 = vld [vmem:[%s1846 + $0x19] sm:$0xff]
      %v3073 = vld [vmem:[%s1846 + $0x21] sm:$0xff]
      %v3074 = vld [vmem:[%s1846 + $0x31] sm:$0xff]
      %v3075 = vld [vmem:[%s1846 + $0x39] sm:$0xff]
      %v3076 = vld [vmem:[%s1846 + $0x49] sm:$0xff]
      %v3077 = vld [vmem:[%s1846 + $0x51] sm:$0xff]
      %v3078 = vld [vmem:[%s1846 + $0x61] sm:$0xff]
      %v3079 = vld [vmem:[%s1846 + $0x69] sm:$0xff]
      %v3080 = vld [vmem:[%s1846 + $0x79] sm:$0xff]
      %v3081 = vld [vmem:[%s1846 + $0x81] sm:$0xff]
      %v3082 = vld [vmem:[%s1846 + $0x91] sm:$0xff]
      %v3083 = vld [vmem:[%s1846 + $0x99] sm:$0xff]
      %v3084 = vld [vmem:[%s1846 + $0xa9] sm:$0xff]
      %v3085 = vld [vmem:[%s1846 + $0xb1] sm:$0xff]
      %v3086 = vld [vmem:[%s1846 + $0xc1] sm:$0xff]
      %v3087 = vld [vmem:[%s1846 + $0xc9] sm:$0xff]
      %v3088 = vld [vmem:[%s1846 + $0xd9] sm:$0xff]
      %v3089 = vld [vmem:[%s1846 + $0xe1] sm:$0xff]
      %v3090 = vld [vmem:[%s1846 + $0xf1] sm:$0xff]
      %v3091 = vld [vmem:[%s1846 + $0xf9] sm:$0xff]
      %v3092 = vld [vmem:[%s1846 + $0x109] sm:$0xff]
      %v3093 = vld [vmem:[%s1846 + $0x111] sm:$0xff]
      %v3094 = vld [vmem:[%s1846 + $0x121] sm:$0xff]
      %v3095 = vld [vmem:[%s1846 + $0x129] sm:$0xff]
      %v3096 = vld [vmem:[%s1846 + $0x139] sm:$0xff]
      %v3097 = vld [vmem:[%s1846 + $0x141] sm:$0xff]
      %v3098 = vld [vmem:[%s1846 + $0x151] sm:$0xff]
      %v3099 = vld [vmem:[%s1846 + $0x159] sm:$0xff]
      %v3100 = vld [vmem:[%s1846 + $0x169] sm:$0xff]
      %v3101 = vld [vmem:[%s1846 + $0x171] sm:$0xff]
      %v3102 = vpack.c.bf16 %v3071, %v3070
      %v3103 = vpack.c.bf16 %v3073, %v3072
      %v3104 = vpack.c.bf16 %v3075, %v3074
      %v3105 = vpack.c.bf16 %v3077, %v3076
      %v3106 = vpack.c.bf16 %v3079, %v3078
      %v3107 = vpack.c.bf16 %v3081, %v3080
      %v3108 = vpack.c.bf16 %v3083, %v3082
      %v3109 = vpack.c.bf16 %v3085, %v3084
      %v3110 = vpack.c.bf16 %v3087, %v3086
      %v3111 = vpack.c.bf16 %v3089, %v3088
      %v3112 = vpack.c.bf16 %v3091, %v3090
      %v3113 = vpack.c.bf16 %v3093, %v3092
      %v3114 = vpack.c.bf16 %v3095, %v3094
      %v3115 = vpack.c.bf16 %v3097, %v3096
      %v3116 = vpack.c.bf16 %v3099, %v3098
      %v3117 = vpack.c.bf16 %v3101, %v3100
      %s3118 = scalar_lea.vmem %s2, 256
      %v3119 = vld [vmem:[%s3118] sm:$0xf]
      %v3120 = vld [vmem:[%s3118 + $0x4] sm:$0xf]
      %v3121 = vld [vmem:[%s3118 + $0x8] sm:$0xf]
      %v3122 = vld [vmem:[%s3118 + $0xc] sm:$0xf]
      %v3123 = vld [vmem:[%s3118 + $0x10] sm:$0xf]
      %v3124 = vld [vmem:[%s3118 + $0x14] sm:$0xf]
      %v3125 = vld [vmem:[%s3118 + $0x18] sm:$0xf]
      %v3126 = vld [vmem:[%s3118 + $0x1c] sm:$0xf]
      %v3127 = vld [vmem:[%s3118 + $0x20] sm:$0xf]
      %v3128 = vld [vmem:[%s3118 + $0x24] sm:$0xf]
      %v3129 = vld [vmem:[%s3118 + $0x28] sm:$0xf]
      %v3130 = vld [vmem:[%s3118 + $0x2c] sm:$0xf]
      %v3131 = vld [vmem:[%s3118 + $0x30] sm:$0xf]
      %v3132 = vld [vmem:[%s3118 + $0x34] sm:$0xf]
      %v3133 = vld [vmem:[%s3118 + $0x38] sm:$0xf]
      %v3134 = vld [vmem:[%s3118 + $0x3c] sm:$0xf]
      %v3151 = vunpack.c.l.b16 %v3119
      %v3152 = vunpack.c.l.b16 %v3120
      %v3153 = vunpack.c.l.b16 %v3121
      %v3154 = vunpack.c.l.b16 %v3122
      %v3155 = vunpack.c.l.b16 %v3123
      %v3156 = vunpack.c.l.b16 %v3124
      %v3157 = vunpack.c.l.b16 %v3125
      %v3158 = vunpack.c.l.b16 %v3126
      %v3159 = vunpack.c.l.b16 %v3127
      %v3160 = vunpack.c.l.b16 %v3128
      %v3161 = vunpack.c.l.b16 %v3129
      %v3162 = vunpack.c.l.b16 %v3130
      %v3163 = vunpack.c.l.b16 %v3131
      %v3164 = vunpack.c.l.b16 %v3132
      %v3165 = vunpack.c.l.b16 %v3133
      %v3166 = vunpack.c.l.b16 %v3134
      %v3167 = vpack.c.b16 %v3152, %v3151
      %v3168 = vpack.c.b16 %v3154, %v3153
      %v3169 = vpack.c.b16 %v3156, %v3155
      %v3170 = vpack.c.b16 %v3158, %v3157
      %v3171 = vpack.c.b16 %v3160, %v3159
      %v3172 = vpack.c.b16 %v3162, %v3161
      %v3173 = vpack.c.b16 %v3164, %v3163
      %v3174 = vpack.c.b16 %v3166, %v3165
      %3183 = vmatprep.subr.bf16.mxu0 0
      %3184 = vmatpush1.bf16.msra.mxu0 %v3167
      %3185 = vmatprep.subr.bf16.mxu0 0
      %3186 = vmatpush1.bf16.msra.mxu0 %v3168
      %3187 = vmatprep.subr.bf16.mxu0 0
      %3188 = vmatpush1.bf16.msra.mxu0 %v3169
      %3189 = vmatprep.subr.bf16.mxu0 0
      %3190 = vmatpush1.bf16.msra.mxu0 %v3170
      %3191 = vmatprep.subr.bf16.mxu0 0
      %3192 = vmatpush1.bf16.msra.mxu0 %v3171
      %3193 = vmatprep.subr.bf16.mxu0 0
      %3194 = vmatpush1.bf16.msra.mxu0 %v3172
      %3195 = vmatprep.subr.bf16.mxu0 0
      %3196 = vmatpush1.bf16.msra.mxu0 %v3173
      %3197 = vmatprep.subr.bf16.mxu0 0
      %3198 = vmatpush1.bf16.msra.mxu0 %v3174
      %3199 = vmatprep.subr.bf16.mxu0 0
      %3200 = vmatpush1.bf16.msra.mxu0 0
      %3201 = vmatprep.subr.bf16.mxu0 0
      %3202 = vmatpush1.bf16.msra.mxu0 0
      %3203 = vmatprep.subr.bf16.mxu0 0
      %3204 = vmatpush1.bf16.msra.mxu0 0
      %3205 = vmatprep.subr.bf16.mxu0 0
      %3206 = vmatpush1.bf16.msra.mxu0 0
      %3207 = vmatprep.subr.bf16.mxu0 0
      %3208 = vmatpush1.bf16.msra.mxu0 0
      %3209 = vmatprep.subr.bf16.mxu0 0
      %3210 = vmatpush1.bf16.msra.mxu0 0
      %3211 = vmatprep.subr.bf16.mxu0 0
      %3212 = vmatpush1.bf16.msra.mxu0 0
      %3213 = vmatprep.subr.bf16.mxu0 0
      %3214 = vmatpush1.bf16.msra.mxu0 0
      %3215 = vmatprep.mubr.bf16.mxu0 0
      %3216 = vmatmul.mubr.bf16.gmra.mrb[0].mxu0 %v3102
      %v3217 = vpop.f32.mrb[0].mxu0
      %v3218 = vadd.f32 0.0, %v3217
      %v3219 = vpop.f32.mrb[0].mxu0
      %v3220 = vpop.f32.mrb[0].mxu0
      %v3221 = vadd.f32 0.0, %v3220
      %v3222 = vpop.f32.mrb[0].mxu0
      %3223 = vmatprep.mubr.bf16.mxu0 0
      %3224 = vmatmul.mubr.bf16.gmra.mrb[0].mxu0 %v3103
      %v3225 = vpop.f32.mrb[0].mxu0
      %v3226 = vadd.f32 0.0, %v3225
      %v3227 = vpop.f32.mrb[0].mxu0
      %v3228 = vpop.f32.mrb[0].mxu0
      %v3229 = vadd.f32 0.0, %v3228
      %v3230 = vpop.f32.mrb[0].mxu0
      %3231 = vmatprep.mubr.bf16.mxu0 0
      %3232 = vmatmul.mubr.bf16.gmra.mrb[0].mxu0 %v3104
      %v3233 = vpop.f32.mrb[0].mxu0
      %v3234 = vadd.f32 0.0, %v3233
      %v3235 = vpop.f32.mrb[0].mxu0
      %v3236 = vpop.f32.mrb[0].mxu0
      %v3237 = vadd.f32 0.0, %v3236
      %v3238 = vpop.f32.mrb[0].mxu0
      %3239 = vmatprep.mubr.bf16.mxu0 0
      %3240 = vmatmul.mubr.bf16.gmra.mrb[0].mxu0 %v3105
      %v3241 = vpop.f32.mrb[0].mxu0
      %v3242 = vadd.f32 0.0, %v3241
      %v3243 = vpop.f32.mrb[0].mxu0
      %v3244 = vpop.f32.mrb[0].mxu0
      %v3245 = vadd.f32 0.0, %v3244
      %v3246 = vpop.f32.mrb[0].mxu0
      %3247 = vmatprep.mubr.bf16.mxu0 0
      %3248 = vmatmul.mubr.bf16.gmra.mrb[0].mxu0 %v3106
      %v3249 = vpop.f32.mrb[0].mxu0
      %v3250 = vadd.f32 0.0, %v3249
      %v3251 = vpop.f32.mrb[0].mxu0
      %v3252 = vpop.f32.mrb[0].mxu0
      %v3253 = vadd.f32 0.0, %v3252
      %v3254 = vpop.f32.mrb[0].mxu0
      %3255 = vmatprep.mubr.bf16.mxu0 0
      %3256 = vmatmul.mubr.bf16.gmra.mrb[0].mxu0 %v3107
      %v3257 = vpop.f32.mrb[0].mxu0
      %v3258 = vadd.f32 0.0, %v3257
      %v3259 = vpop.f32.mrb[0].mxu0
      %v3260 = vpop.f32.mrb[0].mxu0
      %v3261 = vadd.f32 0.0, %v3260
      %v3262 = vpop.f32.mrb[0].mxu0
      %3263 = vmatprep.mubr.bf16.mxu0 0
      %3264 = vmatmul.mubr.bf16.gmra.mrb[0].mxu0 %v3108
      %v3265 = vpop.f32.mrb[0].mxu0
      %v3266 = vadd.f32 0.0, %v3265
      %v3267 = vpop.f32.mrb[0].mxu0
      %v3268 = vpop.f32.mrb[0].mxu0
      %v3269 = vadd.f32 0.0, %v3268
      %v3270 = vpop.f32.mrb[0].mxu0
      %3271 = vmatprep.mubr.bf16.mxu0 0
      %3272 = vmatmul.mubr.bf16.gmra.mrb[0].mxu0 %v3109
      %v3273 = vpop.f32.mrb[0].mxu0
      %v3274 = vadd.f32 0.0, %v3273
      %v3275 = vpop.f32.mrb[0].mxu0
      %v3276 = vpop.f32.mrb[0].mxu0
      %v3277 = vadd.f32 0.0, %v3276
      %v3278 = vpop.f32.mrb[0].mxu0
      %3279 = vmatprep.mubr.bf16.mxu0 0
      %3280 = vmatmul.mubr.bf16.gmra.mrb[0].mxu0 %v3110
      %v3281 = vpop.f32.mrb[0].mxu0
      %v3282 = vadd.f32 0.0, %v3281
      %v3283 = vpop.f32.mrb[0].mxu0
      %v3284 = vpop.f32.mrb[0].mxu0
      %v3285 = vadd.f32 0.0, %v3284
      %v3286 = vpop.f32.mrb[0].mxu0
      %3287 = vmatprep.mubr.bf16.mxu0 0
      %3288 = vmatmul.mubr.bf16.gmra.mrb[0].mxu0 %v3111
      %v3289 = vpop.f32.mrb[0].mxu0
      %v3290 = vadd.f32 0.0, %v3289
      %v3291 = vpop.f32.mrb[0].mxu0
      %v3292 = vpop.f32.mrb[0].mxu0
      %v3293 = vadd.f32 0.0, %v3292
      %v3294 = vpop.f32.mrb[0].mxu0
      %3295 = vmatprep.mubr.bf16.mxu0 0
      %3296 = vmatmul.mubr.bf16.gmra.mrb[0].mxu0 %v3112
      %v3297 = vpop.f32.mrb[0].mxu0
      %v3298 = vadd.f32 0.0, %v3297
      %v3299 = vpop.f32.mrb[0].mxu0
      %v3300 = vpop.f32.mrb[0].mxu0
      %v3301 = vadd.f32 0.0, %v3300
      %v3302 = vpop.f32.mrb[0].mxu0
      %3303 = vmatprep.mubr.bf16.mxu0 0
      %3304 = vmatmul.mubr.bf16.gmra.mrb[0].mxu0 %v3113
      %v3305 = vpop.f32.mrb[0].mxu0
      %v3306 = vadd.f32 0.0, %v3305
      %v3307 = vpop.f32.mrb[0].mxu0
      %v3308 = vpop.f32.mrb[0].mxu0
      %v3309 = vadd.f32 0.0, %v3308
      %v3310 = vpop.f32.mrb[0].mxu0
      %3311 = vmatprep.mubr.bf16.mxu0 0
      %3312 = vmatmul.mubr.bf16.gmra.mrb[0].mxu0 %v3114
      %v3313 = vpop.f32.mrb[0].mxu0
      %v3314 = vadd.f32 0.0, %v3313
      %v3315 = vpop.f32.mrb[0].mxu0
      %v3316 = vpop.f32.mrb[0].mxu0
      %v3317 = vadd.f32 0.0, %v3316
      %v3318 = vpop.f32.mrb[0].mxu0
      %3319 = vmatprep.mubr.bf16.mxu0 0
      %3320 = vmatmul.mubr.bf16.gmra.mrb[0].mxu0 %v3115
      %v3321 = vpop.f32.mrb[0].mxu0
      %v3322 = vadd.f32 0.0, %v3321
      %v3323 = vpop.f32.mrb[0].mxu0
      %v3324 = vpop.f32.mrb[0].mxu0
      %v3325 = vadd.f32 0.0, %v3324
      %v3326 = vpop.f32.mrb[0].mxu0
      %3327 = vmatprep.mubr.bf16.mxu0 0
      %3328 = vmatmul.mubr.bf16.gmra.mrb[0].mxu0 %v3116
      %v3329 = vpop.f32.mrb[0].mxu0
      %v3330 = vadd.f32 0.0, %v3329
      %v3331 = vpop.f32.mrb[0].mxu0
      %v3332 = vpop.f32.mrb[0].mxu0
      %v3333 = vadd.f32 0.0, %v3332
      %v3334 = vpop.f32.mrb[0].mxu0
      %3335 = vmatprep.mubr.bf16.mxu0 0
      %3336 = vmatmul.mubr.bf16.gmra.mrb[0].mxu0 %v3117
      %v3337 = vpop.f32.mrb[0].mxu0
      %v3338 = vadd.f32 0.0, %v3337
      %v3339 = vpop.f32.mrb[0].mxu0
      %v3340 = vpop.f32.mrb[0].mxu0
      %v3341 = vadd.f32 0.0, %v3340
      %v3342 = vpop.f32.mrb[0].mxu0
      %3343 = vdwg.mxu0
      %v3344 = vadd.f32 %v3038, %v3218
      %v3345 = vadd.f32 %v3039, %v3221
      %v3346 = vadd.f32 %v3040, %v3226
      %v3347 = vadd.f32 %v3041, %v3229
      %v3348 = vadd.f32 %v3042, %v3234
      %v3349 = vadd.f32 %v3043, %v3237
      %v3350 = vadd.f32 %v3044, %v3242
      %v3351 = vadd.f32 %v3045, %v3245
      %v3352 = vadd.f32 %v3046, %v3250
      %v3353 = vadd.f32 %v3047, %v3253
      %v3354 = vadd.f32 %v3048, %v3258
      %v3355 = vadd.f32 %v3049, %v3261
      %v3356 = vadd.f32 %v3050, %v3266
      %v3357 = vadd.f32 %v3051, %v3269
      %v3358 = vadd.f32 %v3052, %v3274
      %v3359 = vadd.f32 %v3053, %v3277
      %v3360 = vadd.f32 %v3054, %v3282
      %v3361 = vadd.f32 %v3055, %v3285
      %v3362 = vadd.f32 %v3056, %v3290
      %v3363 = vadd.f32 %v3057, %v3293
      %v3364 = vadd.f32 %v3058, %v3298
      %v3365 = vadd.f32 %v3059, %v3301
      %v3366 = vadd.f32 %v3060, %v3306
      %v3367 = vadd.f32 %v3061, %v3309
      %v3368 = vadd.f32 %v3062, %v3314
      %v3369 = vadd.f32 %v3063, %v3317
      %v3370 = vadd.f32 %v3064, %v3322
      %v3371 = vadd.f32 %v3065, %v3325
      %v3372 = vadd.f32 %v3066, %v3330
      %v3373 = vadd.f32 %v3067, %v3333
      %v3374 = vadd.f32 %v3068, %v3338
      %v3375 = vadd.f32 %v3069, %v3341
      %v3376 = vld [vmem:[%s1846 + $0x2] sm:$0xff]
      %v3377 = vld [vmem:[%s1846 + $0xa] sm:$0xff]
      %v3378 = vld [vmem:[%s1846 + $0x1a] sm:$0xff]
      %v3379 = vld [vmem:[%s1846 + $0x22] sm:$0xff]
      %v3380 = vld [vmem:[%s1846 + $0x32] sm:$0xff]
      %v3381 = vld [vmem:[%s1846 + $0x3a] sm:$0xff]
      %v3382 = vld [vmem:[%s1846 + $0x4a] sm:$0xff]
      %v3383 = vld [vmem:[%s1846 + $0x52] sm:$0xff]
      %v3384 = vld [vmem:[%s1846 + $0x62] sm:$0xff]
      %v3385 = vld [vmem:[%s1846 + $0x6a] sm:$0xff]
      %v3386 = vld [vmem:[%s1846 + $0x7a] sm:$0xff]
      %v3387 = vld [vmem:[%s1846 + $0x82] sm:$0xff]
      %v3388 = vld [vmem:[%s1846 + $0x92] sm:$0xff]
      %v3389 = vld [vmem:[%s1846 + $0x9a] sm:$0xff]
      %v3390 = vld [vmem:[%s1846 + $0xaa] sm:$0xff]
      %v3391 = vld [vmem:[%s1846 + $0xb2] sm:$0xff]
      %v3392 = vld [vmem:[%s1846 + $0xc2] sm:$0xff]
      %v3393 = vld [vmem:[%s1846 + $0xca] sm:$0xff]
      %v3394 = vld [vmem:[%s1846 + $0xda] sm:$0xff]
      %v3395 = vld [vmem:[%s1846 + $0xe2] sm:$0xff]
      %v3396 = vld [vmem:[%s1846 + $0xf2] sm:$0xff]
      %v3397 = vld [vmem:[%s1846 + $0xfa] sm:$0xff]
      %v3398 = vld [vmem:[%s1846 + $0x10a] sm:$0xff]
      %v3399 = vld [vmem:[%s1846 + $0x112] sm:$0xff]
      %v3400 = vld [vmem:[%s1846 + $0x122] sm:$0xff]
      %v3401 = vld [vmem:[%s1846 + $0x12a] sm:$0xff]
      %v3402 = vld [vmem:[%s1846 + $0x13a] sm:$0xff]
      %v3403 = vld [vmem:[%s1846 + $0x142] sm:$0xff]
      %v3404 = vld [vmem:[%s1846 + $0x152] sm:$0xff]
      %v3405 = vld [vmem:[%s1846 + $0x15a] sm:$0xff]
      %v3406 = vld [vmem:[%s1846 + $0x16a] sm:$0xff]
      %v3407 = vld [vmem:[%s1846 + $0x172] sm:$0xff]
      %v3408 = vpack.c.bf16 %v3377, %v3376
      %v3409 = vpack.c.bf16 %v3379, %v3378
      %v3410 = vpack.c.bf16 %v3381, %v3380
      %v3411 = vpack.c.bf16 %v3383, %v3382
      %v3412 = vpack.c.bf16 %v3385, %v3384
      %v3413 = vpack.c.bf16 %v3387, %v3386
      %v3414 = vpack.c.bf16 %v3389, %v3388
      %v3415 = vpack.c.bf16 %v3391, %v3390
      %v3416 = vpack.c.bf16 %v3393, %v3392
      %v3417 = vpack.c.bf16 %v3395, %v3394
      %v3418 = vpack.c.bf16 %v3397, %v3396
      %v3419 = vpack.c.bf16 %v3399, %v3398
      %v3420 = vpack.c.bf16 %v3401, %v3400
      %v3421 = vpack.c.bf16 %v3403, %v3402
      %v3422 = vpack.c.bf16 %v3405, %v3404
      %v3423 = vpack.c.bf16 %v3407, %v3406
      %s3424 = scalar_lea.vmem %s2, 320
      %v3425 = vld [vmem:[%s3424] sm:$0xf]
      %v3426 = vld [vmem:[%s3424 + $0x4] sm:$0xf]
      %v3427 = vld [vmem:[%s3424 + $0x8] sm:$0xf]
      %v3428 = vld [vmem:[%s3424 + $0xc] sm:$0xf]
      %v3429 = vld [vmem:[%s3424 + $0x10] sm:$0xf]
      %v3430 = vld [vmem:[%s3424 + $0x14] sm:$0xf]
      %v3431 = vld [vmem:[%s3424 + $0x18] sm:$0xf]
      %v3432 = vld [vmem:[%s3424 + $0x1c] sm:$0xf]
      %v3433 = vld [vmem:[%s3424 + $0x20] sm:$0xf]
      %v3434 = vld [vmem:[%s3424 + $0x24] sm:$0xf]
      %v3435 = vld [vmem:[%s3424 + $0x28] sm:$0xf]
      %v3436 = vld [vmem:[%s3424 + $0x2c] sm:$0xf]
      %v3437 = vld [vmem:[%s3424 + $0x30] sm:$0xf]
      %v3438 = vld [vmem:[%s3424 + $0x34] sm:$0xf]
      %v3439 = vld [vmem:[%s3424 + $0x38] sm:$0xf]
      %v3440 = vld [vmem:[%s3424 + $0x3c] sm:$0xf]
      %v3457 = vunpack.c.l.b16 %v3425
      %v3458 = vunpack.c.l.b16 %v3426
      %v3459 = vunpack.c.l.b16 %v3427
      %v3460 = vunpack.c.l.b16 %v3428
      %v3461 = vunpack.c.l.b16 %v3429
      %v3462 = vunpack.c.l.b16 %v3430
      %v3463 = vunpack.c.l.b16 %v3431
      %v3464 = vunpack.c.l.b16 %v3432
      %v3465 = vunpack.c.l.b16 %v3433
      %v3466 = vunpack.c.l.b16 %v3434
      %v3467 = vunpack.c.l.b16 %v3435
      %v3468 = vunpack.c.l.b16 %v3436
      %v3469 = vunpack.c.l.b16 %v3437
      %v3470 = vunpack.c.l.b16 %v3438
      %v3471 = vunpack.c.l.b16 %v3439
      %v3472 = vunpack.c.l.b16 %v3440
      %v3473 = vpack.c.b16 %v3458, %v3457
      %v3474 = vpack.c.b16 %v3460, %v3459
      %v3475 = vpack.c.b16 %v3462, %v3461
      %v3476 = vpack.c.b16 %v3464, %v3463
      %v3477 = vpack.c.b16 %v3466, %v3465
      %v3478 = vpack.c.b16 %v3468, %v3467
      %v3479 = vpack.c.b16 %v3470, %v3469
      %v3480 = vpack.c.b16 %v3472, %v3471
      %3489 = vmatprep.subr.bf16.mxu0 0
      %3490 = vmatpush1.bf16.msra.mxu0 %v3473
      %3491 = vmatprep.subr.bf16.mxu0 0
      %3492 = vmatpush1.bf16.msra.mxu0 %v3474
      %3493 = vmatprep.subr.bf16.mxu0 0
      %3494 = vmatpush1.bf16.msra.mxu0 %v3475
      %3495 = vmatprep.subr.bf16.mxu0 0
      %3496 = vmatpush1.bf16.msra.mxu0 %v3476
      %3497 = vmatprep.subr.bf16.mxu0 0
      %3498 = vmatpush1.bf16.msra.mxu0 %v3477
      %3499 = vmatprep.subr.bf16.mxu0 0
      %3500 = vmatpush1.bf16.msra.mxu0 %v3478
      %3501 = vmatprep.subr.bf16.mxu0 0
      %3502 = vmatpush1.bf16.msra.mxu0 %v3479
      %3503 = vmatprep.subr.bf16.mxu0 0
      %3504 = vmatpush1.bf16.msra.mxu0 %v3480
      %3505 = vmatprep.subr.bf16.mxu0 0
      %3506 = vmatpush1.bf16.msra.mxu0 0
      %3507 = vmatprep.subr.bf16.mxu0 0
      %3508 = vmatpush1.bf16.msra.mxu0 0
      %3509 = vmatprep.subr.bf16.mxu0 0
      %3510 = vmatpush1.bf16.msra.mxu0 0
      %3511 = vmatprep.subr.bf16.mxu0 0
      %3512 = vmatpush1.bf16.msra.mxu0 0
      %3513 = vmatprep.subr.bf16.mxu0 0
      %3514 = vmatpush1.bf16.msra.mxu0 0
      %3515 = vmatprep.subr.bf16.mxu0 0
      %3516 = vmatpush1.bf16.msra.mxu0 0
      %3517 = vmatprep.subr.bf16.mxu0 0
      %3518 = vmatpush1.bf16.msra.mxu0 0
      %3519 = vmatprep.subr.bf16.mxu0 0
      %3520 = vmatpush1.bf16.msra.mxu0 0
      %3521 = vmatprep.mubr.bf16.mxu0 0
      %3522 = vmatmul.mubr.bf16.gmra.mrb[0].mxu0 %v3408
      %v3523 = vpop.f32.mrb[0].mxu0
      %v3524 = vadd.f32 0.0, %v3523
      %v3525 = vpop.f32.mrb[0].mxu0
      %v3526 = vpop.f32.mrb[0].mxu0
      %v3527 = vadd.f32 0.0, %v3526
      %v3528 = vpop.f32.mrb[0].mxu0
      %3529 = vmatprep.mubr.bf16.mxu0 0
      %3530 = vmatmul.mubr.bf16.gmra.mrb[0].mxu0 %v3409
      %v3531 = vpop.f32.mrb[0].mxu0
      %v3532 = vadd.f32 0.0, %v3531
      %v3533 = vpop.f32.mrb[0].mxu0
      %v3534 = vpop.f32.mrb[0].mxu0
      %v3535 = vadd.f32 0.0, %v3534
      %v3536 = vpop.f32.mrb[0].mxu0
      %3537 = vmatprep.mubr.bf16.mxu0 0
      %3538 = vmatmul.mubr.bf16.gmra.mrb[0].mxu0 %v3410
      %v3539 = vpop.f32.mrb[0].mxu0
      %v3540 = vadd.f32 0.0, %v3539
      %v3541 = vpop.f32.mrb[0].mxu0
      %v3542 = vpop.f32.mrb[0].mxu0
      %v3543 = vadd.f32 0.0, %v3542
      %v3544 = vpop.f32.mrb[0].mxu0
      %3545 = vmatprep.mubr.bf16.mxu0 0
      %3546 = vmatmul.mubr.bf16.gmra.mrb[0].mxu0 %v3411
      %v3547 = vpop.f32.mrb[0].mxu0
      %v3548 = vadd.f32 0.0, %v3547
      %v3549 = vpop.f32.mrb[0].mxu0
      %v3550 = vpop.f32.mrb[0].mxu0
      %v3551 = vadd.f32 0.0, %v3550
      %v3552 = vpop.f32.mrb[0].mxu0
      %3553 = vmatprep.mubr.bf16.mxu0 0
      %3554 = vmatmul.mubr.bf16.gmra.mrb[0].mxu0 %v3412
      %v3555 = vpop.f32.mrb[0].mxu0
      %v3556 = vadd.f32 0.0, %v3555
      %v3557 = vpop.f32.mrb[0].mxu0
      %v3558 = vpop.f32.mrb[0].mxu0
      %v3559 = vadd.f32 0.0, %v3558
      %v3560 = vpop.f32.mrb[0].mxu0
      %3561 = vmatprep.mubr.bf16.mxu0 0
      %3562 = vmatmul.mubr.bf16.gmra.mrb[0].mxu0 %v3413
      %v3563 = vpop.f32.mrb[0].mxu0
      %v3564 = vadd.f32 0.0, %v3563
      %v3565 = vpop.f32.mrb[0].mxu0
      %v3566 = vpop.f32.mrb[0].mxu0
      %v3567 = vadd.f32 0.0, %v3566
      %v3568 = vpop.f32.mrb[0].mxu0
      %3569 = vmatprep.mubr.bf16.mxu0 0
      %3570 = vmatmul.mubr.bf16.gmra.mrb[0].mxu0 %v3414
      %v3571 = vpop.f32.mrb[0].mxu0
      %v3572 = vadd.f32 0.0, %v3571
      %v3573 = vpop.f32.mrb[0].mxu0
      %v3574 = vpop.f32.mrb[0].mxu0
      %v3575 = vadd.f32 0.0, %v3574
      %v3576 = vpop.f32.mrb[0].mxu0
      %3577 = vmatprep.mubr.bf16.mxu0 0
      %3578 = vmatmul.mubr.bf16.gmra.mrb[0].mxu0 %v3415
      %v3579 = vpop.f32.mrb[0].mxu0
      %v3580 = vadd.f32 0.0, %v3579
      %v3581 = vpop.f32.mrb[0].mxu0
      %v3582 = vpop.f32.mrb[0].mxu0
      %v3583 = vadd.f32 0.0, %v3582
      %v3584 = vpop.f32.mrb[0].mxu0
      %3585 = vmatprep.mubr.bf16.mxu0 0
      %3586 = vmatmul.mubr.bf16.gmra.mrb[0].mxu0 %v3416
      %v3587 = vpop.f32.mrb[0].mxu0
      %v3588 = vadd.f32 0.0, %v3587
      %v3589 = vpop.f32.mrb[0].mxu0
      %v3590 = vpop.f32.mrb[0].mxu0
      %v3591 = vadd.f32 0.0, %v3590
      %v3592 = vpop.f32.mrb[0].mxu0
      %3593 = vmatprep.mubr.bf16.mxu0 0
      %3594 = vmatmul.mubr.bf16.gmra.mrb[0].mxu0 %v3417
      %v3595 = vpop.f32.mrb[0].mxu0
      %v3596 = vadd.f32 0.0, %v3595
      %v3597 = vpop.f32.mrb[0].mxu0
      %v3598 = vpop.f32.mrb[0].mxu0
      %v3599 = vadd.f32 0.0, %v3598
      %v3600 = vpop.f32.mrb[0].mxu0
      %3601 = vmatprep.mubr.bf16.mxu0 0
      %3602 = vmatmul.mubr.bf16.gmra.mrb[0].mxu0 %v3418
      %v3603 = vpop.f32.mrb[0].mxu0
      %v3604 = vadd.f32 0.0, %v3603
      %v3605 = vpop.f32.mrb[0].mxu0
      %v3606 = vpop.f32.mrb[0].mxu0
      %v3607 = vadd.f32 0.0, %v3606
      %v3608 = vpop.f32.mrb[0].mxu0
      %3609 = vmatprep.mubr.bf16.mxu0 0
      %3610 = vmatmul.mubr.bf16.gmra.mrb[0].mxu0 %v3419
      %v3611 = vpop.f32.mrb[0].mxu0
      %v3612 = vadd.f32 0.0, %v3611
      %v3613 = vpop.f32.mrb[0].mxu0
      %v3614 = vpop.f32.mrb[0].mxu0
      %v3615 = vadd.f32 0.0, %v3614
      %v3616 = vpop.f32.mrb[0].mxu0
      %3617 = vmatprep.mubr.bf16.mxu0 0
      %3618 = vmatmul.mubr.bf16.gmra.mrb[0].mxu0 %v3420
      %v3619 = vpop.f32.mrb[0].mxu0
      %v3620 = vadd.f32 0.0, %v3619
      %v3621 = vpop.f32.mrb[0].mxu0
      %v3622 = vpop.f32.mrb[0].mxu0
      %v3623 = vadd.f32 0.0, %v3622
      %v3624 = vpop.f32.mrb[0].mxu0
      %3625 = vmatprep.mubr.bf16.mxu0 0
      %3626 = vmatmul.mubr.bf16.gmra.mrb[0].mxu0 %v3421
      %v3627 = vpop.f32.mrb[0].mxu0
      %v3628 = vadd.f32 0.0, %v3627
      %v3629 = vpop.f32.mrb[0].mxu0
      %v3630 = vpop.f32.mrb[0].mxu0
      %v3631 = vadd.f32 0.0, %v3630
      %v3632 = vpop.f32.mrb[0].mxu0
      %3633 = vmatprep.mubr.bf16.mxu0 0
      %3634 = vmatmul.mubr.bf16.gmra.mrb[0].mxu0 %v3422
      %v3635 = vpop.f32.mrb[0].mxu0
      %v3636 = vadd.f32 0.0, %v3635
      %v3637 = vpop.f32.mrb[0].mxu0
      %v3638 = vpop.f32.mrb[0].mxu0
      %v3639 = vadd.f32 0.0, %v3638
      %v3640 = vpop.f32.mrb[0].mxu0
      %3641 = vmatprep.mubr.bf16.mxu0 0
      %3642 = vmatmul.mubr.bf16.gmra.mrb[0].mxu0 %v3423
      %v3643 = vpop.f32.mrb[0].mxu0
      %v3644 = vadd.f32 0.0, %v3643
      %v3645 = vpop.f32.mrb[0].mxu0
      %v3646 = vpop.f32.mrb[0].mxu0
      %v3647 = vadd.f32 0.0, %v3646
      %v3648 = vpop.f32.mrb[0].mxu0
      %3649 = vdwg.mxu0
      %v3650 = vadd.f32 %v3344, %v3524
      %v3651 = vadd.f32 %v3345, %v3527
      %v3652 = vadd.f32 %v3346, %v3532
      %v3653 = vadd.f32 %v3347, %v3535
      %v3654 = vadd.f32 %v3348, %v3540
      %v3655 = vadd.f32 %v3349, %v3543
      %v3656 = vadd.f32 %v3350, %v3548
      %v3657 = vadd.f32 %v3351, %v3551
      %v3658 = vadd.f32 %v3352, %v3556
      %v3659 = vadd.f32 %v3353, %v3559
      %v3660 = vadd.f32 %v3354, %v3564
      %v3661 = vadd.f32 %v3355, %v3567
      %v3662 = vadd.f32 %v3356, %v3572
      %v3663 = vadd.f32 %v3357, %v3575
      %v3664 = vadd.f32 %v3358, %v3580
      %v3665 = vadd.f32 %v3359, %v3583
      %v3666 = vadd.f32 %v3360, %v3588
      %v3667 = vadd.f32 %v3361, %v3591
      %v3668 = vadd.f32 %v3362, %v3596
      %v3669 = vadd.f32 %v3363, %v3599
      %v3670 = vadd.f32 %v3364, %v3604
      %v3671 = vadd.f32 %v3365, %v3607
      %v3672 = vadd.f32 %v3366, %v3612
      %v3673 = vadd.f32 %v3367, %v3615
      %v3674 = vadd.f32 %v3368, %v3620
      %v3675 = vadd.f32 %v3369, %v3623
      %v3676 = vadd.f32 %v3370, %v3628
      %v3677 = vadd.f32 %v3371, %v3631
      %v3678 = vadd.f32 %v3372, %v3636
      %v3679 = vadd.f32 %v3373, %v3639
      %v3680 = vadd.f32 %v3374, %v3644
      %v3681 = vadd.f32 %v3375, %v3647
      %s3682 = scalar_lea.vmem [#allocation3], 48
      %v3683 = vld [vmem:[%s3682] sm:$0xff]
      %v3684 = vld [vmem:[%s3682 + $0x8] sm:$0xff]
      %v3685 = vld [vmem:[%s3682 + $0x18] sm:$0xff]
      %v3686 = vld [vmem:[%s3682 + $0x20] sm:$0xff]
      %v3687 = vld [vmem:[%s3682 + $0x30] sm:$0xff]
      %v3688 = vld [vmem:[%s3682 + $0x38] sm:$0xff]
      %v3689 = vld [vmem:[%s3682 + $0x48] sm:$0xff]
      %v3690 = vld [vmem:[%s3682 + $0x50] sm:$0xff]
      %v3691 = vld [vmem:[%s3682 + $0x60] sm:$0xff]
      %v3692 = vld [vmem:[%s3682 + $0x68] sm:$0xff]
      %v3693 = vld [vmem:[%s3682 + $0x78] sm:$0xff]
      %v3694 = vld [vmem:[%s3682 + $0x80] sm:$0xff]
      %v3695 = vld [vmem:[%s3682 + $0x90] sm:$0xff]
      %v3696 = vld [vmem:[%s3682 + $0x98] sm:$0xff]
      %v3697 = vld [vmem:[%s3682 + $0xa8] sm:$0xff]
      %v3698 = vld [vmem:[%s3682 + $0xb0] sm:$0xff]
      %v3699 = vld [vmem:[%s3682 + $0xc0] sm:$0xff]
      %v3700 = vld [vmem:[%s3682 + $0xc8] sm:$0xff]
      %v3701 = vld [vmem:[%s3682 + $0xd8] sm:$0xff]
      %v3702 = vld [vmem:[%s3682 + $0xe0] sm:$0xff]
      %v3703 = vld [vmem:[%s3682 + $0xf0] sm:$0xff]
      %v3704 = vld [vmem:[%s3682 + $0xf8] sm:$0xff]
      %v3705 = vld [vmem:[%s3682 + $0x108] sm:$0xff]
      %v3706 = vld [vmem:[%s3682 + $0x110] sm:$0xff]
      %v3707 = vld [vmem:[%s3682 + $0x120] sm:$0xff]
      %v3708 = vld [vmem:[%s3682 + $0x128] sm:$0xff]
      %v3709 = vld [vmem:[%s3682 + $0x138] sm:$0xff]
      %v3710 = vld [vmem:[%s3682 + $0x140] sm:$0xff]
      %v3711 = vld [vmem:[%s3682 + $0x150] sm:$0xff]
      %v3712 = vld [vmem:[%s3682 + $0x158] sm:$0xff]
      %v3713 = vld [vmem:[%s3682 + $0x168] sm:$0xff]
      %v3714 = vld [vmem:[%s3682 + $0x170] sm:$0xff]
      %v3715 = vpack.c.bf16 %v3684, %v3683
      %v3716 = vpack.c.bf16 %v3686, %v3685
      %v3717 = vpack.c.bf16 %v3688, %v3687
      %v3718 = vpack.c.bf16 %v3690, %v3689
      %v3719 = vpack.c.bf16 %v3692, %v3691
      %v3720 = vpack.c.bf16 %v3694, %v3693
      %v3721 = vpack.c.bf16 %v3696, %v3695
      %v3722 = vpack.c.bf16 %v3698, %v3697
      %v3723 = vpack.c.bf16 %v3700, %v3699
      %v3724 = vpack.c.bf16 %v3702, %v3701
      %v3725 = vpack.c.bf16 %v3704, %v3703
      %v3726 = vpack.c.bf16 %v3706, %v3705
      %v3727 = vpack.c.bf16 %v3708, %v3707
      %v3728 = vpack.c.bf16 %v3710, %v3709
      %v3729 = vpack.c.bf16 %v3712, %v3711
      %v3730 = vpack.c.bf16 %v3714, %v3713
      %s3731 = scalar_lea.vmem %s2, 384
      %v3732 = vld [vmem:[%s3731] sm:$0xf]
      %v3733 = vld [vmem:[%s3731 + $0x4] sm:$0xf]
      %v3734 = vld [vmem:[%s3731 + $0x8] sm:$0xf]
      %v3735 = vld [vmem:[%s3731 + $0xc] sm:$0xf]
      %v3736 = vld [vmem:[%s3731 + $0x10] sm:$0xf]
      %v3737 = vld [vmem:[%s3731 + $0x14] sm:$0xf]
      %v3738 = vld [vmem:[%s3731 + $0x18] sm:$0xf]
      %v3739 = vld [vmem:[%s3731 + $0x1c] sm:$0xf]
      %v3740 = vld [vmem:[%s3731 + $0x20] sm:$0xf]
      %v3741 = vld [vmem:[%s3731 + $0x24] sm:$0xf]
      %v3742 = vld [vmem:[%s3731 + $0x28] sm:$0xf]
      %v3743 = vld [vmem:[%s3731 + $0x2c] sm:$0xf]
      %v3744 = vld [vmem:[%s3731 + $0x30] sm:$0xf]
      %v3745 = vld [vmem:[%s3731 + $0x34] sm:$0xf]
      %v3746 = vld [vmem:[%s3731 + $0x38] sm:$0xf]
      %v3747 = vld [vmem:[%s3731 + $0x3c] sm:$0xf]
      %v3764 = vunpack.c.l.b16 %v3732
      %v3765 = vunpack.c.l.b16 %v3733
      %v3766 = vunpack.c.l.b16 %v3734
      %v3767 = vunpack.c.l.b16 %v3735
      %v3768 = vunpack.c.l.b16 %v3736
      %v3769 = vunpack.c.l.b16 %v3737
      %v3770 = vunpack.c.l.b16 %v3738
      %v3771 = vunpack.c.l.b16 %v3739
      %v3772 = vunpack.c.l.b16 %v3740
      %v3773 = vunpack.c.l.b16 %v3741
      %v3774 = vunpack.c.l.b16 %v3742
      %v3775 = vunpack.c.l.b16 %v3743
      %v3776 = vunpack.c.l.b16 %v3744
      %v3777 = vunpack.c.l.b16 %v3745
      %v3778 = vunpack.c.l.b16 %v3746
      %v3779 = vunpack.c.l.b16 %v3747
      %v3780 = vpack.c.b16 %v3765, %v3764
      %v3781 = vpack.c.b16 %v3767, %v3766
      %v3782 = vpack.c.b16 %v3769, %v3768
      %v3783 = vpack.c.b16 %v3771, %v3770
      %v3784 = vpack.c.b16 %v3773, %v3772
      %v3785 = vpack.c.b16 %v3775, %v3774
      %v3786 = vpack.c.b16 %v3777, %v3776
      %v3787 = vpack.c.b16 %v3779, %v3778
      %3796 = vmatprep.subr.bf16.mxu0 0
      %3797 = vmatpush1.bf16.msra.mxu0 %v3780
      %3798 = vmatprep.subr.bf16.mxu0 0
      %3799 = vmatpush1.bf16.msra.mxu0 %v3781
      %3800 = vmatprep.subr.bf16.mxu0 0
      %3801 = vmatpush1.bf16.msra.mxu0 %v3782
      %3802 = vmatprep.subr.bf16.mxu0 0
      %3803 = vmatpush1.bf16.msra.mxu0 %v3783
      %3804 = vmatprep.subr.bf16.mxu0 0
      %3805 = vmatpush1.bf16.msra.mxu0 %v3784
      %3806 = vmatprep.subr.bf16.mxu0 0
      %3807 = vmatpush1.bf16.msra.mxu0 %v3785
      %3808 = vmatprep.subr.bf16.mxu0 0
      %3809 = vmatpush1.bf16.msra.mxu0 %v3786
      %3810 = vmatprep.subr.bf16.mxu0 0
      %3811 = vmatpush1.bf16.msra.mxu0 %v3787
      %3812 = vmatprep.subr.bf16.mxu0 0
      %3813 = vmatpush1.bf16.msra.mxu0 0
      %3814 = vmatprep.subr.bf16.mxu0 0
      %3815 = vmatpush1.bf16.msra.mxu0 0
      %3816 = vmatprep.subr.bf16.mxu0 0
      %3817 = vmatpush1.bf16.msra.mxu0 0
      %3818 = vmatprep.subr.bf16.mxu0 0
      %3819 = vmatpush1.bf16.msra.mxu0 0
      %3820 = vmatprep.subr.bf16.mxu0 0
      %3821 = vmatpush1.bf16.msra.mxu0 0
      %3822 = vmatprep.subr.bf16.mxu0 0
      %3823 = vmatpush1.bf16.msra.mxu0 0
      %3824 = vmatprep.subr.bf16.mxu0 0
      %3825 = vmatpush1.bf16.msra.mxu0 0
      %3826 = vmatprep.subr.bf16.mxu0 0
      %3827 = vmatpush1.bf16.msra.mxu0 0
      %3828 = vmatprep.mubr.bf16.mxu0 0
      %3829 = vmatmul.mubr.bf16.gmra.mrb[0].mxu0 %v3715
      %v3830 = vpop.f32.mrb[0].mxu0
      %v3831 = vadd.f32 0.0, %v3830
      %v3832 = vpop.f32.mrb[0].mxu0
      %v3833 = vpop.f32.mrb[0].mxu0
      %v3834 = vadd.f32 0.0, %v3833
      %v3835 = vpop.f32.mrb[0].mxu0
      %3836 = vmatprep.mubr.bf16.mxu0 0
      %3837 = vmatmul.mubr.bf16.gmra.mrb[0].mxu0 %v3716
      %v3838 = vpop.f32.mrb[0].mxu0
      %v3839 = vadd.f32 0.0, %v3838
      %v3840 = vpop.f32.mrb[0].mxu0
      %v3841 = vpop.f32.mrb[0].mxu0
      %v3842 = vadd.f32 0.0, %v3841
      %v3843 = vpop.f32.mrb[0].mxu0
      %3844 = vmatprep.mubr.bf16.mxu0 0
      %3845 = vmatmul.mubr.bf16.gmra.mrb[0].mxu0 %v3717
      %v3846 = vpop.f32.mrb[0].mxu0
      %v3847 = vadd.f32 0.0, %v3846
      %v3848 = vpop.f32.mrb[0].mxu0
      %v3849 = vpop.f32.mrb[0].mxu0
      %v3850 = vadd.f32 0.0, %v3849
      %v3851 = vpop.f32.mrb[0].mxu0
      %3852 = vmatprep.mubr.bf16.mxu0 0
      %3853 = vmatmul.mubr.bf16.gmra.mrb[0].mxu0 %v3718
      %v3854 = vpop.f32.mrb[0].mxu0
      %v3855 = vadd.f32 0.0, %v3854
      %v3856 = vpop.f32.mrb[0].mxu0
      %v3857 = vpop.f32.mrb[0].mxu0
      %v3858 = vadd.f32 0.0, %v3857
      %v3859 = vpop.f32.mrb[0].mxu0
      %3860 = vmatprep.mubr.bf16.mxu0 0
      %3861 = vmatmul.mubr.bf16.gmra.mrb[0].mxu0 %v3719
      %v3862 = vpop.f32.mrb[0].mxu0
      %v3863 = vadd.f32 0.0, %v3862
      %v3864 = vpop.f32.mrb[0].mxu0
      %v3865 = vpop.f32.mrb[0].mxu0
      %v3866 = vadd.f32 0.0, %v3865
      %v3867 = vpop.f32.mrb[0].mxu0
      %3868 = vmatprep.mubr.bf16.mxu0 0
      %3869 = vmatmul.mubr.bf16.gmra.mrb[0].mxu0 %v3720
      %v3870 = vpop.f32.mrb[0].mxu0
      %v3871 = vadd.f32 0.0, %v3870
      %v3872 = vpop.f32.mrb[0].mxu0
      %v3873 = vpop.f32.mrb[0].mxu0
      %v3874 = vadd.f32 0.0, %v3873
      %v3875 = vpop.f32.mrb[0].mxu0
      %3876 = vmatprep.mubr.bf16.mxu0 0
      %3877 = vmatmul.mubr.bf16.gmra.mrb[0].mxu0 %v3721
      %v3878 = vpop.f32.mrb[0].mxu0
      %v3879 = vadd.f32 0.0, %v3878
      %v3880 = vpop.f32.mrb[0].mxu0
      %v3881 = vpop.f32.mrb[0].mxu0
      %v3882 = vadd.f32 0.0, %v3881
      %v3883 = vpop.f32.mrb[0].mxu0
      %3884 = vmatprep.mubr.bf16.mxu0 0
      %3885 = vmatmul.mubr.bf16.gmra.mrb[0].mxu0 %v3722
      %v3886 = vpop.f32.mrb[0].mxu0
      %v3887 = vadd.f32 0.0, %v3886
      %v3888 = vpop.f32.mrb[0].mxu0
      %v3889 = vpop.f32.mrb[0].mxu0
      %v3890 = vadd.f32 0.0, %v3889
      %v3891 = vpop.f32.mrb[0].mxu0
      %3892 = vmatprep.mubr.bf16.mxu0 0
      %3893 = vmatmul.mubr.bf16.gmra.mrb[0].mxu0 %v3723
      %v3894 = vpop.f32.mrb[0].mxu0
      %v3895 = vadd.f32 0.0, %v3894
      %v3896 = vpop.f32.mrb[0].mxu0
      %v3897 = vpop.f32.mrb[0].mxu0
      %v3898 = vadd.f32 0.0, %v3897
      %v3899 = vpop.f32.mrb[0].mxu0
      %3900 = vmatprep.mubr.bf16.mxu0 0
      %3901 = vmatmul.mubr.bf16.gmra.mrb[0].mxu0 %v3724
      %v3902 = vpop.f32.mrb[0].mxu0
      %v3903 = vadd.f32 0.0, %v3902
      %v3904 = vpop.f32.mrb[0].mxu0
      %v3905 = vpop.f32.mrb[0].mxu0
      %v3906 = vadd.f32 0.0, %v3905
      %v3907 = vpop.f32.mrb[0].mxu0
      %3908 = vmatprep.mubr.bf16.mxu0 0
      %3909 = vmatmul.mubr.bf16.gmra.mrb[0].mxu0 %v3725
      %v3910 = vpop.f32.mrb[0].mxu0
      %v3911 = vadd.f32 0.0, %v3910
      %v3912 = vpop.f32.mrb[0].mxu0
      %v3913 = vpop.f32.mrb[0].mxu0
      %v3914 = vadd.f32 0.0, %v3913
      %v3915 = vpop.f32.mrb[0].mxu0
      %3916 = vmatprep.mubr.bf16.mxu0 0
      %3917 = vmatmul.mubr.bf16.gmra.mrb[0].mxu0 %v3726
      %v3918 = vpop.f32.mrb[0].mxu0
      %v3919 = vadd.f32 0.0, %v3918
      %v3920 = vpop.f32.mrb[0].mxu0
      %v3921 = vpop.f32.mrb[0].mxu0
      %v3922 = vadd.f32 0.0, %v3921
      %v3923 = vpop.f32.mrb[0].mxu0
      %3924 = vmatprep.mubr.bf16.mxu0 0
      %3925 = vmatmul.mubr.bf16.gmra.mrb[0].mxu0 %v3727
      %v3926 = vpop.f32.mrb[0].mxu0
      %v3927 = vadd.f32 0.0, %v3926
      %v3928 = vpop.f32.mrb[0].mxu0
      %v3929 = vpop.f32.mrb[0].mxu0
      %v3930 = vadd.f32 0.0, %v3929
      %v3931 = vpop.f32.mrb[0].mxu0
      %3932 = vmatprep.mubr.bf16.mxu0 0
      %3933 = vmatmul.mubr.bf16.gmra.mrb[0].mxu0 %v3728
      %v3934 = vpop.f32.mrb[0].mxu0
      %v3935 = vadd.f32 0.0, %v3934
      %v3936 = vpop.f32.mrb[0].mxu0
      %v3937 = vpop.f32.mrb[0].mxu0
      %v3938 = vadd.f32 0.0, %v3937
      %v3939 = vpop.f32.mrb[0].mxu0
      %3940 = vmatprep.mubr.bf16.mxu0 0
      %3941 = vmatmul.mubr.bf16.gmra.mrb[0].mxu0 %v3729
      %v3942 = vpop.f32.mrb[0].mxu0
      %v3943 = vadd.f32 0.0, %v3942
      %v3944 = vpop.f32.mrb[0].mxu0
      %v3945 = vpop.f32.mrb[0].mxu0
      %v3946 = vadd.f32 0.0, %v3945
      %v3947 = vpop.f32.mrb[0].mxu0
      %3948 = vmatprep.mubr.bf16.mxu0 0
      %3949 = vmatmul.mubr.bf16.gmra.mrb[0].mxu0 %v3730
      %v3950 = vpop.f32.mrb[0].mxu0
      %v3951 = vadd.f32 0.0, %v3950
      %v3952 = vpop.f32.mrb[0].mxu0
      %v3953 = vpop.f32.mrb[0].mxu0
      %v3954 = vadd.f32 0.0, %v3953
      %v3955 = vpop.f32.mrb[0].mxu0
      %3956 = vdwg.mxu0
      %v3957 = vadd.f32 %v3650, %v3831
      %v3958 = vadd.f32 %v3651, %v3834
      %v3959 = vadd.f32 %v3652, %v3839
      %v3960 = vadd.f32 %v3653, %v3842
      %v3961 = vadd.f32 %v3654, %v3847
      %v3962 = vadd.f32 %v3655, %v3850
      %v3963 = vadd.f32 %v3656, %v3855
      %v3964 = vadd.f32 %v3657, %v3858
      %v3965 = vadd.f32 %v3658, %v3863
      %v3966 = vadd.f32 %v3659, %v3866
      %v3967 = vadd.f32 %v3660, %v3871
      %v3968 = vadd.f32 %v3661, %v3874
      %v3969 = vadd.f32 %v3662, %v3879
      %v3970 = vadd.f32 %v3663, %v3882
      %v3971 = vadd.f32 %v3664, %v3887
      %v3972 = vadd.f32 %v3665, %v3890
      %v3973 = vadd.f32 %v3666, %v3895
      %v3974 = vadd.f32 %v3667, %v3898
      %v3975 = vadd.f32 %v3668, %v3903
      %v3976 = vadd.f32 %v3669, %v3906
      %v3977 = vadd.f32 %v3670, %v3911
      %v3978 = vadd.f32 %v3671, %v3914
      %v3979 = vadd.f32 %v3672, %v3919
      %v3980 = vadd.f32 %v3673, %v3922
      %v3981 = vadd.f32 %v3674, %v3927
      %v3982 = vadd.f32 %v3675, %v3930
      %v3983 = vadd.f32 %v3676, %v3935
      %v3984 = vadd.f32 %v3677, %v3938
      %v3985 = vadd.f32 %v3678, %v3943
      %v3986 = vadd.f32 %v3679, %v3946
      %v3987 = vadd.f32 %v3680, %v3951
      %v3988 = vadd.f32 %v3681, %v3954
      %v3989 = vld [vmem:[%s3682 + $0x1] sm:$0xff]
      %v3990 = vld [vmem:[%s3682 + $0x9] sm:$0xff]
      %v3991 = vld [vmem:[%s3682 + $0x19] sm:$0xff]
      %v3992 = vld [vmem:[%s3682 + $0x21] sm:$0xff]
      %v3993 = vld [vmem:[%s3682 + $0x31] sm:$0xff]
      %v3994 = vld [vmem:[%s3682 + $0x39] sm:$0xff]
      %v3995 = vld [vmem:[%s3682 + $0x49] sm:$0xff]
      %v3996 = vld [vmem:[%s3682 + $0x51] sm:$0xff]
      %v3997 = vld [vmem:[%s3682 + $0x61] sm:$0xff]
      %v3998 = vld [vmem:[%s3682 + $0x69] sm:$0xff]
      %v3999 = vld [vmem:[%s3682 + $0x79] sm:$0xff]
      %v4000 = vld [vmem:[%s3682 + $0x81] sm:$0xff]
      %v4001 = vld [vmem:[%s3682 + $0x91] sm:$0xff]
      %v4002 = vld [vmem:[%s3682 + $0x99] sm:$0xff]
      %v4003 = vld [vmem:[%s3682 + $0xa9] sm:$0xff]
      %v4004 = vld [vmem:[%s3682 + $0xb1] sm:$0xff]
      %v4005 = vld [vmem:[%s3682 + $0xc1] sm:$0xff]
      %v4006 = vld [vmem:[%s3682 + $0xc9] sm:$0xff]
      %v4007 = vld [vmem:[%s3682 + $0xd9] sm:$0xff]
      %v4008 = vld [vmem:[%s3682 + $0xe1] sm:$0xff]
      %v4009 = vld [vmem:[%s3682 + $0xf1] sm:$0xff]
      %v4010 = vld [vmem:[%s3682 + $0xf9] sm:$0xff]
      %v4011 = vld [vmem:[%s3682 + $0x109] sm:$0xff]
      %v4012 = vld [vmem:[%s3682 + $0x111] sm:$0xff]
      %v4013 = vld [vmem:[%s3682 + $0x121] sm:$0xff]
      %v4014 = vld [vmem:[%s3682 + $0x129] sm:$0xff]
      %v4015 = vld [vmem:[%s3682 + $0x139] sm:$0xff]
      %v4016 = vld [vmem:[%s3682 + $0x141] sm:$0xff]
      %v4017 = vld [vmem:[%s3682 + $0x151] sm:$0xff]
      %v4018 = vld [vmem:[%s3682 + $0x159] sm:$0xff]
      %v4019 = vld [vmem:[%s3682 + $0x169] sm:$0xff]
      %v4020 = vld [vmem:[%s3682 + $0x171] sm:$0xff]
      %v4021 = vpack.c.bf16 %v3990, %v3989
      %v4022 = vpack.c.bf16 %v3992, %v3991
      %v4023 = vpack.c.bf16 %v3994, %v3993
      %v4024 = vpack.c.bf16 %v3996, %v3995
      %v4025 = vpack.c.bf16 %v3998, %v3997
      %v4026 = vpack.c.bf16 %v4000, %v3999
      %v4027 = vpack.c.bf16 %v4002, %v4001
      %v4028 = vpack.c.bf16 %v4004, %v4003
      %v4029 = vpack.c.bf16 %v4006, %v4005
      %v4030 = vpack.c.bf16 %v4008, %v4007
      %v4031 = vpack.c.bf16 %v4010, %v4009
      %v4032 = vpack.c.bf16 %v4012, %v4011
      %v4033 = vpack.c.bf16 %v4014, %v4013
      %v4034 = vpack.c.bf16 %v4016, %v4015
      %v4035 = vpack.c.bf16 %v4018, %v4017
      %v4036 = vpack.c.bf16 %v4020, %v4019
      %s4037 = scalar_lea.vmem %s2, 448
      %v4038 = vld [vmem:[%s4037] sm:$0xf]
      %v4039 = vld [vmem:[%s4037 + $0x4] sm:$0xf]
      %v4040 = vld [vmem:[%s4037 + $0x8] sm:$0xf]
      %v4041 = vld [vmem:[%s4037 + $0xc] sm:$0xf]
      %v4042 = vld [vmem:[%s4037 + $0x10] sm:$0xf]
      %v4043 = vld [vmem:[%s4037 + $0x14] sm:$0xf]
      %v4044 = vld [vmem:[%s4037 + $0x18] sm:$0xf]
      %v4045 = vld [vmem:[%s4037 + $0x1c] sm:$0xf]
      %v4046 = vld [vmem:[%s4037 + $0x20] sm:$0xf]
      %v4047 = vld [vmem:[%s4037 + $0x24] sm:$0xf]
      %v4048 = vld [vmem:[%s4037 + $0x28] sm:$0xf]
      %v4049 = vld [vmem:[%s4037 + $0x2c] sm:$0xf]
      %v4050 = vld [vmem:[%s4037 + $0x30] sm:$0xf]
      %v4051 = vld [vmem:[%s4037 + $0x34] sm:$0xf]
      %v4052 = vld [vmem:[%s4037 + $0x38] sm:$0xf]
      %v4053 = vld [vmem:[%s4037 + $0x3c] sm:$0xf]
      %v4070 = vunpack.c.l.b16 %v4038
      %v4071 = vunpack.c.l.b16 %v4039
      %v4072 = vunpack.c.l.b16 %v4040
      %v4073 = vunpack.c.l.b16 %v4041
      %v4074 = vunpack.c.l.b16 %v4042
      %v4075 = vunpack.c.l.b16 %v4043
      %v4076 = vunpack.c.l.b16 %v4044
      %v4077 = vunpack.c.l.b16 %v4045
      %v4078 = vunpack.c.l.b16 %v4046
      %v4079 = vunpack.c.l.b16 %v4047
      %v4080 = vunpack.c.l.b16 %v4048
      %v4081 = vunpack.c.l.b16 %v4049
      %v4082 = vunpack.c.l.b16 %v4050
      %v4083 = vunpack.c.l.b16 %v4051
      %v4084 = vunpack.c.l.b16 %v4052
      %v4085 = vunpack.c.l.b16 %v4053
      %v4086 = vpack.c.b16 %v4071, %v4070
      %v4087 = vpack.c.b16 %v4073, %v4072
      %v4088 = vpack.c.b16 %v4075, %v4074
      %v4089 = vpack.c.b16 %v4077, %v4076
      %v4090 = vpack.c.b16 %v4079, %v4078
      %v4091 = vpack.c.b16 %v4081, %v4080
      %v4092 = vpack.c.b16 %v4083, %v4082
      %v4093 = vpack.c.b16 %v4085, %v4084
      %4102 = vmatprep.subr.bf16.mxu0 0
      %4103 = vmatpush1.bf16.msra.mxu0 %v4086
      %4104 = vmatprep.subr.bf16.mxu0 0
      %4105 = vmatpush1.bf16.msra.mxu0 %v4087
      %4106 = vmatprep.subr.bf16.mxu0 0
      %4107 = vmatpush1.bf16.msra.mxu0 %v4088
      %4108 = vmatprep.subr.bf16.mxu0 0
      %4109 = vmatpush1.bf16.msra.mxu0 %v4089
      %4110 = vmatprep.subr.bf16.mxu0 0
      %4111 = vmatpush1.bf16.msra.mxu0 %v4090
      %4112 = vmatprep.subr.bf16.mxu0 0
      %4113 = vmatpush1.bf16.msra.mxu0 %v4091
      %4114 = vmatprep.subr.bf16.mxu0 0
      %4115 = vmatpush1.bf16.msra.mxu0 %v4092
      %4116 = vmatprep.subr.bf16.mxu0 0
      %4117 = vmatpush1.bf16.msra.mxu0 %v4093
      %4118 = vmatprep.subr.bf16.mxu0 0
      %4119 = vmatpush1.bf16.msra.mxu0 0
      %4120 = vmatprep.subr.bf16.mxu0 0
      %4121 = vmatpush1.bf16.msra.mxu0 0
      %4122 = vmatprep.subr.bf16.mxu0 0
      %4123 = vmatpush1.bf16.msra.mxu0 0
      %4124 = vmatprep.subr.bf16.mxu0 0
      %4125 = vmatpush1.bf16.msra.mxu0 0
      %4126 = vmatprep.subr.bf16.mxu0 0
      %4127 = vmatpush1.bf16.msra.mxu0 0
      %4128 = vmatprep.subr.bf16.mxu0 0
      %4129 = vmatpush1.bf16.msra.mxu0 0
      %4130 = vmatprep.subr.bf16.mxu0 0
      %4131 = vmatpush1.bf16.msra.mxu0 0
      %4132 = vmatprep.subr.bf16.mxu0 0
      %4133 = vmatpush1.bf16.msra.mxu0 0
      %4134 = vmatprep.mubr.bf16.mxu0 0
      %4135 = vmatmul.mubr.bf16.gmra.mrb[0].mxu0 %v4021
      %v4136 = vpop.f32.mrb[0].mxu0
      %v4137 = vadd.f32 0.0, %v4136
      %v4138 = vpop.f32.mrb[0].mxu0
      %v4139 = vpop.f32.mrb[0].mxu0
      %v4140 = vadd.f32 0.0, %v4139
      %v4141 = vpop.f32.mrb[0].mxu0
      %4142 = vmatprep.mubr.bf16.mxu0 0
      %4143 = vmatmul.mubr.bf16.gmra.mrb[0].mxu0 %v4022
      %v4144 = vpop.f32.mrb[0].mxu0
      %v4145 = vadd.f32 0.0, %v4144
      %v4146 = vpop.f32.mrb[0].mxu0
      %v4147 = vpop.f32.mrb[0].mxu0
      %v4148 = vadd.f32 0.0, %v4147
      %v4149 = vpop.f32.mrb[0].mxu0
      %4150 = vmatprep.mubr.bf16.mxu0 0
      %4151 = vmatmul.mubr.bf16.gmra.mrb[0].mxu0 %v4023
      %v4152 = vpop.f32.mrb[0].mxu0
      %v4153 = vadd.f32 0.0, %v4152
      %v4154 = vpop.f32.mrb[0].mxu0
      %v4155 = vpop.f32.mrb[0].mxu0
      %v4156 = vadd.f32 0.0, %v4155
      %v4157 = vpop.f32.mrb[0].mxu0
      %4158 = vmatprep.mubr.bf16.mxu0 0
      %4159 = vmatmul.mubr.bf16.gmra.mrb[0].mxu0 %v4024
      %v4160 = vpop.f32.mrb[0].mxu0
      %v4161 = vadd.f32 0.0, %v4160
      %v4162 = vpop.f32.mrb[0].mxu0
      %v4163 = vpop.f32.mrb[0].mxu0
      %v4164 = vadd.f32 0.0, %v4163
      %v4165 = vpop.f32.mrb[0].mxu0
      %4166 = vmatprep.mubr.bf16.mxu0 0
      %4167 = vmatmul.mubr.bf16.gmra.mrb[0].mxu0 %v4025
      %v4168 = vpop.f32.mrb[0].mxu0
      %v4169 = vadd.f32 0.0, %v4168
      %v4170 = vpop.f32.mrb[0].mxu0
      %v4171 = vpop.f32.mrb[0].mxu0
      %v4172 = vadd.f32 0.0, %v4171
      %v4173 = vpop.f32.mrb[0].mxu0
      %4174 = vmatprep.mubr.bf16.mxu0 0
      %4175 = vmatmul.mubr.bf16.gmra.mrb[0].mxu0 %v4026
      %v4176 = vpop.f32.mrb[0].mxu0
      %v4177 = vadd.f32 0.0, %v4176
      %v4178 = vpop.f32.mrb[0].mxu0
      %v4179 = vpop.f32.mrb[0].mxu0
      %v4180 = vadd.f32 0.0, %v4179
      %v4181 = vpop.f32.mrb[0].mxu0
      %4182 = vmatprep.mubr.bf16.mxu0 0
      %4183 = vmatmul.mubr.bf16.gmra.mrb[0].mxu0 %v4027
      %v4184 = vpop.f32.mrb[0].mxu0
      %v4185 = vadd.f32 0.0, %v4184
      %v4186 = vpop.f32.mrb[0].mxu0
      %v4187 = vpop.f32.mrb[0].mxu0
      %v4188 = vadd.f32 0.0, %v4187
      %v4189 = vpop.f32.mrb[0].mxu0
      %4190 = vmatprep.mubr.bf16.mxu0 0
      %4191 = vmatmul.mubr.bf16.gmra.mrb[0].mxu0 %v4028
      %v4192 = vpop.f32.mrb[0].mxu0
      %v4193 = vadd.f32 0.0, %v4192
      %v4194 = vpop.f32.mrb[0].mxu0
      %v4195 = vpop.f32.mrb[0].mxu0
      %v4196 = vadd.f32 0.0, %v4195
      %v4197 = vpop.f32.mrb[0].mxu0
      %4198 = vmatprep.mubr.bf16.mxu0 0
      %4199 = vmatmul.mubr.bf16.gmra.mrb[0].mxu0 %v4029
      %v4200 = vpop.f32.mrb[0].mxu0
      %v4201 = vadd.f32 0.0, %v4200
      %v4202 = vpop.f32.mrb[0].mxu0
      %v4203 = vpop.f32.mrb[0].mxu0
      %v4204 = vadd.f32 0.0, %v4203
      %v4205 = vpop.f32.mrb[0].mxu0
      %4206 = vmatprep.mubr.bf16.mxu0 0
      %4207 = vmatmul.mubr.bf16.gmra.mrb[0].mxu0 %v4030
      %v4208 = vpop.f32.mrb[0].mxu0
      %v4209 = vadd.f32 0.0, %v4208
      %v4210 = vpop.f32.mrb[0].mxu0
      %v4211 = vpop.f32.mrb[0].mxu0
      %v4212 = vadd.f32 0.0, %v4211
      %v4213 = vpop.f32.mrb[0].mxu0
      %4214 = vmatprep.mubr.bf16.mxu0 0
      %4215 = vmatmul.mubr.bf16.gmra.mrb[0].mxu0 %v4031
      %v4216 = vpop.f32.mrb[0].mxu0
      %v4217 = vadd.f32 0.0, %v4216
      %v4218 = vpop.f32.mrb[0].mxu0
      %v4219 = vpop.f32.mrb[0].mxu0
      %v4220 = vadd.f32 0.0, %v4219
      %v4221 = vpop.f32.mrb[0].mxu0
      %4222 = vmatprep.mubr.bf16.mxu0 0
      %4223 = vmatmul.mubr.bf16.gmra.mrb[0].mxu0 %v4032
      %v4224 = vpop.f32.mrb[0].mxu0
      %v4225 = vadd.f32 0.0, %v4224
      %v4226 = vpop.f32.mrb[0].mxu0
      %v4227 = vpop.f32.mrb[0].mxu0
      %v4228 = vadd.f32 0.0, %v4227
      %v4229 = vpop.f32.mrb[0].mxu0
      %4230 = vmatprep.mubr.bf16.mxu0 0
      %4231 = vmatmul.mubr.bf16.gmra.mrb[0].mxu0 %v4033
      %v4232 = vpop.f32.mrb[0].mxu0
      %v4233 = vadd.f32 0.0, %v4232
      %v4234 = vpop.f32.mrb[0].mxu0
      %v4235 = vpop.f32.mrb[0].mxu0
      %v4236 = vadd.f32 0.0, %v4235
      %v4237 = vpop.f32.mrb[0].mxu0
      %4238 = vmatprep.mubr.bf16.mxu0 0
      %4239 = vmatmul.mubr.bf16.gmra.mrb[0].mxu0 %v4034
      %v4240 = vpop.f32.mrb[0].mxu0
      %v4241 = vadd.f32 0.0, %v4240
      %v4242 = vpop.f32.mrb[0].mxu0
      %v4243 = vpop.f32.mrb[0].mxu0
      %v4244 = vadd.f32 0.0, %v4243
      %v4245 = vpop.f32.mrb[0].mxu0
      %4246 = vmatprep.mubr.bf16.mxu0 0
      %4247 = vmatmul.mubr.bf16.gmra.mrb[0].mxu0 %v4035
      %v4248 = vpop.f32.mrb[0].mxu0
      %v4249 = vadd.f32 0.0, %v4248
      %v4250 = vpop.f32.mrb[0].mxu0
      %v4251 = vpop.f32.mrb[0].mxu0
      %v4252 = vadd.f32 0.0, %v4251
      %v4253 = vpop.f32.mrb[0].mxu0
      %4254 = vmatprep.mubr.bf16.mxu0 0
      %4255 = vmatmul.mubr.bf16.gmra.mrb[0].mxu0 %v4036
      %v4256 = vpop.f32.mrb[0].mxu0
      %v4257 = vadd.f32 0.0, %v4256
      %v4258 = vpop.f32.mrb[0].mxu0
      %v4259 = vpop.f32.mrb[0].mxu0
      %v4260 = vadd.f32 0.0, %v4259
      %v4261 = vpop.f32.mrb[0].mxu0
      %4262 = vdwg.mxu0
      %v4263 = vadd.f32 %v3957, %v4137
      %v4264 = vadd.f32 %v3958, %v4140
      %v4265 = vadd.f32 %v3959, %v4145
      %v4266 = vadd.f32 %v3960, %v4148
      %v4267 = vadd.f32 %v3961, %v4153
      %v4268 = vadd.f32 %v3962, %v4156
      %v4269 = vadd.f32 %v3963, %v4161
      %v4270 = vadd.f32 %v3964, %v4164
      %v4271 = vadd.f32 %v3965, %v4169
      %v4272 = vadd.f32 %v3966, %v4172
      %v4273 = vadd.f32 %v3967, %v4177
      %v4274 = vadd.f32 %v3968, %v4180
      %v4275 = vadd.f32 %v3969, %v4185
      %v4276 = vadd.f32 %v3970, %v4188
      %v4277 = vadd.f32 %v3971, %v4193
      %v4278 = vadd.f32 %v3972, %v4196
      %v4279 = vadd.f32 %v3973, %v4201
      %v4280 = vadd.f32 %v3974, %v4204
      %v4281 = vadd.f32 %v3975, %v4209
      %v4282 = vadd.f32 %v3976, %v4212
      %v4283 = vadd.f32 %v3977, %v4217
      %v4284 = vadd.f32 %v3978, %v4220
      %v4285 = vadd.f32 %v3979, %v4225
      %v4286 = vadd.f32 %v3980, %v4228
      %v4287 = vadd.f32 %v3981, %v4233
      %v4288 = vadd.f32 %v3982, %v4236
      %v4289 = vadd.f32 %v3983, %v4241
      %v4290 = vadd.f32 %v3984, %v4244
      %v4291 = vadd.f32 %v3985, %v4249
      %v4292 = vadd.f32 %v3986, %v4252
      %v4293 = vadd.f32 %v3987, %v4257
      %v4294 = vadd.f32 %v3988, %v4260
      %v4295 = vld [vmem:[%s3682 + $0x2] sm:$0xff]
      %v4296 = vld [vmem:[%s3682 + $0xa] sm:$0xff]
      %v4297 = vld [vmem:[%s3682 + $0x1a] sm:$0xff]
      %v4298 = vld [vmem:[%s3682 + $0x22] sm:$0xff]
      %v4299 = vld [vmem:[%s3682 + $0x32] sm:$0xff]
      %v4300 = vld [vmem:[%s3682 + $0x3a] sm:$0xff]
      %v4301 = vld [vmem:[%s3682 + $0x4a] sm:$0xff]
      %v4302 = vld [vmem:[%s3682 + $0x52] sm:$0xff]
      %v4303 = vld [vmem:[%s3682 + $0x62] sm:$0xff]
      %v4304 = vld [vmem:[%s3682 + $0x6a] sm:$0xff]
      %v4305 = vld [vmem:[%s3682 + $0x7a] sm:$0xff]
      %v4306 = vld [vmem:[%s3682 + $0x82] sm:$0xff]
      %v4307 = vld [vmem:[%s3682 + $0x92] sm:$0xff]
      %v4308 = vld [vmem:[%s3682 + $0x9a] sm:$0xff]
      %v4309 = vld [vmem:[%s3682 + $0xaa] sm:$0xff]
      %v4310 = vld [vmem:[%s3682 + $0xb2] sm:$0xff]
      %v4311 = vld [vmem:[%s3682 + $0xc2] sm:$0xff]
      %v4312 = vld [vmem:[%s3682 + $0xca] sm:$0xff]
      %v4313 = vld [vmem:[%s3682 + $0xda] sm:$0xff]
      %v4314 = vld [vmem:[%s3682 + $0xe2] sm:$0xff]
      %v4315 = vld [vmem:[%s3682 + $0xf2] sm:$0xff]
      %v4316 = vld [vmem:[%s3682 + $0xfa] sm:$0xff]
      %v4317 = vld [vmem:[%s3682 + $0x10a] sm:$0xff]
      %v4318 = vld [vmem:[%s3682 + $0x112] sm:$0xff]
      %v4319 = vld [vmem:[%s3682 + $0x122] sm:$0xff]
      %v4320 = vld [vmem:[%s3682 + $0x12a] sm:$0xff]
      %v4321 = vld [vmem:[%s3682 + $0x13a] sm:$0xff]
      %v4322 = vld [vmem:[%s3682 + $0x142] sm:$0xff]
      %v4323 = vld [vmem:[%s3682 + $0x152] sm:$0xff]
      %v4324 = vld [vmem:[%s3682 + $0x15a] sm:$0xff]
      %v4325 = vld [vmem:[%s3682 + $0x16a] sm:$0xff]
      %v4326 = vld [vmem:[%s3682 + $0x172] sm:$0xff]
      %v4327 = vpack.c.bf16 %v4296, %v4295
      %v4328 = vpack.c.bf16 %v4298, %v4297
      %v4329 = vpack.c.bf16 %v4300, %v4299
      %v4330 = vpack.c.bf16 %v4302, %v4301
      %v4331 = vpack.c.bf16 %v4304, %v4303
      %v4332 = vpack.c.bf16 %v4306, %v4305
      %v4333 = vpack.c.bf16 %v4308, %v4307
      %v4334 = vpack.c.bf16 %v4310, %v4309
      %v4335 = vpack.c.bf16 %v4312, %v4311
      %v4336 = vpack.c.bf16 %v4314, %v4313
      %v4337 = vpack.c.bf16 %v4316, %v4315
      %v4338 = vpack.c.bf16 %v4318, %v4317
      %v4339 = vpack.c.bf16 %v4320, %v4319
      %v4340 = vpack.c.bf16 %v4322, %v4321
      %v4341 = vpack.c.bf16 %v4324, %v4323
      %v4342 = vpack.c.bf16 %v4326, %v4325
      %s4343 = scalar_lea.vmem %s2, 512
      %v4344 = vld [vmem:[%s4343] sm:$0xf]
      %v4345 = vld [vmem:[%s4343 + $0x4] sm:$0xf]
      %v4346 = vld [vmem:[%s4343 + $0x8] sm:$0xf]
      %v4347 = vld [vmem:[%s4343 + $0xc] sm:$0xf]
      %v4348 = vld [vmem:[%s4343 + $0x10] sm:$0xf]
      %v4349 = vld [vmem:[%s4343 + $0x14] sm:$0xf]
      %v4350 = vld [vmem:[%s4343 + $0x18] sm:$0xf]
      %v4351 = vld [vmem:[%s4343 + $0x1c] sm:$0xf]
      %v4352 = vld [vmem:[%s4343 + $0x20] sm:$0xf]
      %v4353 = vld [vmem:[%s4343 + $0x24] sm:$0xf]
      %v4354 = vld [vmem:[%s4343 + $0x28] sm:$0xf]
      %v4355 = vld [vmem:[%s4343 + $0x2c] sm:$0xf]
      %v4356 = vld [vmem:[%s4343 + $0x30] sm:$0xf]
      %v4357 = vld [vmem:[%s4343 + $0x34] sm:$0xf]
      %v4358 = vld [vmem:[%s4343 + $0x38] sm:$0xf]
      %v4359 = vld [vmem:[%s4343 + $0x3c] sm:$0xf]
      %v4376 = vunpack.c.l.b16 %v4344
      %v4377 = vunpack.c.l.b16 %v4345
      %v4378 = vunpack.c.l.b16 %v4346
      %v4379 = vunpack.c.l.b16 %v4347
      %v4380 = vunpack.c.l.b16 %v4348
      %v4381 = vunpack.c.l.b16 %v4349
      %v4382 = vunpack.c.l.b16 %v4350
      %v4383 = vunpack.c.l.b16 %v4351
      %v4384 = vunpack.c.l.b16 %v4352
      %v4385 = vunpack.c.l.b16 %v4353
      %v4386 = vunpack.c.l.b16 %v4354
      %v4387 = vunpack.c.l.b16 %v4355
      %v4388 = vunpack.c.l.b16 %v4356
      %v4389 = vunpack.c.l.b16 %v4357
      %v4390 = vunpack.c.l.b16 %v4358
      %v4391 = vunpack.c.l.b16 %v4359
      %v4392 = vpack.c.b16 %v4377, %v4376
      %v4393 = vpack.c.b16 %v4379, %v4378
      %v4394 = vpack.c.b16 %v4381, %v4380
      %v4395 = vpack.c.b16 %v4383, %v4382
      %v4396 = vpack.c.b16 %v4385, %v4384
      %v4397 = vpack.c.b16 %v4387, %v4386
      %v4398 = vpack.c.b16 %v4389, %v4388
      %v4399 = vpack.c.b16 %v4391, %v4390
      %4408 = vmatprep.subr.bf16.mxu0 0
      %4409 = vmatpush1.bf16.msra.mxu0 %v4392
      %4410 = vmatprep.subr.bf16.mxu0 0
      %4411 = vmatpush1.bf16.msra.mxu0 %v4393
      %4412 = vmatprep.subr.bf16.mxu0 0
      %4413 = vmatpush1.bf16.msra.mxu0 %v4394
      %4414 = vmatprep.subr.bf16.mxu0 0
      %4415 = vmatpush1.bf16.msra.mxu0 %v4395
      %4416 = vmatprep.subr.bf16.mxu0 0
      %4417 = vmatpush1.bf16.msra.mxu0 %v4396
      %4418 = vmatprep.subr.bf16.mxu0 0
      %4419 = vmatpush1.bf16.msra.mxu0 %v4397
      %4420 = vmatprep.subr.bf16.mxu0 0
      %4421 = vmatpush1.bf16.msra.mxu0 %v4398
      %4422 = vmatprep.subr.bf16.mxu0 0
      %4423 = vmatpush1.bf16.msra.mxu0 %v4399
      %4424 = vmatprep.subr.bf16.mxu0 0
      %4425 = vmatpush1.bf16.msra.mxu0 0
      %4426 = vmatprep.subr.bf16.mxu0 0
      %4427 = vmatpush1.bf16.msra.mxu0 0
      %4428 = vmatprep.subr.bf16.mxu0 0
      %4429 = vmatpush1.bf16.msra.mxu0 0
      %4430 = vmatprep.subr.bf16.mxu0 0
      %4431 = vmatpush1.bf16.msra.mxu0 0
      %4432 = vmatprep.subr.bf16.mxu0 0
      %4433 = vmatpush1.bf16.msra.mxu0 0
      %4434 = vmatprep.subr.bf16.mxu0 0
      %4435 = vmatpush1.bf16.msra.mxu0 0
      %4436 = vmatprep.subr.bf16.mxu0 0
      %4437 = vmatpush1.bf16.msra.mxu0 0
      %4438 = vmatprep.subr.bf16.mxu0 0
      %4439 = vmatpush1.bf16.msra.mxu0 0
      %4440 = vmatprep.mubr.bf16.mxu0 0
      %4441 = vmatmul.mubr.bf16.gmra.mrb[0].mxu0 %v4327
      %v4442 = vpop.f32.mrb[0].mxu0
      %v4443 = vadd.f32 0.0, %v4442
      %v4444 = vpop.f32.mrb[0].mxu0
      %v4445 = vpop.f32.mrb[0].mxu0
      %v4446 = vadd.f32 0.0, %v4445
      %v4447 = vpop.f32.mrb[0].mxu0
      %4448 = vmatprep.mubr.bf16.mxu0 0
      %4449 = vmatmul.mubr.bf16.gmra.mrb[0].mxu0 %v4328
      %v4450 = vpop.f32.mrb[0].mxu0
      %v4451 = vadd.f32 0.0, %v4450
      %v4452 = vpop.f32.mrb[0].mxu0
      %v4453 = vpop.f32.mrb[0].mxu0
      %v4454 = vadd.f32 0.0, %v4453
      %v4455 = vpop.f32.mrb[0].mxu0
      %4456 = vmatprep.mubr.bf16.mxu0 0
      %4457 = vmatmul.mubr.bf16.gmra.mrb[0].mxu0 %v4329
      %v4458 = vpop.f32.mrb[0].mxu0
      %v4459 = vadd.f32 0.0, %v4458
      %v4460 = vpop.f32.mrb[0].mxu0
      %v4461 = vpop.f32.mrb[0].mxu0
      %v4462 = vadd.f32 0.0, %v4461
      %v4463 = vpop.f32.mrb[0].mxu0
      %4464 = vmatprep.mubr.bf16.mxu0 0
      %4465 = vmatmul.mubr.bf16.gmra.mrb[0].mxu0 %v4330
      %v4466 = vpop.f32.mrb[0].mxu0
      %v4467 = vadd.f32 0.0, %v4466
      %v4468 = vpop.f32.mrb[0].mxu0
      %v4469 = vpop.f32.mrb[0].mxu0
      %v4470 = vadd.f32 0.0, %v4469
      %v4471 = vpop.f32.mrb[0].mxu0
      %4472 = vmatprep.mubr.bf16.mxu0 0
      %4473 = vmatmul.mubr.bf16.gmra.mrb[0].mxu0 %v4331
      %v4474 = vpop.f32.mrb[0].mxu0
      %v4475 = vadd.f32 0.0, %v4474
      %v4476 = vpop.f32.mrb[0].mxu0
      %v4477 = vpop.f32.mrb[0].mxu0
      %v4478 = vadd.f32 0.0, %v4477
      %v4479 = vpop.f32.mrb[0].mxu0
      %4480 = vmatprep.mubr.bf16.mxu0 0
      %4481 = vmatmul.mubr.bf16.gmra.mrb[0].mxu0 %v4332
      %v4482 = vpop.f32.mrb[0].mxu0
      %v4483 = vadd.f32 0.0, %v4482
      %v4484 = vpop.f32.mrb[0].mxu0
      %v4485 = vpop.f32.mrb[0].mxu0
      %v4486 = vadd.f32 0.0, %v4485
      %v4487 = vpop.f32.mrb[0].mxu0
      %4488 = vmatprep.mubr.bf16.mxu0 0
      %4489 = vmatmul.mubr.bf16.gmra.mrb[0].mxu0 %v4333
      %v4490 = vpop.f32.mrb[0].mxu0
      %v4491 = vadd.f32 0.0, %v4490
      %v4492 = vpop.f32.mrb[0].mxu0
      %v4493 = vpop.f32.mrb[0].mxu0
      %v4494 = vadd.f32 0.0, %v4493
      %v4495 = vpop.f32.mrb[0].mxu0
      %4496 = vmatprep.mubr.bf16.mxu0 0
      %4497 = vmatmul.mubr.bf16.gmra.mrb[0].mxu0 %v4334
      %v4498 = vpop.f32.mrb[0].mxu0
      %v4499 = vadd.f32 0.0, %v4498
      %v4500 = vpop.f32.mrb[0].mxu0
      %v4501 = vpop.f32.mrb[0].mxu0
      %v4502 = vadd.f32 0.0, %v4501
      %v4503 = vpop.f32.mrb[0].mxu0
      %4504 = vmatprep.mubr.bf16.mxu0 0
      %4505 = vmatmul.mubr.bf16.gmra.mrb[0].mxu0 %v4335
      %v4506 = vpop.f32.mrb[0].mxu0
      %v4507 = vadd.f32 0.0, %v4506
      %v4508 = vpop.f32.mrb[0].mxu0
      %v4509 = vpop.f32.mrb[0].mxu0
      %v4510 = vadd.f32 0.0, %v4509
      %v4511 = vpop.f32.mrb[0].mxu0
      %4512 = vmatprep.mubr.bf16.mxu0 0
      %4513 = vmatmul.mubr.bf16.gmra.mrb[0].mxu0 %v4336
      %v4514 = vpop.f32.mrb[0].mxu0
      %v4515 = vadd.f32 0.0, %v4514
      %v4516 = vpop.f32.mrb[0].mxu0
      %v4517 = vpop.f32.mrb[0].mxu0
      %v4518 = vadd.f32 0.0, %v4517
      %v4519 = vpop.f32.mrb[0].mxu0
      %4520 = vmatprep.mubr.bf16.mxu0 0
      %4521 = vmatmul.mubr.bf16.gmra.mrb[0].mxu0 %v4337
      %v4522 = vpop.f32.mrb[0].mxu0
      %v4523 = vadd.f32 0.0, %v4522
      %v4524 = vpop.f32.mrb[0].mxu0
      %v4525 = vpop.f32.mrb[0].mxu0
      %v4526 = vadd.f32 0.0, %v4525
      %v4527 = vpop.f32.mrb[0].mxu0
      %4528 = vmatprep.mubr.bf16.mxu0 0
      %4529 = vmatmul.mubr.bf16.gmra.mrb[0].mxu0 %v4338
      %v4530 = vpop.f32.mrb[0].mxu0
      %v4531 = vadd.f32 0.0, %v4530
      %v4532 = vpop.f32.mrb[0].mxu0
      %v4533 = vpop.f32.mrb[0].mxu0
      %v4534 = vadd.f32 0.0, %v4533
      %v4535 = vpop.f32.mrb[0].mxu0
      %4536 = vmatprep.mubr.bf16.mxu0 0
      %4537 = vmatmul.mubr.bf16.gmra.mrb[0].mxu0 %v4339
      %v4538 = vpop.f32.mrb[0].mxu0
      %v4539 = vadd.f32 0.0, %v4538
      %v4540 = vpop.f32.mrb[0].mxu0
      %v4541 = vpop.f32.mrb[0].mxu0
      %v4542 = vadd.f32 0.0, %v4541
      %v4543 = vpop.f32.mrb[0].mxu0
      %4544 = vmatprep.mubr.bf16.mxu0 0
      %4545 = vmatmul.mubr.bf16.gmra.mrb[0].mxu0 %v4340
      %v4546 = vpop.f32.mrb[0].mxu0
      %v4547 = vadd.f32 0.0, %v4546
      %v4548 = vpop.f32.mrb[0].mxu0
      %v4549 = vpop.f32.mrb[0].mxu0
      %v4550 = vadd.f32 0.0, %v4549
      %v4551 = vpop.f32.mrb[0].mxu0
      %4552 = vmatprep.mubr.bf16.mxu0 0
      %4553 = vmatmul.mubr.bf16.gmra.mrb[0].mxu0 %v4341
      %v4554 = vpop.f32.mrb[0].mxu0
      %v4555 = vadd.f32 0.0, %v4554
      %v4556 = vpop.f32.mrb[0].mxu0
      %v4557 = vpop.f32.mrb[0].mxu0
      %v4558 = vadd.f32 0.0, %v4557
      %v4559 = vpop.f32.mrb[0].mxu0
      %4560 = vmatprep.mubr.bf16.mxu0 0
      %4561 = vmatmul.mubr.bf16.gmra.mrb[0].mxu0 %v4342
      %v4562 = vpop.f32.mrb[0].mxu0
      %v4563 = vadd.f32 0.0, %v4562
      %v4564 = vpop.f32.mrb[0].mxu0
      %v4565 = vpop.f32.mrb[0].mxu0
      %v4566 = vadd.f32 0.0, %v4565
      %v4567 = vpop.f32.mrb[0].mxu0
      %4568 = vdwg.mxu0
      %v4569 = vadd.f32 %v4263, %v4443
      %v4570 = vadd.f32 %v4264, %v4446
      %v4571 = vadd.f32 %v4265, %v4451
      %v4572 = vadd.f32 %v4266, %v4454
      %v4573 = vadd.f32 %v4267, %v4459
      %v4574 = vadd.f32 %v4268, %v4462
      %v4575 = vadd.f32 %v4269, %v4467
      %v4576 = vadd.f32 %v4270, %v4470
      %v4577 = vadd.f32 %v4271, %v4475
      %v4578 = vadd.f32 %v4272, %v4478
      %v4579 = vadd.f32 %v4273, %v4483
      %v4580 = vadd.f32 %v4274, %v4486
      %v4581 = vadd.f32 %v4275, %v4491
      %v4582 = vadd.f32 %v4276, %v4494
      %v4583 = vadd.f32 %v4277, %v4499
      %v4584 = vadd.f32 %v4278, %v4502
      %v4585 = vadd.f32 %v4279, %v4507
      %v4586 = vadd.f32 %v4280, %v4510
      %v4587 = vadd.f32 %v4281, %v4515
      %v4588 = vadd.f32 %v4282, %v4518
      %v4589 = vadd.f32 %v4283, %v4523
      %v4590 = vadd.f32 %v4284, %v4526
      %v4591 = vadd.f32 %v4285, %v4531
      %v4592 = vadd.f32 %v4286, %v4534
      %v4593 = vadd.f32 %v4287, %v4539
      %v4594 = vadd.f32 %v4288, %v4542
      %v4595 = vadd.f32 %v4289, %v4547
      %v4596 = vadd.f32 %v4290, %v4550
      %v4597 = vadd.f32 %v4291, %v4555
      %v4598 = vadd.f32 %v4292, %v4558
      %v4599 = vadd.f32 %v4293, %v4563
      %v4600 = vadd.f32 %v4294, %v4566
      %v4601 = vld [vmem:[%s3 + $0x2] sm:$0x1]
      %v4602 = vlaneseq
      %v4603 = vshrl.u32 %v4602, 7
      %v4604 = vsub.s32 0, %v4603
      %v4605 = vrot.slane %v4601, %v4604
      %v4606 = vmul.f32 %v4569, %v4605
      %v4607 = vmul.f32 %v4570, %v4605
      %v4608 = vmul.f32 %v4571, %v4605
      %v4609 = vmul.f32 %v4572, %v4605
      %v4610 = vmul.f32 %v4573, %v4605
      %v4611 = vmul.f32 %v4574, %v4605
      %v4612 = vmul.f32 %v4575, %v4605
      %v4613 = vmul.f32 %v4576, %v4605
      %v4614 = vmul.f32 %v4577, %v4605
      %v4615 = vmul.f32 %v4578, %v4605
      %v4616 = vmul.f32 %v4579, %v4605
      %v4617 = vmul.f32 %v4580, %v4605
      %v4618 = vmul.f32 %v4581, %v4605
      %v4619 = vmul.f32 %v4582, %v4605
      %v4620 = vmul.f32 %v4583, %v4605
      %v4621 = vmul.f32 %v4584, %v4605
      %v4622 = vmul.f32 %v4585, %v4605
      %v4623 = vmul.f32 %v4586, %v4605
      %v4624 = vmul.f32 %v4587, %v4605
      %v4625 = vmul.f32 %v4588, %v4605
      %v4626 = vmul.f32 %v4589, %v4605
      %v4627 = vmul.f32 %v4590, %v4605
      %v4628 = vmul.f32 %v4591, %v4605
      %v4629 = vmul.f32 %v4592, %v4605
      %v4630 = vmul.f32 %v4593, %v4605
      %v4631 = vmul.f32 %v4594, %v4605
      %v4632 = vmul.f32 %v4595, %v4605
      %v4633 = vmul.f32 %v4596, %v4605
      %v4634 = vmul.f32 %v4597, %v4605
      %v4635 = vmul.f32 %v4598, %v4605
      %v4636 = vmul.f32 %v4599, %v4605
      %v4637 = vmul.f32 %v4600, %v4605
      %v4638 = vld [vmem:[%s3 + $0x3] sm:$0x1]
      %v4639 = vlaneseq
      %v4640 = vshrl.u32 %v4639, 7
      %v4641 = vsub.s32 0, %v4640
      %v4642 = vrot.slane %v4638, %v4641
      %v4643 = vadd.f32 %v4606, %v4642
      %v4644 = vadd.f32 %v4607, %v4642
      %v4645 = vadd.f32 %v4608, %v4642
      %v4646 = vadd.f32 %v4609, %v4642
      %v4647 = vadd.f32 %v4610, %v4642
      %v4648 = vadd.f32 %v4611, %v4642
      %v4649 = vadd.f32 %v4612, %v4642
      %v4650 = vadd.f32 %v4613, %v4642
      %v4651 = vadd.f32 %v4614, %v4642
      %v4652 = vadd.f32 %v4615, %v4642
      %v4653 = vadd.f32 %v4616, %v4642
      %v4654 = vadd.f32 %v4617, %v4642
      %v4655 = vadd.f32 %v4618, %v4642
      %v4656 = vadd.f32 %v4619, %v4642
      %v4657 = vadd.f32 %v4620, %v4642
      %v4658 = vadd.f32 %v4621, %v4642
      %v4659 = vadd.f32 %v4622, %v4642
      %v4660 = vadd.f32 %v4623, %v4642
      %v4661 = vadd.f32 %v4624, %v4642
      %v4662 = vadd.f32 %v4625, %v4642
      %v4663 = vadd.f32 %v4626, %v4642
      %v4664 = vadd.f32 %v4627, %v4642
      %v4665 = vadd.f32 %v4628, %v4642
      %v4666 = vadd.f32 %v4629, %v4642
      %v4667 = vadd.f32 %v4630, %v4642
      %v4668 = vadd.f32 %v4631, %v4642
      %v4669 = vadd.f32 %v4632, %v4642
      %v4670 = vadd.f32 %v4633, %v4642
      %v4671 = vadd.f32 %v4634, %v4642
      %v4672 = vadd.f32 %v4635, %v4642
      %v4673 = vadd.f32 %v4636, %v4642
      %v4674 = vadd.f32 %v4637, %v4642
      %vm4675 = vcmp.gt.f32.partialorder %v4643, 0.0
      %vm4676 = vcmp.gt.f32.partialorder %v4644, 0.0
      %vm4677 = vcmp.gt.f32.partialorder %v4645, 0.0
      %vm4678 = vcmp.gt.f32.partialorder %v4646, 0.0
      %vm4679 = vcmp.gt.f32.partialorder %v4647, 0.0
      %vm4680 = vcmp.gt.f32.partialorder %v4648, 0.0
      %vm4681 = vcmp.gt.f32.partialorder %v4649, 0.0
      %vm4682 = vcmp.gt.f32.partialorder %v4650, 0.0
      %vm4683 = vcmp.gt.f32.partialorder %v4651, 0.0
      %vm4684 = vcmp.gt.f32.partialorder %v4652, 0.0
      %vm4685 = vcmp.gt.f32.partialorder %v4653, 0.0
      %vm4686 = vcmp.gt.f32.partialorder %v4654, 0.0
      %vm4687 = vcmp.gt.f32.partialorder %v4655, 0.0
      %vm4688 = vcmp.gt.f32.partialorder %v4656, 0.0
      %vm4689 = vcmp.gt.f32.partialorder %v4657, 0.0
      %vm4690 = vcmp.gt.f32.partialorder %v4658, 0.0
      %vm4691 = vcmp.gt.f32.partialorder %v4659, 0.0
      %vm4692 = vcmp.gt.f32.partialorder %v4660, 0.0
      %vm4693 = vcmp.gt.f32.partialorder %v4661, 0.0
      %vm4694 = vcmp.gt.f32.partialorder %v4662, 0.0
      %vm4695 = vcmp.gt.f32.partialorder %v4663, 0.0
      %vm4696 = vcmp.gt.f32.partialorder %v4664, 0.0
      %vm4697 = vcmp.gt.f32.partialorder %v4665, 0.0
      %vm4698 = vcmp.gt.f32.partialorder %v4666, 0.0
      %vm4699 = vcmp.gt.f32.partialorder %v4667, 0.0
      %vm4700 = vcmp.gt.f32.partialorder %v4668, 0.0
      %vm4701 = vcmp.gt.f32.partialorder %v4669, 0.0
      %vm4702 = vcmp.gt.f32.partialorder %v4670, 0.0
      %vm4703 = vcmp.gt.f32.partialorder %v4671, 0.0
      %vm4704 = vcmp.gt.f32.partialorder %v4672, 0.0
      %vm4705 = vcmp.gt.f32.partialorder %v4673, 0.0
      %vm4706 = vcmp.gt.f32.partialorder %v4674, 0.0
      %v4707 = vmul.f32 %v4643, 0.01
      %v4708 = vmul.f32 %v4644, 0.01
      %v4709 = vmul.f32 %v4645, 0.01
      %v4710 = vmul.f32 %v4646, 0.01
      %v4711 = vmul.f32 %v4647, 0.01
      %v4712 = vmul.f32 %v4648, 0.01
      %v4713 = vmul.f32 %v4649, 0.01
      %v4714 = vmul.f32 %v4650, 0.01
      %v4715 = vmul.f32 %v4651, 0.01
      %v4716 = vmul.f32 %v4652, 0.01
      %v4717 = vmul.f32 %v4653, 0.01
      %v4718 = vmul.f32 %v4654, 0.01
      %v4719 = vmul.f32 %v4655, 0.01
      %v4720 = vmul.f32 %v4656, 0.01
      %v4721 = vmul.f32 %v4657, 0.01
      %v4722 = vmul.f32 %v4658, 0.01
      %v4723 = vmul.f32 %v4659, 0.01
      %v4724 = vmul.f32 %v4660, 0.01
      %v4725 = vmul.f32 %v4661, 0.01
      %v4726 = vmul.f32 %v4662, 0.01
      %v4727 = vmul.f32 %v4663, 0.01
      %v4728 = vmul.f32 %v4664, 0.01
      %v4729 = vmul.f32 %v4665, 0.01
      %v4730 = vmul.f32 %v4666, 0.01
      %v4731 = vmul.f32 %v4667, 0.01
      %v4732 = vmul.f32 %v4668, 0.01
      %v4733 = vmul.f32 %v4669, 0.01
      %v4734 = vmul.f32 %v4670, 0.01
      %v4735 = vmul.f32 %v4671, 0.01
      %v4736 = vmul.f32 %v4672, 0.01
      %v4737 = vmul.f32 %v4673, 0.01
      %v4738 = vmul.f32 %v4674, 0.01
      %v4739 = vsel %vm4675, %v4643, %v4707
      %v4740 = vsel %vm4676, %v4644, %v4708
      %v4741 = vsel %vm4677, %v4645, %v4709
      %v4742 = vsel %vm4678, %v4646, %v4710
      %v4743 = vsel %vm4679, %v4647, %v4711
      %v4744 = vsel %vm4680, %v4648, %v4712
      %v4745 = vsel %vm4681, %v4649, %v4713
      %v4746 = vsel %vm4682, %v4650, %v4714
      %v4747 = vsel %vm4683, %v4651, %v4715
      %v4748 = vsel %vm4684, %v4652, %v4716
      %v4749 = vsel %vm4685, %v4653, %v4717
      %v4750 = vsel %vm4686, %v4654, %v4718
      %v4751 = vsel %vm4687, %v4655, %v4719
      %v4752 = vsel %vm4688, %v4656, %v4720
      %v4753 = vsel %vm4689, %v4657, %v4721
      %v4754 = vsel %vm4690, %v4658, %v4722
      %v4755 = vsel %vm4691, %v4659, %v4723
      %v4756 = vsel %vm4692, %v4660, %v4724
      %v4757 = vsel %vm4693, %v4661, %v4725
      %v4758 = vsel %vm4694, %v4662, %v4726
      %v4759 = vsel %vm4695, %v4663, %v4727
      %v4760 = vsel %vm4696, %v4664, %v4728
      %v4761 = vsel %vm4697, %v4665, %v4729
      %v4762 = vsel %vm4698, %v4666, %v4730
      %v4763 = vsel %vm4699, %v4667, %v4731
      %v4764 = vsel %vm4700, %v4668, %v4732
      %v4765 = vsel %vm4701, %v4669, %v4733
      %v4766 = vsel %vm4702, %v4670, %v4734
      %v4767 = vsel %vm4703, %v4671, %v4735
      %v4768 = vsel %vm4704, %v4672, %v4736
      %v4769 = vsel %vm4705, %v4673, %v4737
      %v4770 = vsel %vm4706, %v4674, %v4738
      %v4771 = vadd.f32 %v4739, %v1807
      %v4772 = vadd.f32 %v4740, %v1808
      %v4773 = vadd.f32 %v4741, %v1809
      %v4774 = vadd.f32 %v4742, %v1810
      %v4775 = vadd.f32 %v4743, %v1811
      %v4776 = vadd.f32 %v4744, %v1812
      %v4777 = vadd.f32 %v4745, %v1813
      %v4778 = vadd.f32 %v4746, %v1814
      %v4779 = vadd.f32 %v4747, %v1815
      %v4780 = vadd.f32 %v4748, %v1816
      %v4781 = vadd.f32 %v4749, %v1817
      %v4782 = vadd.f32 %v4750, %v1818
      %v4783 = vadd.f32 %v4751, %v1819
      %v4784 = vadd.f32 %v4752, %v1820
      %v4785 = vadd.f32 %v4753, %v1821
      %v4786 = vadd.f32 %v4754, %v1822
      %v4787 = vadd.f32 %v4755, %v1823
      %v4788 = vadd.f32 %v4756, %v1824
      %v4789 = vadd.f32 %v4757, %v1825
      %v4790 = vadd.f32 %v4758, %v1826
      %v4791 = vadd.f32 %v4759, %v1827
      %v4792 = vadd.f32 %v4760, %v1828
      %v4793 = vadd.f32 %v4761, %v1829
      %v4794 = vadd.f32 %v4762, %v1830
      %v4795 = vadd.f32 %v4763, %v1831
      %v4796 = vadd.f32 %v4764, %v1832
      %v4797 = vadd.f32 %v4765, %v1833
      %v4798 = vadd.f32 %v4766, %v1834
      %v4799 = vadd.f32 %v4767, %v1835
      %v4800 = vadd.f32 %v4768, %v1836
      %v4801 = vadd.f32 %v4769, %v1837
      %v4802 = vadd.f32 %v4770, %v1838
      %vm4803 = vcmask 64512
      %4804 = vst.msk [vmem:[%s197] sm:$0xff] %vm4803, %v4771
      %4805 = vst.msk [vmem:[%s197 + $0x8] sm:$0xff] %vm4803, %v4772
      %4806 = vst.msk [vmem:[%s197 + $0x10] sm:$0xff] %vm4803, %v4773
      %4807 = vst.msk [vmem:[%s197 + $0x18] sm:$0xff] %vm4803, %v4774
      %4808 = vst.msk [vmem:[%s197 + $0x20] sm:$0xff] %vm4803, %v4775
      %4809 = vst.msk [vmem:[%s197 + $0x28] sm:$0xff] %vm4803, %v4776
      %4810 = vst.msk [vmem:[%s197 + $0x30] sm:$0xff] %vm4803, %v4777
      %4811 = vst.msk [vmem:[%s197 + $0x38] sm:$0xff] %vm4803, %v4778
      %4812 = vst.msk [vmem:[%s197 + $0x40] sm:$0xff] %vm4803, %v4779
      %4813 = vst.msk [vmem:[%s197 + $0x48] sm:$0xff] %vm4803, %v4780
      %4814 = vst.msk [vmem:[%s197 + $0x50] sm:$0xff] %vm4803, %v4781
      %4815 = vst.msk [vmem:[%s197 + $0x58] sm:$0xff] %vm4803, %v4782
      %4816 = vst.msk [vmem:[%s197 + $0x60] sm:$0xff] %vm4803, %v4783
      %4817 = vst.msk [vmem:[%s197 + $0x68] sm:$0xff] %vm4803, %v4784
      %4818 = vst.msk [vmem:[%s197 + $0x70] sm:$0xff] %vm4803, %v4785
      %4819 = vst.msk [vmem:[%s197 + $0x78] sm:$0xff] %vm4803, %v4786
      %4820 = vst.msk [vmem:[%s197 + $0x80] sm:$0xff] %vm4803, %v4787
      %4821 = vst.msk [vmem:[%s197 + $0x88] sm:$0xff] %vm4803, %v4788
      %4822 = vst.msk [vmem:[%s197 + $0x90] sm:$0xff] %vm4803, %v4789
      %4823 = vst.msk [vmem:[%s197 + $0x98] sm:$0xff] %vm4803, %v4790
      %4824 = vst.msk [vmem:[%s197 + $0xa0] sm:$0xff] %vm4803, %v4791
      %4825 = vst.msk [vmem:[%s197 + $0xa8] sm:$0xff] %vm4803, %v4792
      %4826 = vst.msk [vmem:[%s197 + $0xb0] sm:$0xff] %vm4803, %v4793
      %4827 = vst.msk [vmem:[%s197 + $0xb8] sm:$0xff] %vm4803, %v4794
      %4828 = vst.msk [vmem:[%s197 + $0xc0] sm:$0xff] %vm4803, %v4795
      %4829 = vst.msk [vmem:[%s197 + $0xc8] sm:$0xff] %vm4803, %v4796
      %4830 = vst.msk [vmem:[%s197 + $0xd0] sm:$0xff] %vm4803, %v4797
      %4831 = vst.msk [vmem:[%s197 + $0xd8] sm:$0xff] %vm4803, %v4798
      %4832 = vst.msk [vmem:[%s197 + $0xe0] sm:$0xff] %vm4803, %v4799
      %4833 = vst.msk [vmem:[%s197 + $0xe8] sm:$0xff] %vm4803, %v4800
      %4834 = vst.msk [vmem:[%s197 + $0xf0] sm:$0xff] %vm4803, %v4801
      %4835 = vst.msk [vmem:[%s197 + $0xf8] sm:$0xff] %vm4803, %v4802
      %p4836 = scmp.lt.s32.totalorder %s15, 1
      %s4837 = scalar_select %p4836, %s15, 1
      %s4838 = smul.addr %s4837, 32
      %s4839 = smul.addr %s4838, 8
      %s4840 = scalar_lea.vmem %s4, %s4839
      // Predicated region
      $region37: #{tpu_custom_call.1} parent=35 // pred_check
        %p4841 = pneg %p122
      $region38: #{tpu_custom_call.1} parent=35 // pred_check_branch
        %4843 = sbr.rel (%p4841) target = $region40
      $region39: #{tpu_custom_call.1} parent=35 // pred_region
        _
      $region40: #{tpu_custom_call.1} parent=35 // pred_fallthru
        _
    $region36: #{tpu_custom_call.1} parent=5 // pred_fallthru
      _
    %p4844 = scmp.le.s32.totalorder 2, %s10
    // Predicated region
    $region41: #{tpu_custom_call.1} parent=5 // pred_check
      %p4845 = pneg %p4844
    $region42: #{tpu_custom_call.1} parent=5 // pred_check_branch
      %4847 = sbr.rel (%p4845) target = $region44
    $region43: #{tpu_custom_call.1} parent=5 // pred_region
      %s4848 = ssub.s32 %s10, 2
      // Predicated region
      $region45: #{tpu_custom_call.1} parent=43 // pred_check
        %p4849 = pneg %p128
      $region46: #{tpu_custom_call.1} parent=43 // pred_check_branch
        %4851 = sbr.rel (%p4849) target = $region48
      $region47: #{tpu_custom_call.1} parent=43 // pred_region
        %p4852 = scmp.lt.s32.totalorder %s16, 1
        %s4853 = scalar_select %p4852, %s16, 1
        %s4854 = smul.addr %s4853, 32
        %s4855 = smul.addr %s4854, 8
        %s4856 = scalar_lea.vmem %s4, %s4855
      $region48: #{tpu_custom_call.1} parent=43 // pred_fallthru
        _
    $region44: #{tpu_custom_call.1} parent=5 // pred_fallthru
      _
  $region6: #{tpu_custom_call.1} parent=0 // loop_footer
    %s14 = sadd.s32 1, %s10
  $region7: #{tpu_custom_call.1} parent=0 // loop_footer_branch
    %9 = sbr.rel target = $region3
  $region8: #{tpu_custom_call.1} parent=0 // loop_exit
    _

</llo_original>
